<compile_context>
chip_gen: v7x
topology: tpu7x:2x2x1
jax: 0.10.0
libtpu: 0.0.40
codegen_flags: <defaults>
</compile_context>

<pallas_src>
import jax
import jax.numpy as jnp
from jax.experimental import pallas as pl
from jax.experimental.pallas import tpu as pltpu

EPS = 1e-5


def fold_bn(conv_bias, gamma, beta, mean, var):
    """Fold conv bias + eval-mode BatchNorm into per-channel scale/shift."""
    scale = gamma / jnp.sqrt(var + EPS)
    shift = beta + (conv_bias - mean) * scale
    return scale, shift


def _cvec(v):
    return v.reshape(1, -1).astype(jnp.float32)


# --------------------- fully fused bottleneck-SE kernel ----------------------

def _make_block_kernel(*, H, W, Hq, Wq, Ho, Wo, s, Cin, Cmid, has_sc):
    HoWo = Ho * Wo
    nph = s * s

    def kernel(xph_ref, w1_ref, s1_ref, b1_ref, w2_ref, s2_ref, b2_ref,
               w3_ref, s3_ref, b3_ref, *rest):
        if has_sc:
            (ws_ref, ss_ref, bs_ref,
             f1w_ref, f1b_ref, f2w_ref, f2b_ref, o_ref, yph_scr) = rest
        else:
            f1w_ref, f1b_ref, f2w_ref, f2b_ref, o_ref, yph_scr = rest

        # ---- conv1 (1x1) + BN + ReLU, one stride-phase at a time ------------
        # Computed on the phase-permuted zero-padded x == phase-permuted padded
        # y1 (1x1 conv commutes with the permutation).  Positions inside the
        # conv pad halo would wrongly read relu(shift1) -> masked to 0.
        for p in range(nph):
            ph, pw = p // s, p % s
            # f32 round trip keeps the (Hq,Wq)->(Hq*Wq) collapse on the cheap,
            # well-supported f32 relayout path; the MXU operand is bf16.
            rows = xph_ref[0, p].astype(jnp.float32)
            rows = rows.reshape(Hq * Wq, Cin).astype(jnp.bfloat16)
            y = jnp.dot(rows, w1_ref[...], preferred_element_type=jnp.float32)
            y = jnp.maximum(y * s1_ref[...] + b1_ref[...], 0.0)
            y = y.reshape(Hq, Wq, Cmid)
            rowg = jax.lax.broadcasted_iota(jnp.int32, (Hq, Wq, Cmid), 0) * s + ph
            colg = jax.lax.broadcasted_iota(jnp.int32, (Hq, Wq, Cmid), 1) * s + pw
            valid = (rowg >= 1) & (rowg <= H) & (colg >= 1) & (colg <= W)
            yph_scr[p] = jnp.where(valid, y, 0.0)          # f32, VMEM-resident

        # ---- 3x3 conv (stride s, pad 1): ONE K=9*Cmid MXU matmul ------------
        taps = []
        for kh in range(3):
            for kw in range(3):
                p = (kh % s) * s + (kw % s)
                patch = yph_scr[p, pl.ds(kh // s, Ho), pl.ds(kw // s, Wo), :]
                taps.append(patch.reshape(HoWo, Cmid))
        im2col = jnp.concatenate(taps, axis=1).astype(jnp.bfloat16)  # (HoWo, 9*Cmid)
        y2 = jnp.dot(im2col, w2_ref[...], preferred_element_type=jnp.float32)
        y2 = jnp.maximum(y2 * s2_ref[...] + b2_ref[...], 0.0).astype(jnp.bfloat16)

        # ---- 1x1 expansion conv + BN + ReLU (f32 result feeds the SE mean) --
        res = jnp.dot(y2, w3_ref[...], preferred_element_type=jnp.float32)
        res = jnp.maximum(res * s3_ref[...] + b3_ref[...], 0.0)     # (HoWo, C4)

        # ---- shortcut: strided x == a static slice of the phase layout ------
        if s == 1:
            xsc = xph_ref[0, 0, pl.ds(1, Ho), pl.ds(1, Wo), :]
        else:
            xsc = xph_ref[0, s + 1, pl.ds(0, Ho), pl.ds(0, Wo), :]
        xsc = xsc.astype(jnp.float32).reshape(HoWo, Cin)
        if has_sc:
            sc = jnp.dot(xsc, ws_ref[...], preferred_element_type=jnp.float32)
            sc = sc * ss_ref[...] + bs_ref[...]
        else:
            sc = xsc                              # identity branch: Cin == C4

        # ---- squeeze (global avg pool) + excitation (tiny, kept f32) --------
        sq = jnp.mean(res, axis=0, keepdims=True)                    # (1, C4)
        e1 = jnp.maximum(
            jnp.dot(sq, f1w_ref[...], preferred_element_type=jnp.float32)
            + f1b_ref[...], 0.0)                                     # (1, hid)
        exc = jax.nn.sigmoid(
            jnp.dot(e1, f2w_ref[...], preferred_element_type=jnp.float32)
            + f2b_ref[...])                                          # (1, C4)

        # ---- SE scale + residual add + ReLU ---------------------------------
        o_ref[0, :, :] = jnp.maximum(res * exc + sc, 0.0).astype(o_ref.dtype)

    return kernel


def fused_bottleneck_se(xph, w1, s1, b1, w2, s2, b2, w3, s3, b3,
                        sc_params, f1w, f1b, f2w, f2b,
                        *, H, W, Ho, Wo, stride):
    N, nph, Hq, Wq, Cin = xph.shape
    Cmid = w1.shape[1]
    C4 = w3.shape[1]
    hidden = f1w.shape[1]
    HoWo = Ho * Wo
    has_sc = sc_params is not None

    def const_spec(shape):
        zeros = (0,) * len(shape)

        def idx(n):
            return zeros
        return pl.BlockSpec(shape, idx)

    in_specs = [
        pl.BlockSpec((1, nph, Hq, Wq, Cin), lambda n: (n, 0, 0, 0, 0)),
        const_spec((Cin, Cmid)), const_spec((1, Cmid)), const_spec((1, Cmid)),
        const_spec((9 * Cmid, Cmid)), const_spec((1, Cmid)), const_spec((1, Cmid)),
        const_spec((Cmid, C4)), const_spec((1, C4)), const_spec((1, C4)),
    ]
    args = [xph, w1, s1, b1, w2, s2, b2, w3, s3, b3]
    if has_sc:
        ws, ss, bs = sc_params
        in_specs += [const_spec((Cin, C4)), const_spec((1, C4)), const_spec((1, C4))]
        args += [ws, ss, bs]
    in_specs += [const_spec((C4, hidden)), const_spec((1, hidden)),
                 const_spec((hidden, C4)), const_spec((1, C4))]
    args += [f1w, f1b, f2w, f2b]

    kernel = _make_block_kernel(H=H, W=W, Hq=Hq, Wq=Wq, Ho=Ho, Wo=Wo,
                                s=stride, Cin=Cin, Cmid=Cmid, has_sc=has_sc)

    return pl.pallas_call(
        kernel,
        out_shape=jax.ShapeDtypeStruct((N, HoWo, C4), jnp.bfloat16),
        grid=(N,),
        in_specs=in_specs,
        out_specs=pl.BlockSpec((1, HoWo, C4), lambda n: (n, 0, 0)),
        scratch_shapes=[pltpu.VMEM((nph, Hq, Wq, Cmid), jnp.float32)],
        compiler_params=pltpu.CompilerParams(
            dimension_semantics=("parallel",),
            vmem_limit_bytes=64 * 1024 * 1024),
    )(*args)


# ------------------------------- forward --------------------------------------

def bottleneck_se_forward(x_nchw, p, stride):
    N, Cin, H, W = x_nchw.shape
    Cmid = p["w1"].shape[0]
    C4 = p["w3"].shape[0]
    s = stride
    Ho = (H + 2 - 3) // s + 1
    Wo = (W + 2 - 3) // s + 1

    # NCHW -> NHWC once; bf16 activations in HBM.
    x = jnp.transpose(x_nchw, (0, 2, 3, 1)).astype(jnp.bfloat16)

    # One-time stride-phase layout of the zero-PADDED INPUT (Cin channels only;
    # stride=1 degenerates to the 1-pixel pad).  Wq is padded to a multiple of
    # 8 so the in-kernel reshapes are cheap.
    Hp = pl.cdiv(H + 2, s) * s
    Hq = Hp // s
    Wq = ((pl.cdiv(W + 2, s) + 7) // 8) * 8
    Wp = Wq * s
    xpad = jnp.pad(x, ((0, 0), (1, Hp - H - 1), (1, Wp - W - 1), (0, 0)))
    xph = xpad.reshape(N, Hq, s, Wq, s, Cin).transpose(0, 2, 4, 1, 3, 5)
    xph = xph.reshape(N, s * s, Hq, Wq, Cin)

    # Folded conv+BN parameters (eval mode); FLOP-heavy MXU operands in bf16.
    w1 = p["w1"].reshape(Cmid, Cin).T.astype(jnp.bfloat16)
    s1, b1 = fold_bn(p["b1"], p["g1"], p["be1"], p["m1"], p["v1"])
    w2 = jnp.transpose(p["w2"], (2, 3, 1, 0)).reshape(9 * Cmid, Cmid)
    w2 = w2.astype(jnp.bfloat16)
    s2, b2 = fold_bn(p["b2"], p["g2"], p["be2"], p["m2"], p["v2"])
    w3 = p["w3"].reshape(C4, Cmid).T.astype(jnp.bfloat16)
    s3, b3 = fold_bn(p["b3"], p["g3"], p["be3"], p["m3"], p["v3"])

    has_sc = (s != 1) or (Cin != C4)
    sc_params = None
    if has_sc:
        # shortcut conv kept f32 (cheap, off the bandwidth-critical path).
        ws = p["ws"].reshape(C4, Cin).T.astype(jnp.float32)
        ss, bs = fold_bn(p["bs"], p["gs"], p["bes"], p["ms"], p["vs"])
        sc_params = (ws, _cvec(ss), _cvec(bs))

    out = fused_bottleneck_se(
        xph, w1, _cvec(s1), _cvec(b1), w2, _cvec(s2), _cvec(b2),
        w3, _cvec(s3), _cvec(b3), sc_params,
        p["fc1_w"].T.astype(jnp.float32), _cvec(p["fc1_b"]),
        p["fc2_w"].T.astype(jnp.float32), _cvec(p["fc2_b"]),
        H=H, W=W, Ho=Ho, Wo=Wo, stride=s)

    # NHWC rows -> NCHW once at exit (block output stays bf16 in HBM).
    return out.reshape(N, Ho, Wo, C4).transpose(0, 3, 1, 2)


# --------------------------- pure-JAX reference --------------------------------

def ref_forward(x, p, stride):
    def conv(x, w, b, s=1, pad=0):
        y = jax.lax.conv_general_dilated(
            x, w, (s, s), [(pad, pad), (pad, pad)],
            dimension_numbers=("NCHW", "OIHW", "NCHW"))
        return y + b[None, :, None, None]

    def bn(x, g, be, m, v):
        return (x - m[None, :, None, None]) \
            * (g / jnp.sqrt(v + EPS))[None, :, None, None] \
            + be[None, :, None, None]

    C4 = p["w3"].shape[0]
    r = jax.nn.relu(bn(conv(x, p["w1"], p["b1"]),
                       p["g1"], p["be1"], p["m1"], p["v1"]))
    r = jax.nn.relu(bn(conv(r, p["w2"], p["b2"], s=stride, pad=1),
                       p["g2"], p["be2"], p["m2"], p["v2"]))
    r = jax.nn.relu(bn(conv(r, p["w3"], p["b3"]),
                       p["g3"], p["be3"], p["m3"], p["v3"]))
    if stride != 1 or x.shape[1] != C4:
        sc = bn(conv(x, p["ws"], p["bs"], s=stride),
                p["gs"], p["bes"], p["ms"], p["vs"])
    else:
        sc = x
    sq = jnp.mean(r, axis=(2, 3))
    e = jax.nn.relu(sq @ p["fc1_w"].T + p["fc1_b"])
    e = jax.nn.sigmoid(e @ p["fc2_w"].T + p["fc2_b"])
    return jax.nn.relu(r * e[:, :, None, None] + sc)


# ---------------------------------- main ---------------------------------------

if __name__ == "__main__":
    N, Cin, H, W = 2, 4, 16, 16
    out_c, stride, r = 8, 2, 16
    C4 = out_c * 4
    hidden = C4 // r

    key = jax.random.PRNGKey(0)
    ks = jax.random.split(key, 32)

    def nrm(k, shape, s=0.1):
        return s * jax.random.normal(k, shape, jnp.float32)

    def posu(k, shape):
        return jax.random.uniform(k, shape, jnp.float32, 0.5, 1.5)

    p = {
        # conv1 1x1 + bn1
        "w1": nrm(ks[0], (out_c, Cin, 1, 1)), "b1": nrm(ks[1], (out_c,)),
        "g1": posu(ks[2], (out_c,)), "be1": nrm(ks[3], (out_c,)),
        "m1": nrm(ks[4], (out_c,)), "v1": posu(ks[5], (out_c,)),
        # conv2 3x3 + bn2
        "w2": nrm(ks[6], (out_c, out_c, 3, 3)), "b2": nrm(ks[7], (out_c,)),
        "g2": posu(ks[8], (out_c,)), "be2": nrm(ks[9], (out_c,)),
        "m2": nrm(ks[10], (out_c,)), "v2": posu(ks[11], (out_c,)),
        # conv3 1x1 + bn3
        "w3": nrm(ks[12], (C4, out_c, 1, 1)), "b3": nrm(ks[13], (C4,)),
        "g3": posu(ks[14], (C4,)), "be3": nrm(ks[15], (C4,)),
        "m3": nrm(ks[16], (C4,)), "v3": posu(ks[17], (C4,)),
        # shortcut conv 1x1 stride + bn
        "ws": nrm(ks[18], (C4, Cin, 1, 1)), "bs": nrm(ks[19], (C4,)),
        "gs": posu(ks[20], (C4,)), "bes": nrm(ks[21], (C4,)),
        "ms": nrm(ks[22], (C4,)), "vs": posu(ks[23], (C4,)),
        # excitation linears
        "fc1_w": nrm(ks[24], (hidden, C4)), "fc1_b": nrm(ks[25], (hidden,)),
        "fc2_w": nrm(ks[26], (C4, hidden)), "fc2_b": nrm(ks[27], (C4,)),
    }

    x = jax.random.normal(ks[28], (N, Cin, H, W), jnp.float32)

    fwd = jax.jit(bottleneck_se_forward, static_argnums=2)
    out = jax.block_until_ready(fwd(x, p, stride))

    ref = ref_forward(x, p, stride)
    assert out.shape == ref.shape == (N, C4, H // stride, W // stride)
    err = float(jnp.max(jnp.abs(out.astype(jnp.float32) - ref)))
    # bf16 activations (incl. the block output) in HBM end-to-end -> tolerance.
    assert err < 7.5e-2, err

    print("KERNEL_OK")
</pallas_src>

<mosaic_0001>
module attributes {stable_mosaic.version = 11 : i64} {
  func.func @kernel(%arg0: i32, %arg1: memref<1x4x9x16x4xbf16, #tpu.memory_space<vmem>>, %arg2: memref<4x8xbf16, #tpu.memory_space<vmem>>, %arg3: memref<1x8xf32, #tpu.memory_space<vmem>>, %arg4: memref<1x8xf32, #tpu.memory_space<vmem>>, %arg5: memref<72x8xbf16, #tpu.memory_space<vmem>>, %arg6: memref<1x8xf32, #tpu.memory_space<vmem>>, %arg7: memref<1x8xf32, #tpu.memory_space<vmem>>, %arg8: memref<8x32xbf16, #tpu.memory_space<vmem>>, %arg9: memref<1x32xf32, #tpu.memory_space<vmem>>, %arg10: memref<1x32xf32, #tpu.memory_space<vmem>>, %arg11: memref<4x32xf32, #tpu.memory_space<vmem>>, %arg12: memref<1x32xf32, #tpu.memory_space<vmem>>, %arg13: memref<1x32xf32, #tpu.memory_space<vmem>>, %arg14: memref<32x2xf32, #tpu.memory_space<vmem>>, %arg15: memref<1x2xf32, #tpu.memory_space<vmem>>, %arg16: memref<2x32xf32, #tpu.memory_space<vmem>>, %arg17: memref<1x32xf32, #tpu.memory_space<vmem>>, %arg18: memref<1x64x32xbf16, #tpu.memory_space<vmem>>, %arg19: memref<4x9x16x8xf32, #tpu.memory_space<vmem>>) attributes {dimension_semantics = [#tpu.dimension_semantics<parallel>], iteration_bounds = array<i64: 2>, scalar_prefetch = 0 : i64, scratch_operands = 1 : i64, tpu.core_type = #tpu.core_type<tc>, window_params = [{transform_indices = @transform_0, window_bounds = array<i64: 1, 4, 9, 16, 4>}, {pipeline_mode = #tpu.pipeline_mode<synchronous>, transform_indices = @transform_1, window_bounds = array<i64: 4, 8>}, {pipeline_mode = #tpu.pipeline_mode<synchronous>, transform_indices = @transform_2, window_bounds = array<i64: 1, 8>}, {pipeline_mode = #tpu.pipeline_mode<synchronous>, transform_indices = @transform_3, window_bounds = array<i64: 1, 8>}, {pipeline_mode = #tpu.pipeline_mode<synchronous>, transform_indices = @transform_4, window_bounds = array<i64: 72, 8>}, {pipeline_mode = #tpu.pipeline_mode<synchronous>, transform_indices = @transform_5, window_bounds = array<i64: 1, 8>}, {pipeline_mode = #tpu.pipeline_mode<synchronous>, transform_indices = @transform_6, window_bounds = array<i64: 1, 8>}, {pipeline_mode = #tpu.pipeline_mode<synchronous>, transform_indices = @transform_7, window_bounds = array<i64: 8, 32>}, {pipeline_mode = #tpu.pipeline_mode<synchronous>, transform_indices = @transform_8, window_bounds = array<i64: 1, 32>}, {pipeline_mode = #tpu.pipeline_mode<synchronous>, transform_indices = @transform_9, window_bounds = array<i64: 1, 32>}, {pipeline_mode = #tpu.pipeline_mode<synchronous>, transform_indices = @transform_10, window_bounds = array<i64: 4, 32>}, {pipeline_mode = #tpu.pipeline_mode<synchronous>, transform_indices = @transform_11, window_bounds = array<i64: 1, 32>}, {pipeline_mode = #tpu.pipeline_mode<synchronous>, transform_indices = @transform_12, window_bounds = array<i64: 1, 32>}, {pipeline_mode = #tpu.pipeline_mode<synchronous>, transform_indices = @transform_13, window_bounds = array<i64: 32, 2>}, {pipeline_mode = #tpu.pipeline_mode<synchronous>, transform_indices = @transform_14, window_bounds = array<i64: 1, 2>}, {pipeline_mode = #tpu.pipeline_mode<synchronous>, transform_indices = @transform_15, window_bounds = array<i64: 2, 32>}, {pipeline_mode = #tpu.pipeline_mode<synchronous>, transform_indices = @transform_16, window_bounds = array<i64: 1, 32>}, {transform_indices = @transform_17, window_bounds = array<i64: 1, 64, 32>}]} {
    %c0 = arith.constant 0 : index
    %c0_0 = arith.constant 0 : index
    %c0_1 = arith.constant 0 : index
    %c0_2 = arith.constant 0 : index
    %c0_3 = arith.constant 0 : index
    %0 = vector.load %arg1[%c0, %c0_0, %c0_1, %c0_2, %c0_3] : memref<1x4x9x16x4xbf16, #tpu.memory_space<vmem>>, vector<1x1x9x16x4xbf16>
    %1 = vector.shape_cast %0 : vector<1x1x9x16x4xbf16> to vector<9x16x4xbf16>
    %2 = arith.extf %1 : vector<9x16x4xbf16> to vector<9x16x4xf32>
    %3 = vector.shape_cast %2 : vector<9x16x4xf32> to vector<144x4xf32>
    %4 = arith.truncf %3 : vector<144x4xf32> to vector<144x4xbf16>
    %c0_4 = arith.constant 0 : index
    %c0_5 = arith.constant 0 : index
    %5 = vector.load %arg2[%c0_4, %c0_5] : memref<4x8xbf16, #tpu.memory_space<vmem>>, vector<4x8xbf16>
    %cst = arith.constant dense<0.000000e+00> : vector<144x8xf32>
    %6 = tpu.matmul %4, %5, %cst {dimension_numbers = #tpu.dot_dimension_numbers<[1], [0], [0], [1], [0, 0, 1, 1], [], []>} : vector<144x4xbf16>, vector<4x8xbf16>, vector<144x8xf32> -> vector<144x8xf32>
    %c0_6 = arith.constant 0 : index
    %c0_7 = arith.constant 0 : index
    %7 = vector.load %arg3[%c0_6, %c0_7] : memref<1x8xf32, #tpu.memory_space<vmem>>, vector<1x8xf32>
    %8 = vector.broadcast %7 : vector<1x8xf32> to vector<144x8xf32>
    %9 = arith.mulf %6, %8 : vector<144x8xf32>
    %c0_8 = arith.constant 0 : index
    %c0_9 = arith.constant 0 : index
    %10 = vector.load %arg4[%c0_8, %c0_9] : memref<1x8xf32, #tpu.memory_space<vmem>>, vector<1x8xf32>
    %11 = vector.broadcast %10 : vector<1x8xf32> to vector<144x8xf32>
    %12 = arith.addf %9, %11 : vector<144x8xf32>
    %cst_10 = arith.constant 0.000000e+00 : f32
    %13 = vector.broadcast %cst_10 : f32 to vector<144x8xf32>
    %14 = arith.maximumf %12, %13 : vector<144x8xf32>
    %15 = vector.shape_cast %14 : vector<144x8xf32> to vector<9x16x8xf32>
    %16 = tpu.iota {dimensions = array<i32: 0>} : vector<9x16x8xi32>
    %c2_i32 = arith.constant 2 : i32
    %17 = vector.broadcast %c2_i32 : i32 to vector<9x16x8xi32>
    %18 = arith.muli %16, %17 : vector<9x16x8xi32>
    %c0_i32 = arith.constant 0 : i32
    %19 = vector.broadcast %c0_i32 : i32 to vector<9x16x8xi32>
    %20 = arith.addi %18, %19 : vector<9x16x8xi32>
    %21 = tpu.iota {dimensions = array<i32: 1>} : vector<9x16x8xi32>
    %c2_i32_11 = arith.constant 2 : i32
    %22 = vector.broadcast %c2_i32_11 : i32 to vector<9x16x8xi32>
    %23 = arith.muli %21, %22 : vector<9x16x8xi32>
    %c0_i32_12 = arith.constant 0 : i32
    %24 = vector.broadcast %c0_i32_12 : i32 to vector<9x16x8xi32>
    %25 = arith.addi %23, %24 : vector<9x16x8xi32>
    %c1_i32 = arith.constant 1 : i32
    %26 = vector.broadcast %c1_i32 : i32 to vector<9x16x8xi32>
    %27 = arith.cmpi sge, %20, %26 : vector<9x16x8xi32>
    %c16_i32 = arith.constant 16 : i32
    %28 = vector.broadcast %c16_i32 : i32 to vector<9x16x8xi32>
    %29 = arith.cmpi sle, %20, %28 : vector<9x16x8xi32>
    %30 = arith.andi %27, %29 : vector<9x16x8xi1>
    %c1_i32_13 = arith.constant 1 : i32
    %31 = vector.broadcast %c1_i32_13 : i32 to vector<9x16x8xi32>
    %32 = arith.cmpi sge, %25, %31 : vector<9x16x8xi32>
    %33 = arith.andi %30, %32 : vector<9x16x8xi1>
    %c16_i32_14 = arith.constant 16 : i32
    %34 = vector.broadcast %c16_i32_14 : i32 to vector<9x16x8xi32>
    %35 = arith.cmpi sle, %25, %34 : vector<9x16x8xi32>
    %36 = arith.andi %33, %35 : vector<9x16x8xi1>
    %cst_15 = arith.constant 0.000000e+00 : f32
    %37 = vector.broadcast %cst_15 : f32 to vector<9x16x8xf32>
    %38 = arith.select %36, %15, %37 : vector<9x16x8xi1>, vector<9x16x8xf32>
    %c0_16 = arith.constant 0 : index
    %c0_17 = arith.constant 0 : index
    %c0_18 = arith.constant 0 : index
    %c0_19 = arith.constant 0 : index
    %39 = vector.load %arg19[%c0_16, %c0_17, %c0_18, %c0_19] : memref<4x9x16x8xf32, #tpu.memory_space<vmem>>, vector<1x9x16x8xf32>
    %40 = vector.shape_cast %39 : vector<1x9x16x8xf32> to vector<9x16x8xf32>
    %41 = vector.shape_cast %38 : vector<9x16x8xf32> to vector<1x9x16x8xf32>
    tpu.vector_store %arg19[%c0_16, %c0_17, %c0_18, %c0_19], %41 {strides = array<i32>} : memref<4x9x16x8xf32, #tpu.memory_space<vmem>>, vector<1x9x16x8xf32>,
    %c0_20 = arith.constant 0 : index
    %c1 = arith.constant 1 : index
    %c0_21 = arith.constant 0 : index
    %c0_22 = arith.constant 0 : index
    %c0_23 = arith.constant 0 : index
    %42 = vector.load %arg1[%c0_20, %c1, %c0_21, %c0_22, %c0_23] : memref<1x4x9x16x4xbf16, #tpu.memory_space<vmem>>, vector<1x1x9x16x4xbf16>
    %43 = vector.shape_cast %42 : vector<1x1x9x16x4xbf16> to vector<9x16x4xbf16>
    %44 = arith.extf %43 : vector<9x16x4xbf16> to vector<9x16x4xf32>
    %45 = vector.shape_cast %44 : vector<9x16x4xf32> to vector<144x4xf32>
    %46 = arith.truncf %45 : vector<144x4xf32> to vector<144x4xbf16>
    %c0_24 = arith.constant 0 : index
    %c0_25 = arith.constant 0 : index
    %47 = vector.load %arg2[%c0_24, %c0_25] : memref<4x8xbf16, #tpu.memory_space<vmem>>, vector<4x8xbf16>
    %cst_26 = arith.constant dense<0.000000e+00> : vector<144x8xf32>
    %48 = tpu.matmul %46, %47, %cst_26 {dimension_numbers = #tpu.dot_dimension_numbers<[1], [0], [0], [1], [0, 0, 1, 1], [], []>} : vector<144x4xbf16>, vector<4x8xbf16>, vector<144x8xf32> -> vector<144x8xf32>
    %c0_27 = arith.constant 0 : index
    %c0_28 = arith.constant 0 : index
    %49 = vector.load %arg3[%c0_27, %c0_28] : memref<1x8xf32, #tpu.memory_space<vmem>>, vector<1x8xf32>
    %50 = vector.broadcast %49 : vector<1x8xf32> to vector<144x8xf32>
    %51 = arith.mulf %48, %50 : vector<144x8xf32>
    %c0_29 = arith.constant 0 : index
    %c0_30 = arith.constant 0 : index
    %52 = vector.load %arg4[%c0_29, %c0_30] : memref<1x8xf32, #tpu.memory_space<vmem>>, vector<1x8xf32>
    %53 = vector.broadcast %52 : vector<1x8xf32> to vector<144x8xf32>
    %54 = arith.addf %51, %53 : vector<144x8xf32>
    %cst_31 = arith.constant 0.000000e+00 : f32
    %55 = vector.broadcast %cst_31 : f32 to vector<144x8xf32>
    %56 = arith.maximumf %54, %55 : vector<144x8xf32>
    %57 = vector.shape_cast %56 : vector<144x8xf32> to vector<9x16x8xf32>
    %58 = tpu.iota {dimensions = array<i32: 0>} : vector<9x16x8xi32>
    %c2_i32_32 = arith.constant 2 : i32
    %59 = vector.broadcast %c2_i32_32 : i32 to vector<9x16x8xi32>
    %60 = arith.muli %58, %59 : vector<9x16x8xi32>
    %c0_i32_33 = arith.constant 0 : i32
    %61 = vector.broadcast %c0_i32_33 : i32 to vector<9x16x8xi32>
    %62 = arith.addi %60, %61 : vector<9x16x8xi32>
    %63 = tpu.iota {dimensions = array<i32: 1>} : vector<9x16x8xi32>
    %c2_i32_34 = arith.constant 2 : i32
    %64 = vector.broadcast %c2_i32_34 : i32 to vector<9x16x8xi32>
    %65 = arith.muli %63, %64 : vector<9x16x8xi32>
    %c1_i32_35 = arith.constant 1 : i32
    %66 = vector.broadcast %c1_i32_35 : i32 to vector<9x16x8xi32>
    %67 = arith.addi %65, %66 : vector<9x16x8xi32>
    %c1_i32_36 = arith.constant 1 : i32
    %68 = vector.broadcast %c1_i32_36 : i32 to vector<9x16x8xi32>
    %69 = arith.cmpi sge, %62, %68 : vector<9x16x8xi32>
    %c16_i32_37 = arith.constant 16 : i32
    %70 = vector.broadcast %c16_i32_37 : i32 to vector<9x16x8xi32>
    %71 = arith.cmpi sle, %62, %70 : vector<9x16x8xi32>
    %72 = arith.andi %69, %71 : vector<9x16x8xi1>
    %c1_i32_38 = arith.constant 1 : i32
    %73 = vector.broadcast %c1_i32_38 : i32 to vector<9x16x8xi32>
    %74 = arith.cmpi sge, %67, %73 : vector<9x16x8xi32>
    %75 = arith.andi %72, %74 : vector<9x16x8xi1>
    %c16_i32_39 = arith.constant 16 : i32
    %76 = vector.broadcast %c16_i32_39 : i32 to vector<9x16x8xi32>
    %77 = arith.cmpi sle, %67, %76 : vector<9x16x8xi32>
    %78 = arith.andi %75, %77 : vector<9x16x8xi1>
    %cst_40 = arith.constant 0.000000e+00 : f32
    %79 = vector.broadcast %cst_40 : f32 to vector<9x16x8xf32>
    %80 = arith.select %78, %57, %79 : vector<9x16x8xi1>, vector<9x16x8xf32>
    %c1_41 = arith.constant 1 : index
    %c0_42 = arith.constant 0 : index
    %c0_43 = arith.constant 0 : index
    %c0_44 = arith.constant 0 : index
    %81 = vector.load %arg19[%c1_41, %c0_42, %c0_43, %c0_44] : memref<4x9x16x8xf32, #tpu.memory_space<vmem>>, vector<1x9x16x8xf32>
    %82 = vector.shape_cast %81 : vector<1x9x16x8xf32> to vector<9x16x8xf32>
    %83 = vector.shape_cast %80 : vector<9x16x8xf32> to vector<1x9x16x8xf32>
    tpu.vector_store %arg19[%c1_41, %c0_42, %c0_43, %c0_44], %83 {strides = array<i32>} : memref<4x9x16x8xf32, #tpu.memory_space<vmem>>, vector<1x9x16x8xf32>,
    %c0_45 = arith.constant 0 : index
    %c2 = arith.constant 2 : index
    %c0_46 = arith.constant 0 : index
    %c0_47 = arith.constant 0 : index
    %c0_48 = arith.constant 0 : index
    %84 = vector.load %arg1[%c0_45, %c2, %c0_46, %c0_47, %c0_48] : memref<1x4x9x16x4xbf16, #tpu.memory_space<vmem>>, vector<1x1x9x16x4xbf16>
    %85 = vector.shape_cast %84 : vector<1x1x9x16x4xbf16> to vector<9x16x4xbf16>
    %86 = arith.extf %85 : vector<9x16x4xbf16> to vector<9x16x4xf32>
    %87 = vector.shape_cast %86 : vector<9x16x4xf32> to vector<144x4xf32>
    %88 = arith.truncf %87 : vector<144x4xf32> to vector<144x4xbf16>
    %c0_49 = arith.constant 0 : index
    %c0_50 = arith.constant 0 : index
    %89 = vector.load %arg2[%c0_49, %c0_50] : memref<4x8xbf16, #tpu.memory_space<vmem>>, vector<4x8xbf16>
    %cst_51 = arith.constant dense<0.000000e+00> : vector<144x8xf32>
    %90 = tpu.matmul %88, %89, %cst_51 {dimension_numbers = #tpu.dot_dimension_numbers<[1], [0], [0], [1], [0, 0, 1, 1], [], []>} : vector<144x4xbf16>, vector<4x8xbf16>, vector<144x8xf32> -> vector<144x8xf32>
    %c0_52 = arith.constant 0 : index
    %c0_53 = arith.constant 0 : index
    %91 = vector.load %arg3[%c0_52, %c0_53] : memref<1x8xf32, #tpu.memory_space<vmem>>, vector<1x8xf32>
    %92 = vector.broadcast %91 : vector<1x8xf32> to vector<144x8xf32>
    %93 = arith.mulf %90, %92 : vector<144x8xf32>
    %c0_54 = arith.constant 0 : index
    %c0_55 = arith.constant 0 : index
    %94 = vector.load %arg4[%c0_54, %c0_55] : memref<1x8xf32, #tpu.memory_space<vmem>>, vector<1x8xf32>
    %95 = vector.broadcast %94 : vector<1x8xf32> to vector<144x8xf32>
    %96 = arith.addf %93, %95 : vector<144x8xf32>
    %cst_56 = arith.constant 0.000000e+00 : f32
    %97 = vector.broadcast %cst_56 : f32 to vector<144x8xf32>
    %98 = arith.maximumf %96, %97 : vector<144x8xf32>
    %99 = vector.shape_cast %98 : vector<144x8xf32> to vector<9x16x8xf32>
    %100 = tpu.iota {dimensions = array<i32: 0>} : vector<9x16x8xi32>
    %c2_i32_57 = arith.constant 2 : i32
    %101 = vector.broadcast %c2_i32_57 : i32 to vector<9x16x8xi32>
    %102 = arith.muli %100, %101 : vector<9x16x8xi32>
    %c1_i32_58 = arith.constant 1 : i32
    %103 = vector.broadcast %c1_i32_58 : i32 to vector<9x16x8xi32>
    %104 = arith.addi %102, %103 : vector<9x16x8xi32>
    %105 = tpu.iota {dimensions = array<i32: 1>} : vector<9x16x8xi32>
    %c2_i32_59 = arith.constant 2 : i32
    %106 = vector.broadcast %c2_i32_59 : i32 to vector<9x16x8xi32>
    %107 = arith.muli %105, %106 : vector<9x16x8xi32>
    %c0_i32_60 = arith.constant 0 : i32
    %108 = vector.broadcast %c0_i32_60 : i32 to vector<9x16x8xi32>
    %109 = arith.addi %107, %108 : vector<9x16x8xi32>
    %c1_i32_61 = arith.constant 1 : i32
    %110 = vector.broadcast %c1_i32_61 : i32 to vector<9x16x8xi32>
    %111 = arith.cmpi sge, %104, %110 : vector<9x16x8xi32>
    %c16_i32_62 = arith.constant 16 : i32
    %112 = vector.broadcast %c16_i32_62 : i32 to vector<9x16x8xi32>
    %113 = arith.cmpi sle, %104, %112 : vector<9x16x8xi32>
    %114 = arith.andi %111, %113 : vector<9x16x8xi1>
    %c1_i32_63 = arith.constant 1 : i32
    %115 = vector.broadcast %c1_i32_63 : i32 to vector<9x16x8xi32>
    %116 = arith.cmpi sge, %109, %115 : vector<9x16x8xi32>
    %117 = arith.andi %114, %116 : vector<9x16x8xi1>
    %c16_i32_64 = arith.constant 16 : i32
    %118 = vector.broadcast %c16_i32_64 : i32 to vector<9x16x8xi32>
    %119 = arith.cmpi sle, %109, %118 : vector<9x16x8xi32>
    %120 = arith.andi %117, %119 : vector<9x16x8xi1>
    %cst_65 = arith.constant 0.000000e+00 : f32
    %121 = vector.broadcast %cst_65 : f32 to vector<9x16x8xf32>
    %122 = arith.select %120, %99, %121 : vector<9x16x8xi1>, vector<9x16x8xf32>
    %c2_66 = arith.constant 2 : index
    %c0_67 = arith.constant 0 : index
    %c0_68 = arith.constant 0 : index
    %c0_69 = arith.constant 0 : index
    %123 = vector.load %arg19[%c2_66, %c0_67, %c0_68, %c0_69] : memref<4x9x16x8xf32, #tpu.memory_space<vmem>>, vector<1x9x16x8xf32>
    %124 = vector.shape_cast %123 : vector<1x9x16x8xf32> to vector<9x16x8xf32>
    %125 = vector.shape_cast %122 : vector<9x16x8xf32> to vector<1x9x16x8xf32>
    tpu.vector_store %arg19[%c2_66, %c0_67, %c0_68, %c0_69], %125 {strides = array<i32>} : memref<4x9x16x8xf32, #tpu.memory_space<vmem>>, vector<1x9x16x8xf32>,
    %c0_70 = arith.constant 0 : index
    %c3 = arith.constant 3 : index
    %c0_71 = arith.constant 0 : index
    %c0_72 = arith.constant 0 : index
    %c0_73 = arith.constant 0 : index
    %126 = vector.load %arg1[%c0_70, %c3, %c0_71, %c0_72, %c0_73] : memref<1x4x9x16x4xbf16, #tpu.memory_space<vmem>>, vector<1x1x9x16x4xbf16>
    %127 = vector.shape_cast %126 : vector<1x1x9x16x4xbf16> to vector<9x16x4xbf16>
    %128 = arith.extf %127 : vector<9x16x4xbf16> to vector<9x16x4xf32>
    %129 = vector.shape_cast %128 : vector<9x16x4xf32> to vector<144x4xf32>
    %130 = arith.truncf %129 : vector<144x4xf32> to vector<144x4xbf16>
    %c0_74 = arith.constant 0 : index
    %c0_75 = arith.constant 0 : index
    %131 = vector.load %arg2[%c0_74, %c0_75] : memref<4x8xbf16, #tpu.memory_space<vmem>>, vector<4x8xbf16>
    %cst_76 = arith.constant dense<0.000000e+00> : vector<144x8xf32>
    %132 = tpu.matmul %130, %131, %cst_76 {dimension_numbers = #tpu.dot_dimension_numbers<[1], [0], [0], [1], [0, 0, 1, 1], [], []>} : vector<144x4xbf16>, vector<4x8xbf16>, vector<144x8xf32> -> vector<144x8xf32>
    %c0_77 = arith.constant 0 : index
    %c0_78 = arith.constant 0 : index
    %133 = vector.load %arg3[%c0_77, %c0_78] : memref<1x8xf32, #tpu.memory_space<vmem>>, vector<1x8xf32>
    %134 = vector.broadcast %133 : vector<1x8xf32> to vector<144x8xf32>
    %135 = arith.mulf %132, %134 : vector<144x8xf32>
    %c0_79 = arith.constant 0 : index
    %c0_80 = arith.constant 0 : index
    %136 = vector.load %arg4[%c0_79, %c0_80] : memref<1x8xf32, #tpu.memory_space<vmem>>, vector<1x8xf32>
    %137 = vector.broadcast %136 : vector<1x8xf32> to vector<144x8xf32>
    %138 = arith.addf %135, %137 : vector<144x8xf32>
    %cst_81 = arith.constant 0.000000e+00 : f32
    %139 = vector.broadcast %cst_81 : f32 to vector<144x8xf32>
    %140 = arith.maximumf %138, %139 : vector<144x8xf32>
    %141 = vector.shape_cast %140 : vector<144x8xf32> to vector<9x16x8xf32>
    %142 = tpu.iota {dimensions = array<i32: 0>} : vector<9x16x8xi32>
    %c2_i32_82 = arith.constant 2 : i32
    %143 = vector.broadcast %c2_i32_82 : i32 to vector<9x16x8xi32>
    %144 = arith.muli %142, %143 : vector<9x16x8xi32>
    %c1_i32_83 = arith.constant 1 : i32
    %145 = vector.broadcast %c1_i32_83 : i32 to vector<9x16x8xi32>
    %146 = arith.addi %144, %145 : vector<9x16x8xi32>
    %147 = tpu.iota {dimensions = array<i32: 1>} : vector<9x16x8xi32>
    %c2_i32_84 = arith.constant 2 : i32
    %148 = vector.broadcast %c2_i32_84 : i32 to vector<9x16x8xi32>
    %149 = arith.muli %147, %148 : vector<9x16x8xi32>
    %c1_i32_85 = arith.constant 1 : i32
    %150 = vector.broadcast %c1_i32_85 : i32 to vector<9x16x8xi32>
    %151 = arith.addi %149, %150 : vector<9x16x8xi32>
    %c1_i32_86 = arith.constant 1 : i32
    %152 = vector.broadcast %c1_i32_86 : i32 to vector<9x16x8xi32>
    %153 = arith.cmpi sge, %146, %152 : vector<9x16x8xi32>
    %c16_i32_87 = arith.constant 16 : i32
    %154 = vector.broadcast %c16_i32_87 : i32 to vector<9x16x8xi32>
    %155 = arith.cmpi sle, %146, %154 : vector<9x16x8xi32>
    %156 = arith.andi %153, %155 : vector<9x16x8xi1>
    %c1_i32_88 = arith.constant 1 : i32
    %157 = vector.broadcast %c1_i32_88 : i32 to vector<9x16x8xi32>
    %158 = arith.cmpi sge, %151, %157 : vector<9x16x8xi32>
    %159 = arith.andi %156, %158 : vector<9x16x8xi1>
    %c16_i32_89 = arith.constant 16 : i32
    %160 = vector.broadcast %c16_i32_89 : i32 to vector<9x16x8xi32>
    %161 = arith.cmpi sle, %151, %160 : vector<9x16x8xi32>
    %162 = arith.andi %159, %161 : vector<9x16x8xi1>
    %cst_90 = arith.constant 0.000000e+00 : f32
    %163 = vector.broadcast %cst_90 : f32 to vector<9x16x8xf32>
    %164 = arith.select %162, %141, %163 : vector<9x16x8xi1>, vector<9x16x8xf32>
    %c3_91 = arith.constant 3 : index
    %c0_92 = arith.constant 0 : index
    %c0_93 = arith.constant 0 : index
    %c0_94 = arith.constant 0 : index
    %165 = vector.load %arg19[%c3_91, %c0_92, %c0_93, %c0_94] : memref<4x9x16x8xf32, #tpu.memory_space<vmem>>, vector<1x9x16x8xf32>
    %166 = vector.shape_cast %165 : vector<1x9x16x8xf32> to vector<9x16x8xf32>
    %167 = vector.shape_cast %164 : vector<9x16x8xf32> to vector<1x9x16x8xf32>
    tpu.vector_store %arg19[%c3_91, %c0_92, %c0_93, %c0_94], %167 {strides = array<i32>} : memref<4x9x16x8xf32, #tpu.memory_space<vmem>>, vector<1x9x16x8xf32>,
    %c0_95 = arith.constant 0 : index
    %c0_96 = arith.constant 0 : index
    %c0_97 = arith.constant 0 : index
    %c0_98 = arith.constant 0 : index
    %168 = vector.load %arg19[%c0_95, %c0_96, %c0_97, %c0_98] : memref<4x9x16x8xf32, #tpu.memory_space<vmem>>, vector<1x8x8x8xf32>
    %169 = vector.shape_cast %168 : vector<1x8x8x8xf32> to vector<8x8x8xf32>
    %170 = vector.shape_cast %169 : vector<8x8x8xf32> to vector<64x8xf32>
    %c1_99 = arith.constant 1 : index
    %c0_100 = arith.constant 0 : index
    %c0_101 = arith.constant 0 : index
    %c0_102 = arith.constant 0 : index
    %171 = vector.load %arg19[%c1_99, %c0_100, %c0_101, %c0_102] : memref<4x9x16x8xf32, #tpu.memory_space<vmem>>, vector<1x8x8x8xf32>
    %172 = vector.shape_cast %171 : vector<1x8x8x8xf32> to vector<8x8x8xf32>
    %173 = vector.shape_cast %172 : vector<8x8x8xf32> to vector<64x8xf32>
    %c0_103 = arith.constant 0 : index
    %c0_104 = arith.constant 0 : index
    %c1_105 = arith.constant 1 : index
    %c0_106 = arith.constant 0 : index
    %174 = vector.load %arg19[%c0_103, %c0_104, %c1_105, %c0_106] : memref<4x9x16x8xf32, #tpu.memory_space<vmem>>, vector<1x8x8x8xf32>
    %175 = vector.shape_cast %174 : vector<1x8x8x8xf32> to vector<8x8x8xf32>
    %176 = vector.shape_cast %175 : vector<8x8x8xf32> to vector<64x8xf32>
    %c2_107 = arith.constant 2 : index
    %c0_108 = arith.constant 0 : index
    %c0_109 = arith.constant 0 : index
    %c0_110 = arith.constant 0 : index
    %177 = vector.load %arg19[%c2_107, %c0_108, %c0_109, %c0_110] : memref<4x9x16x8xf32, #tpu.memory_space<vmem>>, vector<1x8x8x8xf32>
    %178 = vector.shape_cast %177 : vector<1x8x8x8xf32> to vector<8x8x8xf32>
    %179 = vector.shape_cast %178 : vector<8x8x8xf32> to vector<64x8xf32>
    %c3_111 = arith.constant 3 : index
    %c0_112 = arith.constant 0 : index
    %c0_113 = arith.constant 0 : index
    %c0_114 = arith.constant 0 : index
    %180 = vector.load %arg19[%c3_111, %c0_112, %c0_113, %c0_114] : memref<4x9x16x8xf32, #tpu.memory_space<vmem>>, vector<1x8x8x8xf32>
    %181 = vector.shape_cast %180 : vector<1x8x8x8xf32> to vector<8x8x8xf32>
    %182 = vector.shape_cast %181 : vector<8x8x8xf32> to vector<64x8xf32>
    %c2_115 = arith.constant 2 : index
    %c0_116 = arith.constant 0 : index
    %c1_117 = arith.constant 1 : index
    %c0_118 = arith.constant 0 : index
    %183 = vector.load %arg19[%c2_115, %c0_116, %c1_117, %c0_118] : memref<4x9x16x8xf32, #tpu.memory_space<vmem>>, vector<1x8x8x8xf32>
    %184 = vector.shape_cast %183 : vector<1x8x8x8xf32> to vector<8x8x8xf32>
    %185 = vector.shape_cast %184 : vector<8x8x8xf32> to vector<64x8xf32>
    %c0_119 = arith.constant 0 : index
    %c1_120 = arith.constant 1 : index
    %c0_121 = arith.constant 0 : index
    %c0_122 = arith.constant 0 : index
    %186 = vector.load %arg19[%c0_119, %c1_120, %c0_121, %c0_122] : memref<4x9x16x8xf32, #tpu.memory_space<vmem>>, vector<1x8x8x8xf32>
    %187 = vector.shape_cast %186 : vector<1x8x8x8xf32> to vector<8x8x8xf32>
    %188 = vector.shape_cast %187 : vector<8x8x8xf32> to vector<64x8xf32>
    %c1_123 = arith.constant 1 : index
    %c1_124 = arith.constant 1 : index
    %c0_125 = arith.constant 0 : index
    %c0_126 = arith.constant 0 : index
    %189 = vector.load %arg19[%c1_123, %c1_124, %c0_125, %c0_126] : memref<4x9x16x8xf32, #tpu.memory_space<vmem>>, vector<1x8x8x8xf32>
    %190 = vector.shape_cast %189 : vector<1x8x8x8xf32> to vector<8x8x8xf32>
    %191 = vector.shape_cast %190 : vector<8x8x8xf32> to vector<64x8xf32>
    %c0_127 = arith.constant 0 : index
    %c1_128 = arith.constant 1 : index
    %c1_129 = arith.constant 1 : index
    %c0_130 = arith.constant 0 : index
    %192 = vector.load %arg19[%c0_127, %c1_128, %c1_129, %c0_130] : memref<4x9x16x8xf32, #tpu.memory_space<vmem>>, vector<1x8x8x8xf32>
    %193 = vector.shape_cast %192 : vector<1x8x8x8xf32> to vector<8x8x8xf32>
    %194 = vector.shape_cast %193 : vector<8x8x8xf32> to vector<64x8xf32>
    %195 = tpu.concatenate %170, %173, %176, %179, %182, %185, %188, %191, %194 in 1 : vector<64x8xf32>, vector<64x8xf32>, vector<64x8xf32>, vector<64x8xf32>, vector<64x8xf32>, vector<64x8xf32>, vector<64x8xf32>, vector<64x8xf32>, vector<64x8xf32> -> vector<64x72xf32>
    %196 = arith.truncf %195 : vector<64x72xf32> to vector<64x72xbf16>
    %c0_131 = arith.constant 0 : index
    %c0_132 = arith.constant 0 : index
    %197 = vector.load %arg5[%c0_131, %c0_132] : memref<72x8xbf16, #tpu.memory_space<vmem>>, vector<72x8xbf16>
    %cst_133 = arith.constant dense<0.000000e+00> : vector<64x8xf32>
    %198 = tpu.matmul %196, %197, %cst_133 {dimension_numbers = #tpu.dot_dimension_numbers<[1], [0], [0], [1], [0, 0, 1, 1], [], []>} : vector<64x72xbf16>, vector<72x8xbf16>, vector<64x8xf32> -> vector<64x8xf32>
    %c0_134 = arith.constant 0 : index
    %c0_135 = arith.constant 0 : index
    %199 = vector.load %arg6[%c0_134, %c0_135] : memref<1x8xf32, #tpu.memory_space<vmem>>, vector<1x8xf32>
    %200 = vector.broadcast %199 : vector<1x8xf32> to vector<64x8xf32>
    %201 = arith.mulf %198, %200 : vector<64x8xf32>
    %c0_136 = arith.constant 0 : index
    %c0_137 = arith.constant 0 : index
    %202 = vector.load %arg7[%c0_136, %c0_137] : memref<1x8xf32, #tpu.memory_space<vmem>>, vector<1x8xf32>
    %203 = vector.broadcast %202 : vector<1x8xf32> to vector<64x8xf32>
    %204 = arith.addf %201, %203 : vector<64x8xf32>
    %cst_138 = arith.constant 0.000000e+00 : f32
    %205 = vector.broadcast %cst_138 : f32 to vector<64x8xf32>
    %206 = arith.maximumf %204, %205 : vector<64x8xf32>
    %207 = arith.truncf %206 : vector<64x8xf32> to vector<64x8xbf16>
    %c0_139 = arith.constant 0 : index
    %c0_140 = arith.constant 0 : index
    %208 = vector.load %arg8[%c0_139, %c0_140] : memref<8x32xbf16, #tpu.memory_space<vmem>>, vector<8x32xbf16>
    %cst_141 = arith.constant dense<0.000000e+00> : vector<64x32xf32>
    %209 = tpu.matmul %207, %208, %cst_141 {dimension_numbers = #tpu.dot_dimension_numbers<[1], [0], [0], [1], [0, 0, 1, 1], [], []>} : vector<64x8xbf16>, vector<8x32xbf16>, vector<64x32xf32> -> vector<64x32xf32>
    %c0_142 = arith.constant 0 : index
    %c0_143 = arith.constant 0 : index
    %210 = vector.load %arg9[%c0_142, %c0_143] : memref<1x32xf32, #tpu.memory_space<vmem>>, vector<1x32xf32>
    %211 = vector.broadcast %210 : vector<1x32xf32> to vector<64x32xf32>
    %212 = arith.mulf %209, %211 : vector<64x32xf32>
    %c0_144 = arith.constant 0 : index
    %c0_145 = arith.constant 0 : index
    %213 = vector.load %arg10[%c0_144, %c0_145] : memref<1x32xf32, #tpu.memory_space<vmem>>, vector<1x32xf32>
    %214 = vector.broadcast %213 : vector<1x32xf32> to vector<64x32xf32>
    %215 = arith.addf %212, %214 : vector<64x32xf32>
    %cst_146 = arith.constant 0.000000e+00 : f32
    %216 = vector.broadcast %cst_146 : f32 to vector<64x32xf32>
    %217 = arith.maximumf %215, %216 : vector<64x32xf32>
    %c0_147 = arith.constant 0 : index
    %c3_148 = arith.constant 3 : index
    %c0_149 = arith.constant 0 : index
    %c0_150 = arith.constant 0 : index
    %c0_151 = arith.constant 0 : index
    %218 = vector.load %arg1[%c0_147, %c3_148, %c0_149, %c0_150, %c0_151] : memref<1x4x9x16x4xbf16, #tpu.memory_space<vmem>>, vector<1x1x8x8x4xbf16>
    %219 = vector.shape_cast %218 : vector<1x1x8x8x4xbf16> to vector<8x8x4xbf16>
    %220 = arith.extf %219 : vector<8x8x4xbf16> to vector<8x8x4xf32>
    %221 = vector.shape_cast %220 : vector<8x8x4xf32> to vector<64x4xf32>
    %c0_152 = arith.constant 0 : index
    %c0_153 = arith.constant 0 : index
    %222 = vector.load %arg11[%c0_152, %c0_153] : memref<4x32xf32, #tpu.memory_space<vmem>>, vector<4x32xf32>
    %cst_154 = arith.constant dense<0.000000e+00> : vector<64x32xf32>
    %223 = tpu.matmul %221, %222, %cst_154 {dimension_numbers = #tpu.dot_dimension_numbers<[1], [0], [0], [1], [0, 0, 1, 1], [], []>} : vector<64x4xf32>, vector<4x32xf32>, vector<64x32xf32> -> vector<64x32xf32>
    %c0_155 = arith.constant 0 : index
    %c0_156 = arith.constant 0 : index
    %224 = vector.load %arg12[%c0_155, %c0_156] : memref<1x32xf32, #tpu.memory_space<vmem>>, vector<1x32xf32>
    %225 = vector.broadcast %224 : vector<1x32xf32> to vector<64x32xf32>
    %226 = arith.mulf %223, %225 : vector<64x32xf32>
    %c0_157 = arith.constant 0 : index
    %c0_158 = arith.constant 0 : index
    %227 = vector.load %arg13[%c0_157, %c0_158] : memref<1x32xf32, #tpu.memory_space<vmem>>, vector<1x32xf32>
    %228 = vector.broadcast %227 : vector<1x32xf32> to vector<64x32xf32>
    %229 = arith.addf %226, %228 : vector<64x32xf32>
    %cst_159 = arith.constant dense<0.000000e+00> : vector<32xf32>
    %230 = vector.multi_reduction <add>, %217, %cst_159 [0] : vector<64x32xf32> to vector<32xf32>
    %231 = vector.shape_cast %230 : vector<32xf32> to vector<1x32xf32>
    %cst_160 = arith.constant 6.400000e+01 : f32
    %232 = vector.broadcast %cst_160 : f32 to vector<1x32xf32>
    %233 = arith.divf %231, %232 : vector<1x32xf32>
    %c0_161 = arith.constant 0 : index
    %c0_162 = arith.constant 0 : index
    %234 = vector.load %arg14[%c0_161, %c0_162] : memref<32x2xf32, #tpu.memory_space<vmem>>, vector<32x2xf32>
    %cst_163 = arith.constant dense<0.000000e+00> : vector<1x2xf32>
    %235 = tpu.matmul %233, %234, %cst_163 {dimension_numbers = #tpu.dot_dimension_numbers<[1], [0], [0], [1], [0, 0, 1, 1], [], []>} : vector<1x32xf32>, vector<32x2xf32>, vector<1x2xf32> -> vector<1x2xf32>
    %c0_164 = arith.constant 0 : index
    %c0_165 = arith.constant 0 : index
    %236 = vector.load %arg15[%c0_164, %c0_165] : memref<1x2xf32, #tpu.memory_space<vmem>>, vector<1x2xf32>
    %237 = arith.addf %235, %236 : vector<1x2xf32>
    %cst_166 = arith.constant 0.000000e+00 : f32
    %238 = vector.broadcast %cst_166 : f32 to vector<1x2xf32>
    %239 = arith.maximumf %237, %238 : vector<1x2xf32>
    %c0_167 = arith.constant 0 : index
    %c0_168 = arith.constant 0 : index
    %240 = vector.load %arg16[%c0_167, %c0_168] : memref<2x32xf32, #tpu.memory_space<vmem>>, vector<2x32xf32>
    %cst_169 = arith.constant dense<0.000000e+00> : vector<1x32xf32>
    %241 = tpu.matmul %239, %240, %cst_169 {dimension_numbers = #tpu.dot_dimension_numbers<[1], [0], [0], [1], [0, 0, 1, 1], [], []>} : vector<1x2xf32>, vector<2x32xf32>, vector<1x32xf32> -> vector<1x32xf32>
    %c0_170 = arith.constant 0 : index
    %c0_171 = arith.constant 0 : index
    %242 = vector.load %arg17[%c0_170, %c0_171] : memref<1x32xf32, #tpu.memory_space<vmem>>, vector<1x32xf32>
    %243 = arith.addf %241, %242 : vector<1x32xf32>
    %244 = arith.negf %243 : vector<1x32xf32>
    %245 = math.exp %244 : vector<1x32xf32>
    %cst_172 = arith.constant 1.000000e+00 : f32
    %246 = vector.broadcast %cst_172 : f32 to vector<1x32xf32>
    %247 = arith.addf %246, %245 : vector<1x32xf32>
    %248 = arith.divf %246, %247 : vector<1x32xf32>
    %249 = vector.broadcast %248 : vector<1x32xf32> to vector<64x32xf32>
    %250 = arith.mulf %217, %249 : vector<64x32xf32>
    %251 = arith.addf %250, %229 : vector<64x32xf32>
    %cst_173 = arith.constant 0.000000e+00 : f32
    %252 = vector.broadcast %cst_173 : f32 to vector<64x32xf32>
    %253 = arith.maximumf %251, %252 : vector<64x32xf32>
    %254 = arith.truncf %253 : vector<64x32xf32> to vector<64x32xbf16>
    %c0_174 = arith.constant 0 : index
    %c0_175 = arith.constant 0 : index
    %c0_176 = arith.constant 0 : index
    %255 = vector.load %arg18[%c0_174, %c0_175, %c0_176] : memref<1x64x32xbf16, #tpu.memory_space<vmem>>, vector<1x64x32xbf16>
    %256 = vector.shape_cast %255 : vector<1x64x32xbf16> to vector<64x32xbf16>
    %257 = vector.shape_cast %254 : vector<64x32xbf16> to vector<1x64x32xbf16>
    tpu.vector_store %arg18[%c0_174, %c0_175, %c0_176], %257 {strides = array<i32>} : memref<1x64x32xbf16, #tpu.memory_space<vmem>>, vector<1x64x32xbf16>,
    return
  }
  func.func @transform_0(%arg0: i32) -> (i32, i32, i32, i32, i32) {
    %c0_i32 = arith.constant 0 : i32
    %c0_i32_0 = arith.constant 0 : i32
    %c0_i32_1 = arith.constant 0 : i32
    %c0_i32_2 = arith.constant 0 : i32
    %c0_i32_3 = arith.constant 0 : i32
    return %arg0, %c0_i32, %c0_i32_0, %c0_i32_1, %c0_i32_2 : i32, i32, i32, i32, i32
  }
  func.func @transform_1(%arg0: i32) -> (i32, i32) {
    %c0_i32 = arith.constant 0 : i32
    %c0_i32_0 = arith.constant 0 : i32
    %c0_i32_1 = arith.constant 0 : i32
    return %c0_i32, %c0_i32_0 : i32, i32
  }
  func.func @transform_2(%arg0: i32) -> (i32, i32) {
    %c0_i32 = arith.constant 0 : i32
    %c0_i32_0 = arith.constant 0 : i32
    %c0_i32_1 = arith.constant 0 : i32
    return %c0_i32, %c0_i32_0 : i32, i32
  }
  func.func @transform_3(%arg0: i32) -> (i32, i32) {
    %c0_i32 = arith.constant 0 : i32
    %c0_i32_0 = arith.constant 0 : i32
    %c0_i32_1 = arith.constant 0 : i32
    return %c0_i32, %c0_i32_0 : i32, i32
  }
  func.func @transform_4(%arg0: i32) -> (i32, i32) {
    %c0_i32 = arith.constant 0 : i32
    %c0_i32_0 = arith.constant 0 : i32
    %c0_i32_1 = arith.constant 0 : i32
    return %c0_i32, %c0_i32_0 : i32, i32
  }
  func.func @transform_5(%arg0: i32) -> (i32, i32) {
    %c0_i32 = arith.constant 0 : i32
    %c0_i32_0 = arith.constant 0 : i32
    %c0_i32_1 = arith.constant 0 : i32
    return %c0_i32, %c0_i32_0 : i32, i32
  }
  func.func @transform_6(%arg0: i32) -> (i32, i32) {
    %c0_i32 = arith.constant 0 : i32
    %c0_i32_0 = arith.constant 0 : i32
    %c0_i32_1 = arith.constant 0 : i32
    return %c0_i32, %c0_i32_0 : i32, i32
  }
  func.func @transform_7(%arg0: i32) -> (i32, i32) {
    %c0_i32 = arith.constant 0 : i32
    %c0_i32_0 = arith.constant 0 : i32
    %c0_i32_1 = arith.constant 0 : i32
    return %c0_i32, %c0_i32_0 : i32, i32
  }
  func.func @transform_8(%arg0: i32) -> (i32, i32) {
    %c0_i32 = arith.constant 0 : i32
    %c0_i32_0 = arith.constant 0 : i32
    %c0_i32_1 = arith.constant 0 : i32
    return %c0_i32, %c0_i32_0 : i32, i32
  }
  func.func @transform_9(%arg0: i32) -> (i32, i32) {
    %c0_i32 = arith.constant 0 : i32
    %c0_i32_0 = arith.constant 0 : i32
    %c0_i32_1 = arith.constant 0 : i32
    return %c0_i32, %c0_i32_0 : i32, i32
  }
  func.func @transform_10(%arg0: i32) -> (i32, i32) {
    %c0_i32 = arith.constant 0 : i32
    %c0_i32_0 = arith.constant 0 : i32
    %c0_i32_1 = arith.constant 0 : i32
    return %c0_i32, %c0_i32_0 : i32, i32
  }
  func.func @transform_11(%arg0: i32) -> (i32, i32) {
    %c0_i32 = arith.constant 0 : i32
    %c0_i32_0 = arith.constant 0 : i32
    %c0_i32_1 = arith.constant 0 : i32
    return %c0_i32, %c0_i32_0 : i32, i32
  }
  func.func @transform_12(%arg0: i32) -> (i32, i32) {
    %c0_i32 = arith.constant 0 : i32
    %c0_i32_0 = arith.constant 0 : i32
    %c0_i32_1 = arith.constant 0 : i32
    return %c0_i32, %c0_i32_0 : i32, i32
  }
  func.func @transform_13(%arg0: i32) -> (i32, i32) {
    %c0_i32 = arith.constant 0 : i32
    %c0_i32_0 = arith.constant 0 : i32
    %c0_i32_1 = arith.constant 0 : i32
    return %c0_i32, %c0_i32_0 : i32, i32
  }
  func.func @transform_14(%arg0: i32) -> (i32, i32) {
    %c0_i32 = arith.constant 0 : i32
    %c0_i32_0 = arith.constant 0 : i32
    %c0_i32_1 = arith.constant 0 : i32
    return %c0_i32, %c0_i32_0 : i32, i32
  }
  func.func @transform_15(%arg0: i32) -> (i32, i32) {
    %c0_i32 = arith.constant 0 : i32
    %c0_i32_0 = arith.constant 0 : i32
    %c0_i32_1 = arith.constant 0 : i32
    return %c0_i32, %c0_i32_0 : i32, i32
  }
  func.func @transform_16(%arg0: i32) -> (i32, i32) {
    %c0_i32 = arith.constant 0 : i32
    %c0_i32_0 = arith.constant 0 : i32
    %c0_i32_1 = arith.constant 0 : i32
    return %c0_i32, %c0_i32_0 : i32, i32
  }
  func.func @transform_17(%arg0: i32) -> (i32, i32, i32) {
    %c0_i32 = arith.constant 0 : i32
    %c0_i32_0 = arith.constant 0 : i32
    %c0_i32_1 = arith.constant 0 : i32
    return %arg0, %c0_i32, %c0_i32_0 : i32, i32, i32
  }
}

</mosaic_0001>

<llo_original>
// kernel: bottleneck_se_forward.1
$region0: #{bottleneck_se_forward.1}
  #allocation0 [shape = 'u32[]', space=smem, size = 0x4, offset = 0x4, fixed_abs, tag = 'smem constant byte address 0x4 - core index']
  #allocation1 [shape = 'u32[144,128]{1,0:T(1,128)}', space=vmem, size = 0x12000, scoped, tag = 'internal scratch']
  #allocation2 [shape = 'f32[4,9,16,8]{3,2,1,0:T(8,128)}', space=vmem, size = 0x48000, scoped, tag = 'scratch operand']
  %s0 = inlined_call_operand.hbm [shape: bf16[2,4,9,16,4], index: 0, kind: input, shape index: {}]
  %s1 = inlined_call_operand.hbm [shape: bf16[4,8], index: 1, kind: input, shape index: {}]
  %s2 = inlined_call_operand.hbm [shape: f32[1,8], index: 2, kind: input, shape index: {}]
  %s3 = inlined_call_operand.hbm [shape: f32[1,8], index: 3, kind: input, shape index: {}]
  %s4 = inlined_call_operand.hbm [shape: bf16[72,8], index: 4, kind: input, shape index: {}]
  %s5 = inlined_call_operand.hbm [shape: f32[1,8], index: 5, kind: input, shape index: {}]
  %s6 = inlined_call_operand.hbm [shape: f32[1,8], index: 6, kind: input, shape index: {}]
  %s7 = inlined_call_operand.hbm [shape: bf16[8,32], index: 7, kind: input, shape index: {}]
  %s8 = inlined_call_operand.hbm [shape: f32[1,32], index: 8, kind: input, shape index: {}]
  %s9 = inlined_call_operand.hbm [shape: f32[1,32], index: 9, kind: input, shape index: {}]
  %s10 = inlined_call_operand.hbm [shape: f32[4,32], index: 10, kind: input, shape index: {}]
  %s11 = inlined_call_operand.hbm [shape: f32[1,32], index: 11, kind: input, shape index: {}]
  %s12 = inlined_call_operand.hbm [shape: f32[1,32], index: 12, kind: input, shape index: {}]
  %s13 = inlined_call_operand.hbm [shape: f32[32,2], index: 13, kind: input, shape index: {}]
  %s14 = inlined_call_operand.hbm [shape: f32[1,2], index: 14, kind: input, shape index: {}]
  %s15 = inlined_call_operand.hbm [shape: f32[2,32], index: 15, kind: input, shape index: {}]
  %s16 = inlined_call_operand.hbm [shape: f32[1,32], index: 16, kind: input, shape index: {}]
  %s17 = inlined_call_operand.hbm [shape: bf16[2,64,32], index: 17, kind: output, shape index: {}]
  %s18 = sld [smem:[#allocation0]]
  $region169: #{bottleneck_se_forward.1} parent=0
    _
  %s20 = ssub.s32 1, %s18
  %s21 = scalar_select 0, %s20, %s18
  $region1: #{bottleneck_se_forward.1} parent=0
    #allocation3 [shape = 'u8[294912]{0}', space=vmem, size = 0x48000, scoped, tag = 'input window, operand 0']
    #allocation4 [shape = 's32[2]{0}', space=sflag, size = 0x8, scoped, tag = 'scoped memory for bottleneck_se_forward.1']
    #allocation5 [shape = 's32[2]{0}', space=sflag, size = 0x8, scoped, tag = 'scoped memory for bottleneck_se_forward.1']
    #allocation6 [shape = 'u8[1024]{0}', space=vmem, size = 0x400, scoped, tag = 'input window, operand 1, single buffered']
    #allocation7 [shape = 's32[1]{0}', space=sflag, size = 0x4, scoped, tag = 'scoped memory for bottleneck_se_forward.1']
    #allocation8 [shape = 'u8[512]{0}', space=vmem, size = 0x400, scoped, tag = 'input window, operand 2, single buffered']
    #allocation9 [shape = 'u8[512]{0}', space=vmem, size = 0x400, scoped, tag = 'input window, operand 3, single buffered']
    #allocation10 [shape = 's32[1]{0}', space=sflag, size = 0x4, scoped, tag = 'scoped memory for bottleneck_se_forward.1']
    #allocation11 [shape = 'u8[18432]{0}', space=vmem, size = 0x4800, scoped, tag = 'input window, operand 4, single buffered']
    #allocation12 [shape = 'u8[512]{0}', space=vmem, size = 0x400, scoped, tag = 'input window, operand 5, single buffered']
    #allocation13 [shape = 's32[1]{0}', space=sflag, size = 0x4, scoped, tag = 'scoped memory for bottleneck_se_forward.1']
    #allocation14 [shape = 'u8[512]{0}', space=vmem, size = 0x400, scoped, tag = 'input window, operand 6, single buffered']
    #allocation15 [shape = 'u8[2048]{0}', space=vmem, size = 0x800, scoped, tag = 'input window, operand 7, single buffered']
    #allocation16 [shape = 's32[1]{0}', space=sflag, size = 0x4, scoped, tag = 'scoped memory for bottleneck_se_forward.1']
    #allocation17 [shape = 'u8[512]{0}', space=vmem, size = 0x400, scoped, tag = 'input window, operand 8, single buffered']
    #allocation18 [shape = 'u8[512]{0}', space=vmem, size = 0x400, scoped, tag = 'input window, operand 9, single buffered']
    #allocation19 [shape = 's32[1]{0}', space=sflag, size = 0x4, scoped, tag = 'scoped memory for bottleneck_se_forward.1']
    #allocation20 [shape = 'u8[2048]{0}', space=vmem, size = 0x800, scoped, tag = 'input window, operand 10, single buffered']
    #allocation21 [shape = 'u8[512]{0}', space=vmem, size = 0x400, scoped, tag = 'input window, operand 11, single buffered']
    #allocation22 [shape = 's32[1]{0}', space=sflag, size = 0x4, scoped, tag = 'scoped memory for bottleneck_se_forward.1']
    #allocation23 [shape = 'u8[512]{0}', space=vmem, size = 0x400, scoped, tag = 'input window, operand 12, single buffered']
    #allocation24 [shape = 'u8[16384]{0}', space=vmem, size = 0x4000, scoped, tag = 'input window, operand 13, single buffered']
    #allocation25 [shape = 's32[1]{0}', space=sflag, size = 0x4, scoped, tag = 'scoped memory for bottleneck_se_forward.1']
    #allocation26 [shape = 'u8[512]{0}', space=vmem, size = 0x400, scoped, tag = 'input window, operand 14, single buffered']
    #allocation27 [shape = 'u8[1024]{0}', space=vmem, size = 0x400, scoped, tag = 'input window, operand 15, single buffered']
    #allocation28 [shape = 's32[1]{0}', space=sflag, size = 0x4, scoped, tag = 'scoped memory for bottleneck_se_forward.1']
    #allocation29 [shape = 'u8[512]{0}', space=vmem, size = 0x400, scoped, tag = 'input window, operand 16, single buffered']
    #allocation30 [shape = 'u8[32768]{0}', space=vmem, size = 0x8000, scoped, tag = 'output window, operand 0']
    %22 = vsyncpa [#allocation4], 0
    %s23 = scalar_lea.sflag [#allocation4], 1
    %24 = vsyncpa %s23, 0
    %25 = vsyncpa [#allocation7], 0
    %26 = vsyncpa [#allocation10], 0
    %27 = vsyncpa [#allocation13], 0
    %28 = vsyncpa [#allocation16], 0
    %29 = vsyncpa [#allocation19], 0
    %30 = vsyncpa [#allocation22], 0
    %31 = vsyncpa [#allocation25], 0
    %32 = vsyncpa [#allocation28], 0
    %33 = vsyncpa [#allocation5], 0
    %s34 = scalar_lea.sflag [#allocation5], 1
    %35 = vsyncpa %s34, 0
    loop: start=0, step=1, limit=4
    $region2: #{bottleneck_se_forward.1} parent=1 // loop_pre_header
      _
    $region3: #{bottleneck_se_forward.1} parent=1 // loop_header
      %s37 = sphi 0, %s41
      %p38 = scmp.ge.s32.totalorder %s37, 4
      %s47 = sphi 0, %s49
      %s50 = sphi 0, %s47
      %s51 = sphi 0, %s50
      %s67 = sphi 0, %s51
      %s71 = sphi 0, %s71
      %s73 = sphi 0, %s71
      %s74 = sphi 0, %s73
      %s88 = sphi 0, %s74
      %s92 = sphi 0, %s92
      %s94 = sphi 0, %s92
      %s95 = sphi 0, %s94
      %s109 = sphi 0, %s95
      %s113 = sphi 0, %s113
      %s115 = sphi 0, %s113
      %s116 = sphi 0, %s115
      %s130 = sphi 0, %s116
      %s134 = sphi 0, %s134
      %s136 = sphi 0, %s134
      %s137 = sphi 0, %s136
      %s151 = sphi 0, %s137
      %s155 = sphi 0, %s155
      %s157 = sphi 0, %s155
      %s158 = sphi 0, %s157
      %s172 = sphi 0, %s158
      %s176 = sphi 0, %s176
      %s178 = sphi 0, %s176
      %s179 = sphi 0, %s178
      %s193 = sphi 0, %s179
      %s197 = sphi 0, %s197
      %s199 = sphi 0, %s197
      %s200 = sphi 0, %s199
      %s214 = sphi 0, %s200
      %s218 = sphi 0, %s218
      %s220 = sphi 0, %s218
      %s221 = sphi 0, %s220
      %s235 = sphi 0, %s221
      %s239 = sphi 0, %s239
      %s241 = sphi 0, %s239
      %s242 = sphi 0, %s241
      %s256 = sphi 0, %s242
      %s260 = sphi 0, %s260
      %s262 = sphi 0, %s260
      %s263 = sphi 0, %s262
      %s277 = sphi 0, %s263
      %s281 = sphi 0, %s281
      %s283 = sphi 0, %s281
      %s284 = sphi 0, %s283
      %s298 = sphi 0, %s284
      %s302 = sphi 0, %s302
      %s304 = sphi 0, %s302
      %s305 = sphi 0, %s304
      %s319 = sphi 0, %s305
      %s323 = sphi 0, %s323
      %s325 = sphi 0, %s323
      %s326 = sphi 0, %s325
      %s340 = sphi 0, %s326
      %s344 = sphi 0, %s344
      %s346 = sphi 0, %s344
      %s347 = sphi 0, %s346
      %s361 = sphi 0, %s347
      %s365 = sphi 0, %s365
      %s367 = sphi 0, %s365
      %s368 = sphi 0, %s367
      %s382 = sphi 0, %s368
      %s386 = sphi 0, %s386
      %s388 = sphi 0, %s386
      %s389 = sphi 0, %s388
      %s403 = sphi 0, %s389
      %s409 = sphi 0, %s411
      %s412 = sphi 0, %s409
      %s413 = sphi 0, %s412
      %s429 = sphi 0, %s413
    $region4: #{bottleneck_se_forward.1} parent=1 // loop_header_branch
      %40 = sbr.rel (%p38) target = $region8
    $region5: #{bottleneck_se_forward.1} parent=1 // loop_body
      %s42 = ssub.s32 %s37, 1
      %s43 = ssub.s32 %s37, 2
      %s44 = sadd.s32 %s37, 1
      %s45 = ssub.s32 %s37, %s44
      %p46 = scmp.eq.s32.totalorder %s45, 0
      %s48 = sadd.s32 %s47, 1
      %s49 = scalar_select %p46, %s47, %s48
      %p52 = pneg %p46
      %p53 = scmp.eq.s32.totalorder %s37, 1
      %p54 = por %p52, %p53
      %p55 = scmp.ne.s32.totalorder %s47, %s50
      %p56 = scmp.eq.s32.totalorder %s37, 0
      %p57 = por %p55, %p56
      %p58 = scmp.ne.s32.totalorder %s47, %s50
      %p59 = scmp.eq.s32.totalorder %s42, 1
      %p60 = por %p58, %p59
      %p61 = scmp.ne.s32.totalorder %s50, %s51
      %p62 = scmp.eq.s32.totalorder %s42, 0
      %p63 = por %p61, %p62
      %p64 = scmp.ne.s32.totalorder %s50, %s51
      %p65 = scmp.eq.s32.totalorder %s43, 1
      %p66 = por %p64, %p65
      %p68 = scmp.ne.s32.totalorder %s51, %s67
      %p69 = scmp.eq.s32.totalorder %s43, 0
      %p70 = por %p68, %p69
      %s72 = sadd.s32 %s71, 1
      %p75 = scmp.eq.s32.totalorder %s37, 1
      %p76 = scmp.ne.s32.totalorder %s71, %s73
      %p77 = scmp.eq.s32.totalorder %s37, 0
      %p78 = por %p76, %p77
      %p79 = scmp.ne.s32.totalorder %s71, %s73
      %p80 = scmp.eq.s32.totalorder %s42, 1
      %p81 = por %p79, %p80
      %p82 = scmp.ne.s32.totalorder %s73, %s74
      %p83 = scmp.eq.s32.totalorder %s42, 0
      %p84 = por %p82, %p83
      %p85 = scmp.ne.s32.totalorder %s73, %s74
      %p86 = scmp.eq.s32.totalorder %s43, 1
      %p87 = por %p85, %p86
      %p89 = scmp.ne.s32.totalorder %s74, %s88
      %p90 = scmp.eq.s32.totalorder %s43, 0
      %p91 = por %p89, %p90
      %s93 = sadd.s32 %s92, 1
      %p96 = scmp.eq.s32.totalorder %s37, 1
      %p97 = scmp.ne.s32.totalorder %s92, %s94
      %p98 = scmp.eq.s32.totalorder %s37, 0
      %p99 = por %p97, %p98
      %p100 = scmp.ne.s32.totalorder %s92, %s94
      %p101 = scmp.eq.s32.totalorder %s42, 1
      %p102 = por %p100, %p101
      %p103 = scmp.ne.s32.totalorder %s94, %s95
      %p104 = scmp.eq.s32.totalorder %s42, 0
      %p105 = por %p103, %p104
      %p106 = scmp.ne.s32.totalorder %s94, %s95
      %p107 = scmp.eq.s32.totalorder %s43, 1
      %p108 = por %p106, %p107
      %p110 = scmp.ne.s32.totalorder %s95, %s109
      %p111 = scmp.eq.s32.totalorder %s43, 0
      %p112 = por %p110, %p111
      %s114 = sadd.s32 %s113, 1
      %p117 = scmp.eq.s32.totalorder %s37, 1
      %p118 = scmp.ne.s32.totalorder %s113, %s115
      %p119 = scmp.eq.s32.totalorder %s37, 0
      %p120 = por %p118, %p119
      %p121 = scmp.ne.s32.totalorder %s113, %s115
      %p122 = scmp.eq.s32.totalorder %s42, 1
      %p123 = por %p121, %p122
      %p124 = scmp.ne.s32.totalorder %s115, %s116
      %p125 = scmp.eq.s32.totalorder %s42, 0
      %p126 = por %p124, %p125
      %p127 = scmp.ne.s32.totalorder %s115, %s116
      %p128 = scmp.eq.s32.totalorder %s43, 1
      %p129 = por %p127, %p128
      %p131 = scmp.ne.s32.totalorder %s116, %s130
      %p132 = scmp.eq.s32.totalorder %s43, 0
      %p133 = por %p131, %p132
      %s135 = sadd.s32 %s134, 1
      %p138 = scmp.eq.s32.totalorder %s37, 1
      %p139 = scmp.ne.s32.totalorder %s134, %s136
      %p140 = scmp.eq.s32.totalorder %s37, 0
      %p141 = por %p139, %p140
      %p142 = scmp.ne.s32.totalorder %s134, %s136
      %p143 = scmp.eq.s32.totalorder %s42, 1
      %p144 = por %p142, %p143
      %p145 = scmp.ne.s32.totalorder %s136, %s137
      %p146 = scmp.eq.s32.totalorder %s42, 0
      %p147 = por %p145, %p146
      %p148 = scmp.ne.s32.totalorder %s136, %s137
      %p149 = scmp.eq.s32.totalorder %s43, 1
      %p150 = por %p148, %p149
      %p152 = scmp.ne.s32.totalorder %s137, %s151
      %p153 = scmp.eq.s32.totalorder %s43, 0
      %p154 = por %p152, %p153
      %s156 = sadd.s32 %s155, 1
      %p159 = scmp.eq.s32.totalorder %s37, 1
      %p160 = scmp.ne.s32.totalorder %s155, %s157
      %p161 = scmp.eq.s32.totalorder %s37, 0
      %p162 = por %p160, %p161
      %p163 = scmp.ne.s32.totalorder %s155, %s157
      %p164 = scmp.eq.s32.totalorder %s42, 1
      %p165 = por %p163, %p164
      %p166 = scmp.ne.s32.totalorder %s157, %s158
      %p167 = scmp.eq.s32.totalorder %s42, 0
      %p168 = por %p166, %p167
      %p169 = scmp.ne.s32.totalorder %s157, %s158
      %p170 = scmp.eq.s32.totalorder %s43, 1
      %p171 = por %p169, %p170
      %p173 = scmp.ne.s32.totalorder %s158, %s172
      %p174 = scmp.eq.s32.totalorder %s43, 0
      %p175 = por %p173, %p174
      %s177 = sadd.s32 %s176, 1
      %p180 = scmp.eq.s32.totalorder %s37, 1
      %p181 = scmp.ne.s32.totalorder %s176, %s178
      %p182 = scmp.eq.s32.totalorder %s37, 0
      %p183 = por %p181, %p182
      %p184 = scmp.ne.s32.totalorder %s176, %s178
      %p185 = scmp.eq.s32.totalorder %s42, 1
      %p186 = por %p184, %p185
      %p187 = scmp.ne.s32.totalorder %s178, %s179
      %p188 = scmp.eq.s32.totalorder %s42, 0
      %p189 = por %p187, %p188
      %p190 = scmp.ne.s32.totalorder %s178, %s179
      %p191 = scmp.eq.s32.totalorder %s43, 1
      %p192 = por %p190, %p191
      %p194 = scmp.ne.s32.totalorder %s179, %s193
      %p195 = scmp.eq.s32.totalorder %s43, 0
      %p196 = por %p194, %p195
      %s198 = sadd.s32 %s197, 1
      %p201 = scmp.eq.s32.totalorder %s37, 1
      %p202 = scmp.ne.s32.totalorder %s197, %s199
      %p203 = scmp.eq.s32.totalorder %s37, 0
      %p204 = por %p202, %p203
      %p205 = scmp.ne.s32.totalorder %s197, %s199
      %p206 = scmp.eq.s32.totalorder %s42, 1
      %p207 = por %p205, %p206
      %p208 = scmp.ne.s32.totalorder %s199, %s200
      %p209 = scmp.eq.s32.totalorder %s42, 0
      %p210 = por %p208, %p209
      %p211 = scmp.ne.s32.totalorder %s199, %s200
      %p212 = scmp.eq.s32.totalorder %s43, 1
      %p213 = por %p211, %p212
      %p215 = scmp.ne.s32.totalorder %s200, %s214
      %p216 = scmp.eq.s32.totalorder %s43, 0
      %p217 = por %p215, %p216
      %s219 = sadd.s32 %s218, 1
      %p222 = scmp.eq.s32.totalorder %s37, 1
      %p223 = scmp.ne.s32.totalorder %s218, %s220
      %p224 = scmp.eq.s32.totalorder %s37, 0
      %p225 = por %p223, %p224
      %p226 = scmp.ne.s32.totalorder %s218, %s220
      %p227 = scmp.eq.s32.totalorder %s42, 1
      %p228 = por %p226, %p227
      %p229 = scmp.ne.s32.totalorder %s220, %s221
      %p230 = scmp.eq.s32.totalorder %s42, 0
      %p231 = por %p229, %p230
      %p232 = scmp.ne.s32.totalorder %s220, %s221
      %p233 = scmp.eq.s32.totalorder %s43, 1
      %p234 = por %p232, %p233
      %p236 = scmp.ne.s32.totalorder %s221, %s235
      %p237 = scmp.eq.s32.totalorder %s43, 0
      %p238 = por %p236, %p237
      %s240 = sadd.s32 %s239, 1
      %p243 = scmp.eq.s32.totalorder %s37, 1
      %p244 = scmp.ne.s32.totalorder %s239, %s241
      %p245 = scmp.eq.s32.totalorder %s37, 0
      %p246 = por %p244, %p245
      %p247 = scmp.ne.s32.totalorder %s239, %s241
      %p248 = scmp.eq.s32.totalorder %s42, 1
      %p249 = por %p247, %p248
      %p250 = scmp.ne.s32.totalorder %s241, %s242
      %p251 = scmp.eq.s32.totalorder %s42, 0
      %p252 = por %p250, %p251
      %p253 = scmp.ne.s32.totalorder %s241, %s242
      %p254 = scmp.eq.s32.totalorder %s43, 1
      %p255 = por %p253, %p254
      %p257 = scmp.ne.s32.totalorder %s242, %s256
      %p258 = scmp.eq.s32.totalorder %s43, 0
      %p259 = por %p257, %p258
      %s261 = sadd.s32 %s260, 1
      %p264 = scmp.eq.s32.totalorder %s37, 1
      %p265 = scmp.ne.s32.totalorder %s260, %s262
      %p266 = scmp.eq.s32.totalorder %s37, 0
      %p267 = por %p265, %p266
      %p268 = scmp.ne.s32.totalorder %s260, %s262
      %p269 = scmp.eq.s32.totalorder %s42, 1
      %p270 = por %p268, %p269
      %p271 = scmp.ne.s32.totalorder %s262, %s263
      %p272 = scmp.eq.s32.totalorder %s42, 0
      %p273 = por %p271, %p272
      %p274 = scmp.ne.s32.totalorder %s262, %s263
      %p275 = scmp.eq.s32.totalorder %s43, 1
      %p276 = por %p274, %p275
      %p278 = scmp.ne.s32.totalorder %s263, %s277
      %p279 = scmp.eq.s32.totalorder %s43, 0
      %p280 = por %p278, %p279
      %s282 = sadd.s32 %s281, 1
      %p285 = scmp.eq.s32.totalorder %s37, 1
      %p286 = scmp.ne.s32.totalorder %s281, %s283
      %p287 = scmp.eq.s32.totalorder %s37, 0
      %p288 = por %p286, %p287
      %p289 = scmp.ne.s32.totalorder %s281, %s283
      %p290 = scmp.eq.s32.totalorder %s42, 1
      %p291 = por %p289, %p290
      %p292 = scmp.ne.s32.totalorder %s283, %s284
      %p293 = scmp.eq.s32.totalorder %s42, 0
      %p294 = por %p292, %p293
      %p295 = scmp.ne.s32.totalorder %s283, %s284
      %p296 = scmp.eq.s32.totalorder %s43, 1
      %p297 = por %p295, %p296
      %p299 = scmp.ne.s32.totalorder %s284, %s298
      %p300 = scmp.eq.s32.totalorder %s43, 0
      %p301 = por %p299, %p300
      %s303 = sadd.s32 %s302, 1
      %p306 = scmp.eq.s32.totalorder %s37, 1
      %p307 = scmp.ne.s32.totalorder %s302, %s304
      %p308 = scmp.eq.s32.totalorder %s37, 0
      %p309 = por %p307, %p308
      %p310 = scmp.ne.s32.totalorder %s302, %s304
      %p311 = scmp.eq.s32.totalorder %s42, 1
      %p312 = por %p310, %p311
      %p313 = scmp.ne.s32.totalorder %s304, %s305
      %p314 = scmp.eq.s32.totalorder %s42, 0
      %p315 = por %p313, %p314
      %p316 = scmp.ne.s32.totalorder %s304, %s305
      %p317 = scmp.eq.s32.totalorder %s43, 1
      %p318 = por %p316, %p317
      %p320 = scmp.ne.s32.totalorder %s305, %s319
      %p321 = scmp.eq.s32.totalorder %s43, 0
      %p322 = por %p320, %p321
      %s324 = sadd.s32 %s323, 1
      %p327 = scmp.eq.s32.totalorder %s37, 1
      %p328 = scmp.ne.s32.totalorder %s323, %s325
      %p329 = scmp.eq.s32.totalorder %s37, 0
      %p330 = por %p328, %p329
      %p331 = scmp.ne.s32.totalorder %s323, %s325
      %p332 = scmp.eq.s32.totalorder %s42, 1
      %p333 = por %p331, %p332
      %p334 = scmp.ne.s32.totalorder %s325, %s326
      %p335 = scmp.eq.s32.totalorder %s42, 0
      %p336 = por %p334, %p335
      %p337 = scmp.ne.s32.totalorder %s325, %s326
      %p338 = scmp.eq.s32.totalorder %s43, 1
      %p339 = por %p337, %p338
      %p341 = scmp.ne.s32.totalorder %s326, %s340
      %p342 = scmp.eq.s32.totalorder %s43, 0
      %p343 = por %p341, %p342
      %s345 = sadd.s32 %s344, 1
      %p348 = scmp.eq.s32.totalorder %s37, 1
      %p349 = scmp.ne.s32.totalorder %s344, %s346
      %p350 = scmp.eq.s32.totalorder %s37, 0
      %p351 = por %p349, %p350
      %p352 = scmp.ne.s32.totalorder %s344, %s346
      %p353 = scmp.eq.s32.totalorder %s42, 1
      %p354 = por %p352, %p353
      %p355 = scmp.ne.s32.totalorder %s346, %s347
      %p356 = scmp.eq.s32.totalorder %s42, 0
      %p357 = por %p355, %p356
      %p358 = scmp.ne.s32.totalorder %s346, %s347
      %p359 = scmp.eq.s32.totalorder %s43, 1
      %p360 = por %p358, %p359
      %p362 = scmp.ne.s32.totalorder %s347, %s361
      %p363 = scmp.eq.s32.totalorder %s43, 0
      %p364 = por %p362, %p363
      %s366 = sadd.s32 %s365, 1
      %p369 = scmp.eq.s32.totalorder %s37, 1
      %p370 = scmp.ne.s32.totalorder %s365, %s367
      %p371 = scmp.eq.s32.totalorder %s37, 0
      %p372 = por %p370, %p371
      %p373 = scmp.ne.s32.totalorder %s365, %s367
      %p374 = scmp.eq.s32.totalorder %s42, 1
      %p375 = por %p373, %p374
      %p376 = scmp.ne.s32.totalorder %s367, %s368
      %p377 = scmp.eq.s32.totalorder %s42, 0
      %p378 = por %p376, %p377
      %p379 = scmp.ne.s32.totalorder %s367, %s368
      %p380 = scmp.eq.s32.totalorder %s43, 1
      %p381 = por %p379, %p380
      %p383 = scmp.ne.s32.totalorder %s368, %s382
      %p384 = scmp.eq.s32.totalorder %s43, 0
      %p385 = por %p383, %p384
      %s387 = sadd.s32 %s386, 1
      %p390 = scmp.eq.s32.totalorder %s37, 1
      %p391 = scmp.ne.s32.totalorder %s386, %s388
      %p392 = scmp.eq.s32.totalorder %s37, 0
      %p393 = por %p391, %p392
      %p394 = scmp.ne.s32.totalorder %s386, %s388
      %p395 = scmp.eq.s32.totalorder %s42, 1
      %p396 = por %p394, %p395
      %p397 = scmp.ne.s32.totalorder %s388, %s389
      %p398 = scmp.eq.s32.totalorder %s42, 0
      %p399 = por %p397, %p398
      %p400 = scmp.ne.s32.totalorder %s388, %s389
      %p401 = scmp.eq.s32.totalorder %s43, 1
      %p402 = por %p400, %p401
      %p404 = scmp.ne.s32.totalorder %s389, %s403
      %p405 = scmp.eq.s32.totalorder %s43, 0
      %p406 = por %p404, %p405
      %s407 = ssub.s32 %s37, %s44
      %p408 = scmp.eq.s32.totalorder %s407, 0
      %s410 = sadd.s32 %s409, 1
      %s411 = scalar_select %p408, %s409, %s410
      %p414 = pneg %p408
      %p415 = scmp.eq.s32.totalorder %s37, 1
      %p416 = por %p414, %p415
      %p417 = scmp.ne.s32.totalorder %s409, %s412
      %p418 = scmp.eq.s32.totalorder %s37, 0
      %p419 = por %p417, %p418
      %p420 = scmp.ne.s32.totalorder %s409, %s412
      %p421 = scmp.eq.s32.totalorder %s42, 1
      %p422 = por %p420, %p421
      %p423 = scmp.ne.s32.totalorder %s412, %s413
      %p424 = scmp.eq.s32.totalorder %s42, 0
      %p425 = por %p423, %p424
      %p426 = scmp.ne.s32.totalorder %s412, %s413
      %p427 = scmp.eq.s32.totalorder %s43, 1
      %p428 = por %p426, %p427
      %p430 = scmp.ne.s32.totalorder %s413, %s429
      %p431 = scmp.eq.s32.totalorder %s43, 0
      %p432 = por %p430, %p431
      %p433 = scmp.le.s32.totalorder 1, %s37
      %p434 = scmp.lt.s32.totalorder %s37, 3
      %p435 = pnand %p433, %p434
      %p436 = pneg %p435
      // Predicated region
      $region9: #{bottleneck_se_forward.1} parent=5 // pred_check
        _
      $region10: #{bottleneck_se_forward.1} parent=5 // pred_check_branch
        %438 = sbr.rel (%p435) target = $region12
      $region11: #{bottleneck_se_forward.1} parent=5 // pred_region
        %s439 = ssub.s32 %s37, 1
        // Predicated region
        $region13: #{bottleneck_se_forward.1} parent=11 // pred_check
          %p440 = pneg %p84
        $region14: #{bottleneck_se_forward.1} parent=11 // pred_check_branch
          %442 = sbr.rel (%p440) target = $region16
        $region15: #{bottleneck_se_forward.1} parent=11 // pred_region
          %s444 = ssub.s32 32, 32
          %445 = vsyncadd [#allocation7], %s444
          %s447 = sshll.u32 [#allocation6], 4
          %s448 = int_to_ptr.vmem [resolvable:$true] %s447
          %450 = dma.hbm_to_vmem [thread:$0]  %s1, 32, %s448, [#allocation7]
        $region16: #{bottleneck_se_forward.1} parent=11 // pred_fallthru
          _
        // Predicated region
        $region17: #{bottleneck_se_forward.1} parent=11 // pred_check
          %p451 = pneg %p105
        $region18: #{bottleneck_se_forward.1} parent=11 // pred_check_branch
          %453 = sbr.rel (%p451) target = $region20
        $region19: #{bottleneck_se_forward.1} parent=11 // pred_region
          %s455 = ssub.s32 16, 16
          %456 = vsyncadd [#allocation7], %s455
          %s458 = sshll.u32 [#allocation8], 4
          %s459 = int_to_ptr.vmem [resolvable:$true] %s458
          %461 = dma.hbm_to_vmem [thread:$0]  %s2, 16, %s459, [#allocation7]
        $region20: #{bottleneck_se_forward.1} parent=11 // pred_fallthru
          _
        // Predicated region
        $region21: #{bottleneck_se_forward.1} parent=11 // pred_check
          %p462 = pneg %p126
        $region22: #{bottleneck_se_forward.1} parent=11 // pred_check_branch
          %464 = sbr.rel (%p462) target = $region24
        $region23: #{bottleneck_se_forward.1} parent=11 // pred_region
          %s466 = ssub.s32 16, 16
          %467 = vsyncadd [#allocation10], %s466
          %s469 = sshll.u32 [#allocation9], 4
          %s470 = int_to_ptr.vmem [resolvable:$true] %s469
          %472 = dma.hbm_to_vmem [thread:$0]  %s3, 16, %s470, [#allocation10]
        $region24: #{bottleneck_se_forward.1} parent=11 // pred_fallthru
          _
        // Predicated region
        $region25: #{bottleneck_se_forward.1} parent=11 // pred_check
          %p473 = pneg %p147
        $region26: #{bottleneck_se_forward.1} parent=11 // pred_check_branch
          %475 = sbr.rel (%p473) target = $region28
        $region27: #{bottleneck_se_forward.1} parent=11 // pred_region
          %s477 = ssub.s32 576, 576
          %478 = vsyncadd [#allocation10], %s477
          %s479 = sshll.u32 [#allocation11], 4
          %s480 = int_to_ptr.vmem [resolvable:$true] %s479
          %485 = dma.hbm_to_vmem [thread:$0]  %s4, 576, %s480, [#allocation10], 64, 64, 4
        $region28: #{bottleneck_se_forward.1} parent=11 // pred_fallthru
          _
        // Predicated region
        $region29: #{bottleneck_se_forward.1} parent=11 // pred_check
          %p486 = pneg %p168
        $region30: #{bottleneck_se_forward.1} parent=11 // pred_check_branch
          %488 = sbr.rel (%p486) target = $region32
        $region31: #{bottleneck_se_forward.1} parent=11 // pred_region
          %s490 = ssub.s32 16, 16
          %491 = vsyncadd [#allocation13], %s490
          %s493 = sshll.u32 [#allocation12], 4
          %s494 = int_to_ptr.vmem [resolvable:$true] %s493
          %496 = dma.hbm_to_vmem [thread:$0]  %s5, 16, %s494, [#allocation13]
        $region32: #{bottleneck_se_forward.1} parent=11 // pred_fallthru
          _
        // Predicated region
        $region33: #{bottleneck_se_forward.1} parent=11 // pred_check
          %p497 = pneg %p189
        $region34: #{bottleneck_se_forward.1} parent=11 // pred_check_branch
          %499 = sbr.rel (%p497) target = $region36
        $region35: #{bottleneck_se_forward.1} parent=11 // pred_region
          %s501 = ssub.s32 16, 16
          %502 = vsyncadd [#allocation13], %s501
          %s504 = sshll.u32 [#allocation14], 4
          %s505 = int_to_ptr.vmem [resolvable:$true] %s504
          %507 = dma.hbm_to_vmem [thread:$0]  %s6, 16, %s505, [#allocation13]
        $region36: #{bottleneck_se_forward.1} parent=11 // pred_fallthru
          _
        // Predicated region
        $region37: #{bottleneck_se_forward.1} parent=11 // pred_check
          %p508 = pneg %p210
        $region38: #{bottleneck_se_forward.1} parent=11 // pred_check_branch
          %510 = sbr.rel (%p508) target = $region40
        $region39: #{bottleneck_se_forward.1} parent=11 // pred_region
          %s512 = ssub.s32 64, 64
          %513 = vsyncadd [#allocation16], %s512
          %s515 = sshll.u32 [#allocation15], 4
          %s516 = int_to_ptr.vmem [resolvable:$true] %s515
          %518 = dma.hbm_to_vmem [thread:$0]  %s7, 64, %s516, [#allocation16]
        $region40: #{bottleneck_se_forward.1} parent=11 // pred_fallthru
          _
        // Predicated region
        $region41: #{bottleneck_se_forward.1} parent=11 // pred_check
          %p519 = pneg %p231
        $region42: #{bottleneck_se_forward.1} parent=11 // pred_check_branch
          %521 = sbr.rel (%p519) target = $region44
        $region43: #{bottleneck_se_forward.1} parent=11 // pred_region
          %s523 = ssub.s32 16, 16
          %524 = vsyncadd [#allocation16], %s523
          %s526 = sshll.u32 [#allocation17], 4
          %s527 = int_to_ptr.vmem [resolvable:$true] %s526
          %529 = dma.hbm_to_vmem [thread:$0]  %s8, 16, %s527, [#allocation16]
        $region44: #{bottleneck_se_forward.1} parent=11 // pred_fallthru
          _
        // Predicated region
        $region45: #{bottleneck_se_forward.1} parent=11 // pred_check
          %p530 = pneg %p252
        $region46: #{bottleneck_se_forward.1} parent=11 // pred_check_branch
          %532 = sbr.rel (%p530) target = $region48
        $region47: #{bottleneck_se_forward.1} parent=11 // pred_region
          %s534 = ssub.s32 16, 16
          %535 = vsyncadd [#allocation19], %s534
          %s537 = sshll.u32 [#allocation18], 4
          %s538 = int_to_ptr.vmem [resolvable:$true] %s537
          %540 = dma.hbm_to_vmem [thread:$0]  %s9, 16, %s538, [#allocation19]
        $region48: #{bottleneck_se_forward.1} parent=11 // pred_fallthru
          _
        // Predicated region
        $region49: #{bottleneck_se_forward.1} parent=11 // pred_check
          %p541 = pneg %p273
        $region50: #{bottleneck_se_forward.1} parent=11 // pred_check_branch
          %543 = sbr.rel (%p541) target = $region52
        $region51: #{bottleneck_se_forward.1} parent=11 // pred_region
          %s545 = ssub.s32 64, 64
          %546 = vsyncadd [#allocation19], %s545
          %s548 = sshll.u32 [#allocation20], 4
          %s549 = int_to_ptr.vmem [resolvable:$true] %s548
          %551 = dma.hbm_to_vmem [thread:$0]  %s10, 64, %s549, [#allocation19]
        $region52: #{bottleneck_se_forward.1} parent=11 // pred_fallthru
          _
        // Predicated region
        $region53: #{bottleneck_se_forward.1} parent=11 // pred_check
          %p552 = pneg %p294
        $region54: #{bottleneck_se_forward.1} parent=11 // pred_check_branch
          %554 = sbr.rel (%p552) target = $region56
        $region55: #{bottleneck_se_forward.1} parent=11 // pred_region
          %s556 = ssub.s32 16, 16
          %557 = vsyncadd [#allocation22], %s556
          %s559 = sshll.u32 [#allocation21], 4
          %s560 = int_to_ptr.vmem [resolvable:$true] %s559
          %562 = dma.hbm_to_vmem [thread:$0]  %s11, 16, %s560, [#allocation22]
        $region56: #{bottleneck_se_forward.1} parent=11 // pred_fallthru
          _
        // Predicated region
        $region57: #{bottleneck_se_forward.1} parent=11 // pred_check
          %p563 = pneg %p315
        $region58: #{bottleneck_se_forward.1} parent=11 // pred_check_branch
          %565 = sbr.rel (%p563) target = $region60
        $region59: #{bottleneck_se_forward.1} parent=11 // pred_region
          %s567 = ssub.s32 16, 16
          %568 = vsyncadd [#allocation22], %s567
          %s570 = sshll.u32 [#allocation23], 4
          %s571 = int_to_ptr.vmem [resolvable:$true] %s570
          %573 = dma.hbm_to_vmem [thread:$0]  %s12, 16, %s571, [#allocation22]
        $region60: #{bottleneck_se_forward.1} parent=11 // pred_fallthru
          _
        // Predicated region
        $region61: #{bottleneck_se_forward.1} parent=11 // pred_check
          %p574 = pneg %p336
        $region62: #{bottleneck_se_forward.1} parent=11 // pred_check_branch
          %576 = sbr.rel (%p574) target = $region64
        $region63: #{bottleneck_se_forward.1} parent=11 // pred_region
          %s578 = ssub.s32 512, 512
          %579 = vsyncadd [#allocation25], %s578
          %s580 = sshll.u32 [#allocation24], 4
          %s581 = int_to_ptr.vmem [resolvable:$true] %s580
          %586 = dma.hbm_to_vmem [thread:$0]  %s13, 512, %s581, [#allocation25], 128, 128, 8
        $region64: #{bottleneck_se_forward.1} parent=11 // pred_fallthru
          _
        // Predicated region
        $region65: #{bottleneck_se_forward.1} parent=11 // pred_check
          %p587 = pneg %p357
        $region66: #{bottleneck_se_forward.1} parent=11 // pred_check_branch
          %589 = sbr.rel (%p587) target = $region68
        $region67: #{bottleneck_se_forward.1} parent=11 // pred_region
          %s591 = ssub.s32 16, 16
          %592 = vsyncadd [#allocation25], %s591
          %s594 = sshll.u32 [#allocation26], 4
          %s595 = int_to_ptr.vmem [resolvable:$true] %s594
          %597 = dma.hbm_to_vmem [thread:$0]  %s14, 16, %s595, [#allocation25]
        $region68: #{bottleneck_se_forward.1} parent=11 // pred_fallthru
          _
        // Predicated region
        $region69: #{bottleneck_se_forward.1} parent=11 // pred_check
          %p598 = pneg %p378
        $region70: #{bottleneck_se_forward.1} parent=11 // pred_check_branch
          %600 = sbr.rel (%p598) target = $region72
        $region71: #{bottleneck_se_forward.1} parent=11 // pred_region
          %s602 = ssub.s32 32, 32
          %603 = vsyncadd [#allocation28], %s602
          %s605 = sshll.u32 [#allocation27], 4
          %s606 = int_to_ptr.vmem [resolvable:$true] %s605
          %608 = dma.hbm_to_vmem [thread:$0]  %s15, 32, %s606, [#allocation28]
        $region72: #{bottleneck_se_forward.1} parent=11 // pred_fallthru
          _
        // Predicated region
        $region73: #{bottleneck_se_forward.1} parent=11 // pred_check
          %p609 = pneg %p399
        $region74: #{bottleneck_se_forward.1} parent=11 // pred_check_branch
          %611 = sbr.rel (%p609) target = $region76
        $region75: #{bottleneck_se_forward.1} parent=11 // pred_region
          %s613 = ssub.s32 16, 16
          %614 = vsyncadd [#allocation28], %s613
          %s616 = sshll.u32 [#allocation29], 4
          %s617 = int_to_ptr.vmem [resolvable:$true] %s616
          %619 = dma.hbm_to_vmem [thread:$0]  %s16, 16, %s617, [#allocation28]
        $region76: #{bottleneck_se_forward.1} parent=11 // pred_fallthru
          _
      $region12: #{bottleneck_se_forward.1} parent=5 // pred_fallthru
        _
      %p620 = scmp.lt.s32.totalorder %s37, 2
      // Predicated region
      $region77: #{bottleneck_se_forward.1} parent=5 // pred_check
        %p621 = pneg %p620
      $region78: #{bottleneck_se_forward.1} parent=5 // pred_check_branch
        %623 = sbr.rel (%p621) target = $region80
      $region79: #{bottleneck_se_forward.1} parent=5 // pred_region
        // Predicated region
        $region81: #{bottleneck_se_forward.1} parent=79 // pred_check
          %p624 = pneg %p57
        $region82: #{bottleneck_se_forward.1} parent=79 // pred_check_branch
          %626 = sbr.rel (%p624) target = $region84
        $region83: #{bottleneck_se_forward.1} parent=79 // pred_region
          %s627 = sand.u32 %s47, 1
          %s628 = scalar_lea.sflag [#allocation4], %s627
          %s629 = sand.u32 %s47, 1
          %s630 = smul.addr %s629, 288
          %s631 = scalar_lea.vmem [#allocation3], %s630
          %s633 = ssub.s32 4608, 4608
          %634 = vsyncadd %s628, %s633
          %s635 = smul.addr %s37, 72
          %s636 = smul.addr %s635, 64
          %s637 = scalar_lea.hbm %s0, %s636
          %s638 = sshll.u32 %s631, 4
          %s639 = int_to_ptr.vmem [resolvable:$true] %s638
          %644 = dma.hbm_to_vmem [thread:$0]  %s637, 4608, %s639, %s628, 64, 64, 4
        $region84: #{bottleneck_se_forward.1} parent=79 // pred_fallthru
          _
      $region80: #{bottleneck_se_forward.1} parent=5 // pred_fallthru
        _
      %p645 = scmp.le.s32.totalorder 1, %s37
      %p646 = scmp.lt.s32.totalorder %s37, 3
      %p647 = pnand %p645, %p646
      %p648 = pneg %p647
      // Predicated region
      $region85: #{bottleneck_se_forward.1} parent=5 // pred_check
        _
      $region86: #{bottleneck_se_forward.1} parent=5 // pred_check_branch
        %650 = sbr.rel (%p647) target = $region88
      $region87: #{bottleneck_se_forward.1} parent=5 // pred_region
        %s651 = ssub.s32 %s37, 1
        %s652 = sand.u32 %s50, 1
        %s653 = scalar_lea.sflag [#allocation4], %s652
        %s654 = sand.u32 %s50, 1
        %s655 = smul.addr %s654, 288
        %s656 = scalar_lea.vmem [#allocation3], %s655
        // Predicated region
        $region89: #{bottleneck_se_forward.1} parent=87 // pred_check
          %p657 = pneg %p63
        $region90: #{bottleneck_se_forward.1} parent=87 // pred_check_branch
          %659 = sbr.rel (%p657) target = $region92
        $region91: #{bottleneck_se_forward.1} parent=87 // pred_region
          %660 = dma.done %s653, 4608
        $region92: #{bottleneck_se_forward.1} parent=87 // pred_fallthru
          _
        // Predicated region
        $region93: #{bottleneck_se_forward.1} parent=87 // pred_check
          %p661 = pneg %p84
        $region94: #{bottleneck_se_forward.1} parent=87 // pred_check_branch
          %663 = sbr.rel (%p661) target = $region96
        $region95: #{bottleneck_se_forward.1} parent=87 // pred_region
          %664 = dma.done [#allocation7], 32
        $region96: #{bottleneck_se_forward.1} parent=87 // pred_fallthru
          _
        // Predicated region
        $region97: #{bottleneck_se_forward.1} parent=87 // pred_check
          %p665 = pneg %p105
        $region98: #{bottleneck_se_forward.1} parent=87 // pred_check_branch
          %667 = sbr.rel (%p665) target = $region100
        $region99: #{bottleneck_se_forward.1} parent=87 // pred_region
          %668 = dma.done [#allocation7], 16
        $region100: #{bottleneck_se_forward.1} parent=87 // pred_fallthru
          _
        // Predicated region
        $region101: #{bottleneck_se_forward.1} parent=87 // pred_check
          %p669 = pneg %p126
        $region102: #{bottleneck_se_forward.1} parent=87 // pred_check_branch
          %671 = sbr.rel (%p669) target = $region104
        $region103: #{bottleneck_se_forward.1} parent=87 // pred_region
          %672 = dma.done [#allocation10], 16
        $region104: #{bottleneck_se_forward.1} parent=87 // pred_fallthru
          _
        // Predicated region
        $region105: #{bottleneck_se_forward.1} parent=87 // pred_check
          %p673 = pneg %p147
        $region106: #{bottleneck_se_forward.1} parent=87 // pred_check_branch
          %675 = sbr.rel (%p673) target = $region108
        $region107: #{bottleneck_se_forward.1} parent=87 // pred_region
          %676 = dma.done [#allocation10], 576
        $region108: #{bottleneck_se_forward.1} parent=87 // pred_fallthru
          _
        // Predicated region
        $region109: #{bottleneck_se_forward.1} parent=87 // pred_check
          %p677 = pneg %p168
        $region110: #{bottleneck_se_forward.1} parent=87 // pred_check_branch
          %679 = sbr.rel (%p677) target = $region112
        $region111: #{bottleneck_se_forward.1} parent=87 // pred_region
          %680 = dma.done [#allocation13], 16
        $region112: #{bottleneck_se_forward.1} parent=87 // pred_fallthru
          _
        // Predicated region
        $region113: #{bottleneck_se_forward.1} parent=87 // pred_check
          %p681 = pneg %p189
        $region114: #{bottleneck_se_forward.1} parent=87 // pred_check_branch
          %683 = sbr.rel (%p681) target = $region116
        $region115: #{bottleneck_se_forward.1} parent=87 // pred_region
          %684 = dma.done [#allocation13], 16
        $region116: #{bottleneck_se_forward.1} parent=87 // pred_fallthru
          _
        // Predicated region
        $region117: #{bottleneck_se_forward.1} parent=87 // pred_check
          %p685 = pneg %p210
        $region118: #{bottleneck_se_forward.1} parent=87 // pred_check_branch
          %687 = sbr.rel (%p685) target = $region120
        $region119: #{bottleneck_se_forward.1} parent=87 // pred_region
          %688 = dma.done [#allocation16], 64
        $region120: #{bottleneck_se_forward.1} parent=87 // pred_fallthru
          _
        // Predicated region
        $region121: #{bottleneck_se_forward.1} parent=87 // pred_check
          %p689 = pneg %p231
        $region122: #{bottleneck_se_forward.1} parent=87 // pred_check_branch
          %691 = sbr.rel (%p689) target = $region124
        $region123: #{bottleneck_se_forward.1} parent=87 // pred_region
          %692 = dma.done [#allocation16], 16
        $region124: #{bottleneck_se_forward.1} parent=87 // pred_fallthru
          _
        // Predicated region
        $region125: #{bottleneck_se_forward.1} parent=87 // pred_check
          %p693 = pneg %p252
        $region126: #{bottleneck_se_forward.1} parent=87 // pred_check_branch
          %695 = sbr.rel (%p693) target = $region128
        $region127: #{bottleneck_se_forward.1} parent=87 // pred_region
          %696 = dma.done [#allocation19], 16
        $region128: #{bottleneck_se_forward.1} parent=87 // pred_fallthru
          _
        // Predicated region
        $region129: #{bottleneck_se_forward.1} parent=87 // pred_check
          %p697 = pneg %p273
        $region130: #{bottleneck_se_forward.1} parent=87 // pred_check_branch
          %699 = sbr.rel (%p697) target = $region132
        $region131: #{bottleneck_se_forward.1} parent=87 // pred_region
          %700 = dma.done [#allocation19], 64
        $region132: #{bottleneck_se_forward.1} parent=87 // pred_fallthru
          _
        // Predicated region
        $region133: #{bottleneck_se_forward.1} parent=87 // pred_check
          %p701 = pneg %p294
        $region134: #{bottleneck_se_forward.1} parent=87 // pred_check_branch
          %703 = sbr.rel (%p701) target = $region136
        $region135: #{bottleneck_se_forward.1} parent=87 // pred_region
          %704 = dma.done [#allocation22], 16
        $region136: #{bottleneck_se_forward.1} parent=87 // pred_fallthru
          _
        // Predicated region
        $region137: #{bottleneck_se_forward.1} parent=87 // pred_check
          %p705 = pneg %p315
        $region138: #{bottleneck_se_forward.1} parent=87 // pred_check_branch
          %707 = sbr.rel (%p705) target = $region140
        $region139: #{bottleneck_se_forward.1} parent=87 // pred_region
          %708 = dma.done [#allocation22], 16
        $region140: #{bottleneck_se_forward.1} parent=87 // pred_fallthru
          _
        // Predicated region
        $region141: #{bottleneck_se_forward.1} parent=87 // pred_check
          %p709 = pneg %p336
        $region142: #{bottleneck_se_forward.1} parent=87 // pred_check_branch
          %711 = sbr.rel (%p709) target = $region144
        $region143: #{bottleneck_se_forward.1} parent=87 // pred_region
          %712 = dma.done [#allocation25], 512
        $region144: #{bottleneck_se_forward.1} parent=87 // pred_fallthru
          _
        // Predicated region
        $region145: #{bottleneck_se_forward.1} parent=87 // pred_check
          %p713 = pneg %p357
        $region146: #{bottleneck_se_forward.1} parent=87 // pred_check_branch
          %715 = sbr.rel (%p713) target = $region148
        $region147: #{bottleneck_se_forward.1} parent=87 // pred_region
          %716 = dma.done [#allocation25], 16
        $region148: #{bottleneck_se_forward.1} parent=87 // pred_fallthru
          _
        // Predicated region
        $region149: #{bottleneck_se_forward.1} parent=87 // pred_check
          %p717 = pneg %p378
        $region150: #{bottleneck_se_forward.1} parent=87 // pred_check_branch
          %719 = sbr.rel (%p717) target = $region152
        $region151: #{bottleneck_se_forward.1} parent=87 // pred_region
          %720 = dma.done [#allocation28], 32
        $region152: #{bottleneck_se_forward.1} parent=87 // pred_fallthru
          _
        // Predicated region
        $region153: #{bottleneck_se_forward.1} parent=87 // pred_check
          %p721 = pneg %p399
        $region154: #{bottleneck_se_forward.1} parent=87 // pred_check_branch
          %723 = sbr.rel (%p721) target = $region156
        $region155: #{bottleneck_se_forward.1} parent=87 // pred_region
          %724 = dma.done [#allocation28], 16
        $region156: #{bottleneck_se_forward.1} parent=87 // pred_fallthru
          _
        %s725 = sand.u32 %s50, 1
        %s726 = scalar_lea.sflag [#allocation4], %s725
        %s727 = sand.u32 %s50, 1
        %s728 = smul.addr %s727, 288
        %s729 = scalar_lea.vmem [#allocation3], %s728
        %p730 = pneg %p63
        %p731 = pneg %p60
        %p732 = pneg %p84
        %p733 = pneg %p81
        %p734 = pneg %p105
        %p735 = pneg %p102
        %p736 = pneg %p126
        %p737 = pneg %p123
        %p738 = pneg %p147
        %p739 = pneg %p144
        %p740 = pneg %p168
        %p741 = pneg %p165
        %p742 = pneg %p189
        %p743 = pneg %p186
        %p744 = pneg %p210
        %p745 = pneg %p207
        %p746 = pneg %p231
        %p747 = pneg %p228
        %p748 = pneg %p252
        %p749 = pneg %p249
        %p750 = pneg %p273
        %p751 = pneg %p270
        %p752 = pneg %p294
        %p753 = pneg %p291
        %p754 = pneg %p315
        %p755 = pneg %p312
        %p756 = pneg %p336
        %p757 = pneg %p333
        %p758 = pneg %p357
        %p759 = pneg %p354
        %p760 = pneg %p378
        %p761 = pneg %p375
        %p762 = pneg %p399
        %p763 = pneg %p396
        %p764 = pneg %p425
        %p765 = pneg %p422
        %s766 = sand.u32 %s412, 1
        %s767 = scalar_lea.sflag [#allocation5], %s766
        %s768 = sand.u32 %s412, 1
        %s769 = smul.addr %s768, 32
        %s770 = scalar_lea.vmem [#allocation30], %s769
        %v772 = vld [vmem:[%s656] sm:$0xf]
        %v773 = vld [vmem:[%s656 + $0x4] sm:$0xf]
        %v774 = vld [vmem:[%s656 + $0x8] sm:$0xf]
        %v775 = vld [vmem:[%s656 + $0xc] sm:$0xf]
        %v776 = vld [vmem:[%s656 + $0x10] sm:$0xf]
        %v777 = vld [vmem:[%s656 + $0x14] sm:$0xf]
        %v778 = vld [vmem:[%s656 + $0x18] sm:$0xf]
        %v779 = vld [vmem:[%s656 + $0x1c] sm:$0xf]
        %v780 = vld [vmem:[%s656 + $0x20] sm:$0xf]
        %v781 = vld [vmem:[%s656 + $0x24] sm:$0xf]
        %v782 = vld [vmem:[%s656 + $0x28] sm:$0xf]
        %v783 = vld [vmem:[%s656 + $0x2c] sm:$0xf]
        %v784 = vld [vmem:[%s656 + $0x30] sm:$0xf]
        %v785 = vld [vmem:[%s656 + $0x34] sm:$0xf]
        %v786 = vld [vmem:[%s656 + $0x38] sm:$0xf]
        %v787 = vld [vmem:[%s656 + $0x3c] sm:$0xf]
        %v788 = vld [vmem:[%s656 + $0x40] sm:$0xf]
        %v789 = vld [vmem:[%s656 + $0x44] sm:$0xf]
        %v790 = vunpack.c.l.bf16 %v772
        %v791 = vunpack.c.l.bf16 %v773
        %v792 = vunpack.c.l.bf16 %v774
        %v793 = vunpack.c.l.bf16 %v775
        %v794 = vunpack.c.l.bf16 %v776
        %v795 = vunpack.c.l.bf16 %v777
        %v796 = vunpack.c.l.bf16 %v778
        %v797 = vunpack.c.l.bf16 %v779
        %v798 = vunpack.c.l.bf16 %v780
        %v799 = vunpack.c.l.bf16 %v781
        %v800 = vunpack.c.l.bf16 %v782
        %v801 = vunpack.c.l.bf16 %v783
        %v802 = vunpack.c.l.bf16 %v784
        %v803 = vunpack.c.l.bf16 %v785
        %v804 = vunpack.c.l.bf16 %v786
        %v805 = vunpack.c.l.bf16 %v787
        %v806 = vunpack.c.l.bf16 %v788
        %v807 = vunpack.c.l.bf16 %v789
        %v808 = vpack.c.bf16 %v791, %v790
        %v809 = vpack.c.bf16 %v793, %v792
        %v810 = vpack.c.bf16 %v795, %v794
        %v811 = vpack.c.bf16 %v797, %v796
        %v812 = vpack.c.bf16 %v799, %v798
        %v813 = vpack.c.bf16 %v801, %v800
        %v814 = vpack.c.bf16 %v803, %v802
        %v815 = vpack.c.bf16 %v805, %v804
        %v816 = vpack.c.bf16 %v807, %v806
        %v817 = vld [vmem:[#allocation6] sm:$0x3]
        %vm818 = vcmask 31744
        %v820 = vsel %vm818, %v808, 0
        %v823 = vsel %vm818, %v809, 0
        %v826 = vsel %vm818, %v810, 0
        %v829 = vsel %vm818, %v811, 0
        %v832 = vsel %vm818, %v812, 0
        %v835 = vsel %vm818, %v813, 0
        %v838 = vsel %vm818, %v814, 0
        %v841 = vsel %vm818, %v815, 0
        %v844 = vsel %vm818, %v816, 0
        %vm846 = vcmask 1041408
        %v848 = vsel %vm846, %v817, 0
        %850 = vmatprep.subr.bf16.mxu0 0
        %851 = vmatpush1.bf16.msra.mxu0 %v848
        %852 = vmatprep.subr.bf16.mxu0 0
        %853 = vmatpush1.bf16.msra.mxu0 0
        %854 = vmatprep.subr.bf16.mxu0 0
        %855 = vmatpush1.bf16.msra.mxu0 0
        %856 = vmatprep.subr.bf16.mxu0 0
        %857 = vmatpush1.bf16.msra.mxu0 0
        %858 = vmatprep.subr.bf16.mxu0 0
        %859 = vmatpush1.bf16.msra.mxu0 0
        %860 = vmatprep.subr.bf16.mxu0 0
        %861 = vmatpush1.bf16.msra.mxu0 0
        %862 = vmatprep.subr.bf16.mxu0 0
        %863 = vmatpush1.bf16.msra.mxu0 0
        %864 = vmatprep.subr.bf16.mxu0 0
        %865 = vmatpush1.bf16.msra.mxu0 0
        %866 = vmatprep.subr.bf16.mxu0 0
        %867 = vmatpush1.bf16.msra.mxu0 0
        %868 = vmatprep.subr.bf16.mxu0 0
        %869 = vmatpush1.bf16.msra.mxu0 0
        %870 = vmatprep.subr.bf16.mxu0 0
        %871 = vmatpush1.bf16.msra.mxu0 0
        %872 = vmatprep.subr.bf16.mxu0 0
        %873 = vmatpush1.bf16.msra.mxu0 0
        %874 = vmatprep.subr.bf16.mxu0 0
        %875 = vmatpush1.bf16.msra.mxu0 0
        %876 = vmatprep.subr.bf16.mxu0 0
        %877 = vmatpush1.bf16.msra.mxu0 0
        %878 = vmatprep.subr.bf16.mxu0 0
        %879 = vmatpush1.bf16.msra.mxu0 0
        %880 = vmatprep.subr.bf16.mxu0 0
        %881 = vmatpush1.bf16.msra.mxu0 0
        %882 = vmatprep.mubr.bf16.mxu0 0
        %883 = vmatmul.mubr.bf16.gmra.mrb[0].mxu0 %v820
        %v884 = vpop.f32.mrb[0].mxu0
        %v885 = vadd.f32 0.0, %v884
        %v886 = vpop.f32.mrb[0].mxu0
        %v887 = vpop.f32.mrb[0].mxu0
        %v888 = vadd.f32 0.0, %v887
        %v889 = vpop.f32.mrb[0].mxu0
        %890 = vmatprep.mubr.bf16.mxu0 0
        %891 = vmatmul.mubr.bf16.gmra.mrb[0].mxu0 %v823
        %v892 = vpop.f32.mrb[0].mxu0
        %v893 = vadd.f32 0.0, %v892
        %v894 = vpop.f32.mrb[0].mxu0
        %v895 = vpop.f32.mrb[0].mxu0
        %v896 = vadd.f32 0.0, %v895
        %v897 = vpop.f32.mrb[0].mxu0
        %898 = vmatprep.mubr.bf16.mxu0 0
        %899 = vmatmul.mubr.bf16.gmra.mrb[0].mxu0 %v826
        %v900 = vpop.f32.mrb[0].mxu0
        %v901 = vadd.f32 0.0, %v900
        %v902 = vpop.f32.mrb[0].mxu0
        %v903 = vpop.f32.mrb[0].mxu0
        %v904 = vadd.f32 0.0, %v903
        %v905 = vpop.f32.mrb[0].mxu0
        %906 = vmatprep.mubr.bf16.mxu0 0
        %907 = vmatmul.mubr.bf16.gmra.mrb[0].mxu0 %v829
        %v908 = vpop.f32.mrb[0].mxu0
        %v909 = vadd.f32 0.0, %v908
        %v910 = vpop.f32.mrb[0].mxu0
        %v911 = vpop.f32.mrb[0].mxu0
        %v912 = vadd.f32 0.0, %v911
        %v913 = vpop.f32.mrb[0].mxu0
        %914 = vmatprep.mubr.bf16.mxu0 0
        %915 = vmatmul.mubr.bf16.gmra.mrb[0].mxu0 %v832
        %v916 = vpop.f32.mrb[0].mxu0
        %v917 = vadd.f32 0.0, %v916
        %v918 = vpop.f32.mrb[0].mxu0
        %v919 = vpop.f32.mrb[0].mxu0
        %v920 = vadd.f32 0.0, %v919
        %v921 = vpop.f32.mrb[0].mxu0
        %922 = vmatprep.mubr.bf16.mxu0 0
        %923 = vmatmul.mubr.bf16.gmra.mrb[0].mxu0 %v835
        %v924 = vpop.f32.mrb[0].mxu0
        %v925 = vadd.f32 0.0, %v924
        %v926 = vpop.f32.mrb[0].mxu0
        %v927 = vpop.f32.mrb[0].mxu0
        %v928 = vadd.f32 0.0, %v927
        %v929 = vpop.f32.mrb[0].mxu0
        %930 = vmatprep.mubr.bf16.mxu0 0
        %931 = vmatmul.mubr.bf16.gmra.mrb[0].mxu0 %v838
        %v932 = vpop.f32.mrb[0].mxu0
        %v933 = vadd.f32 0.0, %v932
        %v934 = vpop.f32.mrb[0].mxu0
        %v935 = vpop.f32.mrb[0].mxu0
        %v936 = vadd.f32 0.0, %v935
        %v937 = vpop.f32.mrb[0].mxu0
        %938 = vmatprep.mubr.bf16.mxu0 0
        %939 = vmatmul.mubr.bf16.gmra.mrb[0].mxu0 %v841
        %v940 = vpop.f32.mrb[0].mxu0
        %v941 = vadd.f32 0.0, %v940
        %v942 = vpop.f32.mrb[0].mxu0
        %v943 = vpop.f32.mrb[0].mxu0
        %v944 = vadd.f32 0.0, %v943
        %v945 = vpop.f32.mrb[0].mxu0
        %946 = vmatprep.mubr.bf16.mxu0 0
        %947 = vmatmul.mubr.bf16.gmra.mrb[0].mxu0 %v844
        %v948 = vpop.f32.mrb[0].mxu0
        %v949 = vadd.f32 0.0, %v948
        %v950 = vpop.f32.mrb[0].mxu0
        %v951 = vpop.f32.mrb[0].mxu0
        %v952 = vadd.f32 0.0, %v951
        %v953 = vpop.f32.mrb[0].mxu0
        %954 = vdwg.mxu0
        %v955 = vld [vmem:[#allocation8] sm:$0x1]
        %v957 = vlaneseq
        %v958 = vshrl.u32 %v957, 7
        %v959 = vsub.s32 0, %v958
        %v960 = vrot.slane %v955, %v959
        %v962 = vmul.f32 %v885, %v960
        %v963 = vmul.f32 %v888, %v960
        %v964 = vmul.f32 %v893, %v960
        %v965 = vmul.f32 %v896, %v960
        %v966 = vmul.f32 %v901, %v960
        %v967 = vmul.f32 %v904, %v960
        %v968 = vmul.f32 %v909, %v960
        %v969 = vmul.f32 %v912, %v960
        %v970 = vmul.f32 %v917, %v960
        %v971 = vmul.f32 %v920, %v960
        %v972 = vmul.f32 %v925, %v960
        %v973 = vmul.f32 %v928, %v960
        %v974 = vmul.f32 %v933, %v960
        %v975 = vmul.f32 %v936, %v960
        %v976 = vmul.f32 %v941, %v960
        %v977 = vmul.f32 %v944, %v960
        %v978 = vmul.f32 %v949, %v960
        %v979 = vmul.f32 %v952, %v960
        %v980 = vld [vmem:[#allocation9] sm:$0x1]
        %v982 = vlaneseq
        %v983 = vshrl.u32 %v982, 7
        %v984 = vsub.s32 0, %v983
        %v985 = vrot.slane %v980, %v984
        %v987 = vadd.f32 %v962, %v985
        %v988 = vadd.f32 %v963, %v985
        %v989 = vadd.f32 %v964, %v985
        %v990 = vadd.f32 %v965, %v985
        %v991 = vadd.f32 %v966, %v985
        %v992 = vadd.f32 %v967, %v985
        %v993 = vadd.f32 %v968, %v985
        %v994 = vadd.f32 %v969, %v985
        %v995 = vadd.f32 %v970, %v985
        %v996 = vadd.f32 %v971, %v985
        %v997 = vadd.f32 %v972, %v985
        %v998 = vadd.f32 %v973, %v985
        %v999 = vadd.f32 %v974, %v985
        %v1000 = vadd.f32 %v975, %v985
        %v1001 = vadd.f32 %v976, %v985
        %v1002 = vadd.f32 %v977, %v985
        %v1003 = vadd.f32 %v978, %v985
        %v1004 = vadd.f32 %v979, %v985
        %v1005 = vmax.f32 %v987, 0.0
        %v1006 = vmax.f32 %v988, 0.0
        %v1007 = vmax.f32 %v989, 0.0
        %v1008 = vmax.f32 %v990, 0.0
        %v1009 = vmax.f32 %v991, 0.0
        %v1010 = vmax.f32 %v992, 0.0
        %v1011 = vmax.f32 %v993, 0.0
        %v1012 = vmax.f32 %v994, 0.0
        %v1013 = vmax.f32 %v995, 0.0
        %v1014 = vmax.f32 %v996, 0.0
        %v1015 = vmax.f32 %v997, 0.0
        %v1016 = vmax.f32 %v998, 0.0
        %v1017 = vmax.f32 %v999, 0.0
        %v1018 = vmax.f32 %v1000, 0.0
        %v1019 = vmax.f32 %v1001, 0.0
        %v1020 = vmax.f32 %v1002, 0.0
        %v1021 = vmax.f32 %v1003, 0.0
        %v1022 = vmax.f32 %v1004, 0.0
        %v1023 = vlaneseq
        %v1024 = vshrl.u32 %v1023, 7
        %v1025 = vadd.s32 %v1024, 8
        %v1026 = vmul.u32 %v1024, 2
        %v1027 = vmul.u32 %v1025, 2
        %vm1028 = vcmp.ge.s32.totalorder %v1026, 1
        %vm1029 = vcmp.ge.s32.totalorder %v1027, 1
        %vm1030 = vmand 0, %vm1028
        %vm1031 = vmand 0, %vm1029
        %vm1032 = vmand 1, %vm1028
        %vm1033 = vmand 1, %vm1029
        %vm1034 = vcmp.le.s32.totalorder %v1026, 16
        %vm1035 = vcmp.le.s32.totalorder %v1027, 16
        %vm1036 = vmand %vm1030, %vm1034
        %vm1037 = vmand %vm1031, %vm1035
        %vm1038 = vmand %vm1032, %vm1034
        %vm1039 = vmand %vm1033, %vm1035
        %v1040 = vsel %vm1036, %v1005, 0.0
        %v1041 = vsel %vm1037, %v1006, 0.0
        %v1042 = vsel %vm1038, %v1007, 0.0
        %v1043 = vsel %vm1039, %v1008, 0.0
        %v1044 = vsel %vm1038, %v1009, 0.0
        %v1045 = vsel %vm1039, %v1010, 0.0
        %v1046 = vsel %vm1038, %v1011, 0.0
        %v1047 = vsel %vm1039, %v1012, 0.0
        %v1048 = vsel %vm1038, %v1013, 0.0
        %v1049 = vsel %vm1039, %v1014, 0.0
        %v1050 = vsel %vm1038, %v1015, 0.0
        %v1051 = vsel %vm1039, %v1016, 0.0
        %v1052 = vsel %vm1038, %v1017, 0.0
        %v1053 = vsel %vm1039, %v1018, 0.0
        %v1054 = vsel %vm1038, %v1019, 0.0
        %v1055 = vsel %vm1039, %v1020, 0.0
        %v1056 = vsel %vm1038, %v1021, 0.0
        %v1057 = vsel %vm1039, %v1022, 0.0
        %vm1058 = vcmask 64512
        %1059 = vst.msk [vmem:[#allocation2] sm:$0xff] %vm1058, %v1040
        %1060 = vst.msk [vmem:[#allocation2 + $0x8] sm:$0xff] %vm1058, %v1041
        %1061 = vst.msk [vmem:[#allocation2 + $0x10] sm:$0xff] %vm1058, %v1042
        %1062 = vst.msk [vmem:[#allocation2 + $0x18] sm:$0xff] %vm1058, %v1043
        %1063 = vst.msk [vmem:[#allocation2 + $0x20] sm:$0xff] %vm1058, %v1044
        %1064 = vst.msk [vmem:[#allocation2 + $0x28] sm:$0xff] %vm1058, %v1045
        %1065 = vst.msk [vmem:[#allocation2 + $0x30] sm:$0xff] %vm1058, %v1046
        %1066 = vst.msk [vmem:[#allocation2 + $0x38] sm:$0xff] %vm1058, %v1047
        %1067 = vst.msk [vmem:[#allocation2 + $0x40] sm:$0xff] %vm1058, %v1048
        %1068 = vst.msk [vmem:[#allocation2 + $0x48] sm:$0xff] %vm1058, %v1049
        %1069 = vst.msk [vmem:[#allocation2 + $0x50] sm:$0xff] %vm1058, %v1050
        %1070 = vst.msk [vmem:[#allocation2 + $0x58] sm:$0xff] %vm1058, %v1051
        %1071 = vst.msk [vmem:[#allocation2 + $0x60] sm:$0xff] %vm1058, %v1052
        %1072 = vst.msk [vmem:[#allocation2 + $0x68] sm:$0xff] %vm1058, %v1053
        %1073 = vst.msk [vmem:[#allocation2 + $0x70] sm:$0xff] %vm1058, %v1054
        %1074 = vst.msk [vmem:[#allocation2 + $0x78] sm:$0xff] %vm1058, %v1055
        %1075 = vst.msk [vmem:[#allocation2 + $0x80] sm:$0xff] %vm1058, %v1056
        %1076 = vst.msk [vmem:[#allocation2 + $0x88] sm:$0xff] %vm1058, %v1057
        %s1077 = scalar_lea.vmem %s656, 72 [#allocation3]
        %v1078 = vld [vmem:[%s1077] sm:$0xf]
        %v1079 = vld [vmem:[%s1077 + $0x4] sm:$0xf]
        %v1080 = vld [vmem:[%s1077 + $0x8] sm:$0xf]
        %v1081 = vld [vmem:[%s1077 + $0xc] sm:$0xf]
        %v1082 = vld [vmem:[%s1077 + $0x10] sm:$0xf]
        %v1083 = vld [vmem:[%s1077 + $0x14] sm:$0xf]
        %v1084 = vld [vmem:[%s1077 + $0x18] sm:$0xf]
        %v1085 = vld [vmem:[%s1077 + $0x1c] sm:$0xf]
        %v1086 = vld [vmem:[%s1077 + $0x20] sm:$0xf]
        %v1087 = vld [vmem:[%s1077 + $0x24] sm:$0xf]
        %v1088 = vld [vmem:[%s1077 + $0x28] sm:$0xf]
        %v1089 = vld [vmem:[%s1077 + $0x2c] sm:$0xf]
        %v1090 = vld [vmem:[%s1077 + $0x30] sm:$0xf]
        %v1091 = vld [vmem:[%s1077 + $0x34] sm:$0xf]
        %v1092 = vld [vmem:[%s1077 + $0x38] sm:$0xf]
        %v1093 = vld [vmem:[%s1077 + $0x3c] sm:$0xf]
        %v1094 = vld [vmem:[%s1077 + $0x40] sm:$0xf]
        %v1095 = vld [vmem:[%s1077 + $0x44] sm:$0xf]
        %v1096 = vunpack.c.l.bf16 %v1078
        %v1097 = vunpack.c.l.bf16 %v1079
        %v1098 = vunpack.c.l.bf16 %v1080
        %v1099 = vunpack.c.l.bf16 %v1081
        %v1100 = vunpack.c.l.bf16 %v1082
        %v1101 = vunpack.c.l.bf16 %v1083
        %v1102 = vunpack.c.l.bf16 %v1084
        %v1103 = vunpack.c.l.bf16 %v1085
        %v1104 = vunpack.c.l.bf16 %v1086
        %v1105 = vunpack.c.l.bf16 %v1087
        %v1106 = vunpack.c.l.bf16 %v1088
        %v1107 = vunpack.c.l.bf16 %v1089
        %v1108 = vunpack.c.l.bf16 %v1090
        %v1109 = vunpack.c.l.bf16 %v1091
        %v1110 = vunpack.c.l.bf16 %v1092
        %v1111 = vunpack.c.l.bf16 %v1093
        %v1112 = vunpack.c.l.bf16 %v1094
        %v1113 = vunpack.c.l.bf16 %v1095
        %v1114 = vpack.c.bf16 %v1097, %v1096
        %v1115 = vpack.c.bf16 %v1099, %v1098
        %v1116 = vpack.c.bf16 %v1101, %v1100
        %v1117 = vpack.c.bf16 %v1103, %v1102
        %v1118 = vpack.c.bf16 %v1105, %v1104
        %v1119 = vpack.c.bf16 %v1107, %v1106
        %v1120 = vpack.c.bf16 %v1109, %v1108
        %v1121 = vpack.c.bf16 %v1111, %v1110
        %v1122 = vpack.c.bf16 %v1113, %v1112
        %v1123 = vld [vmem:[#allocation6] sm:$0x3]
        %v1125 = vsel %vm818, %v1114, 0
        %v1128 = vsel %vm818, %v1115, 0
        %v1131 = vsel %vm818, %v1116, 0
        %v1134 = vsel %vm818, %v1117, 0
        %v1137 = vsel %vm818, %v1118, 0
        %v1140 = vsel %vm818, %v1119, 0
        %v1143 = vsel %vm818, %v1120, 0
        %v1146 = vsel %vm818, %v1121, 0
        %v1149 = vsel %vm818, %v1122, 0
        %v1152 = vsel %vm846, %v1123, 0
        %1154 = vmatprep.subr.bf16.mxu0 0
        %1155 = vmatpush1.bf16.msra.mxu0 %v1152
        %1156 = vmatprep.subr.bf16.mxu0 0
        %1157 = vmatpush1.bf16.msra.mxu0 0
        %1158 = vmatprep.subr.bf16.mxu0 0
        %1159 = vmatpush1.bf16.msra.mxu0 0
        %1160 = vmatprep.subr.bf16.mxu0 0
        %1161 = vmatpush1.bf16.msra.mxu0 0
        %1162 = vmatprep.subr.bf16.mxu0 0
        %1163 = vmatpush1.bf16.msra.mxu0 0
        %1164 = vmatprep.subr.bf16.mxu0 0
        %1165 = vmatpush1.bf16.msra.mxu0 0
        %1166 = vmatprep.subr.bf16.mxu0 0
        %1167 = vmatpush1.bf16.msra.mxu0 0
        %1168 = vmatprep.subr.bf16.mxu0 0
        %1169 = vmatpush1.bf16.msra.mxu0 0
        %1170 = vmatprep.subr.bf16.mxu0 0
        %1171 = vmatpush1.bf16.msra.mxu0 0
        %1172 = vmatprep.subr.bf16.mxu0 0
        %1173 = vmatpush1.bf16.msra.mxu0 0
        %1174 = vmatprep.subr.bf16.mxu0 0
        %1175 = vmatpush1.bf16.msra.mxu0 0
        %1176 = vmatprep.subr.bf16.mxu0 0
        %1177 = vmatpush1.bf16.msra.mxu0 0
        %1178 = vmatprep.subr.bf16.mxu0 0
        %1179 = vmatpush1.bf16.msra.mxu0 0
        %1180 = vmatprep.subr.bf16.mxu0 0
        %1181 = vmatpush1.bf16.msra.mxu0 0
        %1182 = vmatprep.subr.bf16.mxu0 0
        %1183 = vmatpush1.bf16.msra.mxu0 0
        %1184 = vmatprep.subr.bf16.mxu0 0
        %1185 = vmatpush1.bf16.msra.mxu0 0
        %1186 = vmatprep.mubr.bf16.mxu0 0
        %1187 = vmatmul.mubr.bf16.gmra.mrb[0].mxu0 %v1125
        %v1188 = vpop.f32.mrb[0].mxu0
        %v1189 = vadd.f32 0.0, %v1188
        %v1190 = vpop.f32.mrb[0].mxu0
        %v1191 = vpop.f32.mrb[0].mxu0
        %v1192 = vadd.f32 0.0, %v1191
        %v1193 = vpop.f32.mrb[0].mxu0
        %1194 = vmatprep.mubr.bf16.mxu0 0
        %1195 = vmatmul.mubr.bf16.gmra.mrb[0].mxu0 %v1128
        %v1196 = vpop.f32.mrb[0].mxu0
        %v1197 = vadd.f32 0.0, %v1196
        %v1198 = vpop.f32.mrb[0].mxu0
        %v1199 = vpop.f32.mrb[0].mxu0
        %v1200 = vadd.f32 0.0, %v1199
        %v1201 = vpop.f32.mrb[0].mxu0
        %1202 = vmatprep.mubr.bf16.mxu0 0
        %1203 = vmatmul.mubr.bf16.gmra.mrb[0].mxu0 %v1131
        %v1204 = vpop.f32.mrb[0].mxu0
        %v1205 = vadd.f32 0.0, %v1204
        %v1206 = vpop.f32.mrb[0].mxu0
        %v1207 = vpop.f32.mrb[0].mxu0
        %v1208 = vadd.f32 0.0, %v1207
        %v1209 = vpop.f32.mrb[0].mxu0
        %1210 = vmatprep.mubr.bf16.mxu0 0
        %1211 = vmatmul.mubr.bf16.gmra.mrb[0].mxu0 %v1134
        %v1212 = vpop.f32.mrb[0].mxu0
        %v1213 = vadd.f32 0.0, %v1212
        %v1214 = vpop.f32.mrb[0].mxu0
        %v1215 = vpop.f32.mrb[0].mxu0
        %v1216 = vadd.f32 0.0, %v1215
        %v1217 = vpop.f32.mrb[0].mxu0
        %1218 = vmatprep.mubr.bf16.mxu0 0
        %1219 = vmatmul.mubr.bf16.gmra.mrb[0].mxu0 %v1137
        %v1220 = vpop.f32.mrb[0].mxu0
        %v1221 = vadd.f32 0.0, %v1220
        %v1222 = vpop.f32.mrb[0].mxu0
        %v1223 = vpop.f32.mrb[0].mxu0
        %v1224 = vadd.f32 0.0, %v1223
        %v1225 = vpop.f32.mrb[0].mxu0
        %1226 = vmatprep.mubr.bf16.mxu0 0
        %1227 = vmatmul.mubr.bf16.gmra.mrb[0].mxu0 %v1140
        %v1228 = vpop.f32.mrb[0].mxu0
        %v1229 = vadd.f32 0.0, %v1228
        %v1230 = vpop.f32.mrb[0].mxu0
        %v1231 = vpop.f32.mrb[0].mxu0
        %v1232 = vadd.f32 0.0, %v1231
        %v1233 = vpop.f32.mrb[0].mxu0
        %1234 = vmatprep.mubr.bf16.mxu0 0
        %1235 = vmatmul.mubr.bf16.gmra.mrb[0].mxu0 %v1143
        %v1236 = vpop.f32.mrb[0].mxu0
        %v1237 = vadd.f32 0.0, %v1236
        %v1238 = vpop.f32.mrb[0].mxu0
        %v1239 = vpop.f32.mrb[0].mxu0
        %v1240 = vadd.f32 0.0, %v1239
        %v1241 = vpop.f32.mrb[0].mxu0
        %1242 = vmatprep.mubr.bf16.mxu0 0
        %1243 = vmatmul.mubr.bf16.gmra.mrb[0].mxu0 %v1146
        %v1244 = vpop.f32.mrb[0].mxu0
        %v1245 = vadd.f32 0.0, %v1244
        %v1246 = vpop.f32.mrb[0].mxu0
        %v1247 = vpop.f32.mrb[0].mxu0
        %v1248 = vadd.f32 0.0, %v1247
        %v1249 = vpop.f32.mrb[0].mxu0
        %1250 = vmatprep.mubr.bf16.mxu0 0
        %1251 = vmatmul.mubr.bf16.gmra.mrb[0].mxu0 %v1149
        %v1252 = vpop.f32.mrb[0].mxu0
        %v1253 = vadd.f32 0.0, %v1252
        %v1254 = vpop.f32.mrb[0].mxu0
        %v1255 = vpop.f32.mrb[0].mxu0
        %v1256 = vadd.f32 0.0, %v1255
        %v1257 = vpop.f32.mrb[0].mxu0
        %1258 = vdwg.mxu0
        %v1259 = vld [vmem:[#allocation8] sm:$0x1]
        %v1261 = vlaneseq
        %v1262 = vshrl.u32 %v1261, 7
        %v1263 = vsub.s32 0, %v1262
        %v1264 = vrot.slane %v1259, %v1263
        %v1266 = vmul.f32 %v1189, %v1264
        %v1267 = vmul.f32 %v1192, %v1264
        %v1268 = vmul.f32 %v1197, %v1264
        %v1269 = vmul.f32 %v1200, %v1264
        %v1270 = vmul.f32 %v1205, %v1264
        %v1271 = vmul.f32 %v1208, %v1264
        %v1272 = vmul.f32 %v1213, %v1264
        %v1273 = vmul.f32 %v1216, %v1264
        %v1274 = vmul.f32 %v1221, %v1264
        %v1275 = vmul.f32 %v1224, %v1264
        %v1276 = vmul.f32 %v1229, %v1264
        %v1277 = vmul.f32 %v1232, %v1264
        %v1278 = vmul.f32 %v1237, %v1264
        %v1279 = vmul.f32 %v1240, %v1264
        %v1280 = vmul.f32 %v1245, %v1264
        %v1281 = vmul.f32 %v1248, %v1264
        %v1282 = vmul.f32 %v1253, %v1264
        %v1283 = vmul.f32 %v1256, %v1264
        %v1284 = vld [vmem:[#allocation9] sm:$0x1]
        %v1286 = vlaneseq
        %v1287 = vshrl.u32 %v1286, 7
        %v1288 = vsub.s32 0, %v1287
        %v1289 = vrot.slane %v1284, %v1288
        %v1291 = vadd.f32 %v1266, %v1289
        %v1292 = vadd.f32 %v1267, %v1289
        %v1293 = vadd.f32 %v1268, %v1289
        %v1294 = vadd.f32 %v1269, %v1289
        %v1295 = vadd.f32 %v1270, %v1289
        %v1296 = vadd.f32 %v1271, %v1289
        %v1297 = vadd.f32 %v1272, %v1289
        %v1298 = vadd.f32 %v1273, %v1289
        %v1299 = vadd.f32 %v1274, %v1289
        %v1300 = vadd.f32 %v1275, %v1289
        %v1301 = vadd.f32 %v1276, %v1289
        %v1302 = vadd.f32 %v1277, %v1289
        %v1303 = vadd.f32 %v1278, %v1289
        %v1304 = vadd.f32 %v1279, %v1289
        %v1305 = vadd.f32 %v1280, %v1289
        %v1306 = vadd.f32 %v1281, %v1289
        %v1307 = vadd.f32 %v1282, %v1289
        %v1308 = vadd.f32 %v1283, %v1289
        %v1309 = vmax.f32 %v1291, 0.0
        %v1310 = vmax.f32 %v1292, 0.0
        %v1311 = vmax.f32 %v1293, 0.0
        %v1312 = vmax.f32 %v1294, 0.0
        %v1313 = vmax.f32 %v1295, 0.0
        %v1314 = vmax.f32 %v1296, 0.0
        %v1315 = vmax.f32 %v1297, 0.0
        %v1316 = vmax.f32 %v1298, 0.0
        %v1317 = vmax.f32 %v1299, 0.0
        %v1318 = vmax.f32 %v1300, 0.0
        %v1319 = vmax.f32 %v1301, 0.0
        %v1320 = vmax.f32 %v1302, 0.0
        %v1321 = vmax.f32 %v1303, 0.0
        %v1322 = vmax.f32 %v1304, 0.0
        %v1323 = vmax.f32 %v1305, 0.0
        %v1324 = vmax.f32 %v1306, 0.0
        %v1325 = vmax.f32 %v1307, 0.0
        %v1326 = vmax.f32 %v1308, 0.0
        %v1327 = vadd.s32 %v1026, 1
        %v1328 = vadd.s32 %v1027, 1
        %vm1329 = vcmp.ge.s32.totalorder %v1327, 1
        %vm1330 = vcmp.ge.s32.totalorder %v1328, 1
        %vm1331 = vmand 0, %vm1329
        %vm1332 = vmand 0, %vm1330
        %vm1333 = vmand 1, %vm1329
        %vm1334 = vmand 1, %vm1330
        %vm1335 = vcmp.le.s32.totalorder %v1327, 16
        %vm1336 = vcmp.le.s32.totalorder %v1328, 16
        %vm1337 = vmand %vm1331, %vm1335
        %vm1338 = vmand %vm1332, %vm1336
        %vm1339 = vmand %vm1333, %vm1335
        %vm1340 = vmand %vm1334, %vm1336
        %v1341 = vsel %vm1337, %v1309, 0.0
        %v1342 = vsel %vm1338, %v1310, 0.0
        %v1343 = vsel %vm1339, %v1311, 0.0
        %v1344 = vsel %vm1340, %v1312, 0.0
        %v1345 = vsel %vm1339, %v1313, 0.0
        %v1346 = vsel %vm1340, %v1314, 0.0
        %v1347 = vsel %vm1339, %v1315, 0.0
        %v1348 = vsel %vm1340, %v1316, 0.0
        %v1349 = vsel %vm1339, %v1317, 0.0
        %v1350 = vsel %vm1340, %v1318, 0.0
        %v1351 = vsel %vm1339, %v1319, 0.0
        %v1352 = vsel %vm1340, %v1320, 0.0
        %v1353 = vsel %vm1339, %v1321, 0.0
        %v1354 = vsel %vm1340, %v1322, 0.0
        %v1355 = vsel %vm1339, %v1323, 0.0
        %v1356 = vsel %vm1340, %v1324, 0.0
        %v1357 = vsel %vm1339, %v1325, 0.0
        %v1358 = vsel %vm1340, %v1326, 0.0
        %s1359 = scalar_lea.vmem [#allocation2], 144
        %1360 = vst.msk [vmem:[%s1359] sm:$0xff] %vm1058, %v1341
        %1361 = vst.msk [vmem:[%s1359 + $0x8] sm:$0xff] %vm1058, %v1342
        %1362 = vst.msk [vmem:[%s1359 + $0x10] sm:$0xff] %vm1058, %v1343
        %1363 = vst.msk [vmem:[%s1359 + $0x18] sm:$0xff] %vm1058, %v1344
        %1364 = vst.msk [vmem:[%s1359 + $0x20] sm:$0xff] %vm1058, %v1345
        %1365 = vst.msk [vmem:[%s1359 + $0x28] sm:$0xff] %vm1058, %v1346
        %1366 = vst.msk [vmem:[%s1359 + $0x30] sm:$0xff] %vm1058, %v1347
        %1367 = vst.msk [vmem:[%s1359 + $0x38] sm:$0xff] %vm1058, %v1348
        %1368 = vst.msk [vmem:[%s1359 + $0x40] sm:$0xff] %vm1058, %v1349
        %1369 = vst.msk [vmem:[%s1359 + $0x48] sm:$0xff] %vm1058, %v1350
        %1370 = vst.msk [vmem:[%s1359 + $0x50] sm:$0xff] %vm1058, %v1351
        %1371 = vst.msk [vmem:[%s1359 + $0x58] sm:$0xff] %vm1058, %v1352
        %1372 = vst.msk [vmem:[%s1359 + $0x60] sm:$0xff] %vm1058, %v1353
        %1373 = vst.msk [vmem:[%s1359 + $0x68] sm:$0xff] %vm1058, %v1354
        %1374 = vst.msk [vmem:[%s1359 + $0x70] sm:$0xff] %vm1058, %v1355
        %1375 = vst.msk [vmem:[%s1359 + $0x78] sm:$0xff] %vm1058, %v1356
        %1376 = vst.msk [vmem:[%s1359 + $0x80] sm:$0xff] %vm1058, %v1357
        %1377 = vst.msk [vmem:[%s1359 + $0x88] sm:$0xff] %vm1058, %v1358
        %s1378 = scalar_lea.vmem %s656, 144 [#allocation3]
        %v1379 = vld [vmem:[%s1378] sm:$0xf]
        %v1380 = vld [vmem:[%s1378 + $0x4] sm:$0xf]
        %v1381 = vld [vmem:[%s1378 + $0x8] sm:$0xf]
        %v1382 = vld [vmem:[%s1378 + $0xc] sm:$0xf]
        %v1383 = vld [vmem:[%s1378 + $0x10] sm:$0xf]
        %v1384 = vld [vmem:[%s1378 + $0x14] sm:$0xf]
        %v1385 = vld [vmem:[%s1378 + $0x18] sm:$0xf]
        %v1386 = vld [vmem:[%s1378 + $0x1c] sm:$0xf]
        %v1387 = vld [vmem:[%s1378 + $0x20] sm:$0xf]
        %v1388 = vld [vmem:[%s1378 + $0x24] sm:$0xf]
        %v1389 = vld [vmem:[%s1378 + $0x28] sm:$0xf]
        %v1390 = vld [vmem:[%s1378 + $0x2c] sm:$0xf]
        %v1391 = vld [vmem:[%s1378 + $0x30] sm:$0xf]
        %v1392 = vld [vmem:[%s1378 + $0x34] sm:$0xf]
        %v1393 = vld [vmem:[%s1378 + $0x38] sm:$0xf]
        %v1394 = vld [vmem:[%s1378 + $0x3c] sm:$0xf]
        %v1395 = vld [vmem:[%s1378 + $0x40] sm:$0xf]
        %v1396 = vld [vmem:[%s1378 + $0x44] sm:$0xf]
        %v1397 = vunpack.c.l.bf16 %v1379
        %v1398 = vunpack.c.l.bf16 %v1380
        %v1399 = vunpack.c.l.bf16 %v1381
        %v1400 = vunpack.c.l.bf16 %v1382
        %v1401 = vunpack.c.l.bf16 %v1383
        %v1402 = vunpack.c.l.bf16 %v1384
        %v1403 = vunpack.c.l.bf16 %v1385
        %v1404 = vunpack.c.l.bf16 %v1386
        %v1405 = vunpack.c.l.bf16 %v1387
        %v1406 = vunpack.c.l.bf16 %v1388
        %v1407 = vunpack.c.l.bf16 %v1389
        %v1408 = vunpack.c.l.bf16 %v1390
        %v1409 = vunpack.c.l.bf16 %v1391
        %v1410 = vunpack.c.l.bf16 %v1392
        %v1411 = vunpack.c.l.bf16 %v1393
        %v1412 = vunpack.c.l.bf16 %v1394
        %v1413 = vunpack.c.l.bf16 %v1395
        %v1414 = vunpack.c.l.bf16 %v1396
        %v1415 = vpack.c.bf16 %v1398, %v1397
        %v1416 = vpack.c.bf16 %v1400, %v1399
        %v1417 = vpack.c.bf16 %v1402, %v1401
        %v1418 = vpack.c.bf16 %v1404, %v1403
        %v1419 = vpack.c.bf16 %v1406, %v1405
        %v1420 = vpack.c.bf16 %v1408, %v1407
        %v1421 = vpack.c.bf16 %v1410, %v1409
        %v1422 = vpack.c.bf16 %v1412, %v1411
        %v1423 = vpack.c.bf16 %v1414, %v1413
        %v1424 = vld [vmem:[#allocation6] sm:$0x3]
        %v1426 = vsel %vm818, %v1415, 0
        %v1429 = vsel %vm818, %v1416, 0
        %v1432 = vsel %vm818, %v1417, 0
        %v1435 = vsel %vm818, %v1418, 0
        %v1438 = vsel %vm818, %v1419, 0
        %v1441 = vsel %vm818, %v1420, 0
        %v1444 = vsel %vm818, %v1421, 0
        %v1447 = vsel %vm818, %v1422, 0
        %v1450 = vsel %vm818, %v1423, 0
        %v1453 = vsel %vm846, %v1424, 0
        %1455 = vmatprep.subr.bf16.mxu0 0
        %1456 = vmatpush1.bf16.msra.mxu0 %v1453
        %1457 = vmatprep.subr.bf16.mxu0 0
        %1458 = vmatpush1.bf16.msra.mxu0 0
        %1459 = vmatprep.subr.bf16.mxu0 0
        %1460 = vmatpush1.bf16.msra.mxu0 0
        %1461 = vmatprep.subr.bf16.mxu0 0
        %1462 = vmatpush1.bf16.msra.mxu0 0
        %1463 = vmatprep.subr.bf16.mxu0 0
        %1464 = vmatpush1.bf16.msra.mxu0 0
        %1465 = vmatprep.subr.bf16.mxu0 0
        %1466 = vmatpush1.bf16.msra.mxu0 0
        %1467 = vmatprep.subr.bf16.mxu0 0
        %1468 = vmatpush1.bf16.msra.mxu0 0
        %1469 = vmatprep.subr.bf16.mxu0 0
        %1470 = vmatpush1.bf16.msra.mxu0 0
        %1471 = vmatprep.subr.bf16.mxu0 0
        %1472 = vmatpush1.bf16.msra.mxu0 0
        %1473 = vmatprep.subr.bf16.mxu0 0
        %1474 = vmatpush1.bf16.msra.mxu0 0
        %1475 = vmatprep.subr.bf16.mxu0 0
        %1476 = vmatpush1.bf16.msra.mxu0 0
        %1477 = vmatprep.subr.bf16.mxu0 0
        %1478 = vmatpush1.bf16.msra.mxu0 0
        %1479 = vmatprep.subr.bf16.mxu0 0
        %1480 = vmatpush1.bf16.msra.mxu0 0
        %1481 = vmatprep.subr.bf16.mxu0 0
        %1482 = vmatpush1.bf16.msra.mxu0 0
        %1483 = vmatprep.subr.bf16.mxu0 0
        %1484 = vmatpush1.bf16.msra.mxu0 0
        %1485 = vmatprep.subr.bf16.mxu0 0
        %1486 = vmatpush1.bf16.msra.mxu0 0
        %1487 = vmatprep.mubr.bf16.mxu0 0
        %1488 = vmatmul.mubr.bf16.gmra.mrb[0].mxu0 %v1426
        %v1489 = vpop.f32.mrb[0].mxu0
        %v1490 = vadd.f32 0.0, %v1489
        %v1491 = vpop.f32.mrb[0].mxu0
        %v1492 = vpop.f32.mrb[0].mxu0
        %v1493 = vadd.f32 0.0, %v1492
        %v1494 = vpop.f32.mrb[0].mxu0
        %1495 = vmatprep.mubr.bf16.mxu0 0
        %1496 = vmatmul.mubr.bf16.gmra.mrb[0].mxu0 %v1429
        %v1497 = vpop.f32.mrb[0].mxu0
        %v1498 = vadd.f32 0.0, %v1497
        %v1499 = vpop.f32.mrb[0].mxu0
        %v1500 = vpop.f32.mrb[0].mxu0
        %v1501 = vadd.f32 0.0, %v1500
        %v1502 = vpop.f32.mrb[0].mxu0
        %1503 = vmatprep.mubr.bf16.mxu0 0
        %1504 = vmatmul.mubr.bf16.gmra.mrb[0].mxu0 %v1432
        %v1505 = vpop.f32.mrb[0].mxu0
        %v1506 = vadd.f32 0.0, %v1505
        %v1507 = vpop.f32.mrb[0].mxu0
        %v1508 = vpop.f32.mrb[0].mxu0
        %v1509 = vadd.f32 0.0, %v1508
        %v1510 = vpop.f32.mrb[0].mxu0
        %1511 = vmatprep.mubr.bf16.mxu0 0
        %1512 = vmatmul.mubr.bf16.gmra.mrb[0].mxu0 %v1435
        %v1513 = vpop.f32.mrb[0].mxu0
        %v1514 = vadd.f32 0.0, %v1513
        %v1515 = vpop.f32.mrb[0].mxu0
        %v1516 = vpop.f32.mrb[0].mxu0
        %v1517 = vadd.f32 0.0, %v1516
        %v1518 = vpop.f32.mrb[0].mxu0
        %1519 = vmatprep.mubr.bf16.mxu0 0
        %1520 = vmatmul.mubr.bf16.gmra.mrb[0].mxu0 %v1438
        %v1521 = vpop.f32.mrb[0].mxu0
        %v1522 = vadd.f32 0.0, %v1521
        %v1523 = vpop.f32.mrb[0].mxu0
        %v1524 = vpop.f32.mrb[0].mxu0
        %v1525 = vadd.f32 0.0, %v1524
        %v1526 = vpop.f32.mrb[0].mxu0
        %1527 = vmatprep.mubr.bf16.mxu0 0
        %1528 = vmatmul.mubr.bf16.gmra.mrb[0].mxu0 %v1441
        %v1529 = vpop.f32.mrb[0].mxu0
        %v1530 = vadd.f32 0.0, %v1529
        %v1531 = vpop.f32.mrb[0].mxu0
        %v1532 = vpop.f32.mrb[0].mxu0
        %v1533 = vadd.f32 0.0, %v1532
        %v1534 = vpop.f32.mrb[0].mxu0
        %1535 = vmatprep.mubr.bf16.mxu0 0
        %1536 = vmatmul.mubr.bf16.gmra.mrb[0].mxu0 %v1444
        %v1537 = vpop.f32.mrb[0].mxu0
        %v1538 = vadd.f32 0.0, %v1537
        %v1539 = vpop.f32.mrb[0].mxu0
        %v1540 = vpop.f32.mrb[0].mxu0
        %v1541 = vadd.f32 0.0, %v1540
        %v1542 = vpop.f32.mrb[0].mxu0
        %1543 = vmatprep.mubr.bf16.mxu0 0
        %1544 = vmatmul.mubr.bf16.gmra.mrb[0].mxu0 %v1447
        %v1545 = vpop.f32.mrb[0].mxu0
        %v1546 = vadd.f32 0.0, %v1545
        %v1547 = vpop.f32.mrb[0].mxu0
        %v1548 = vpop.f32.mrb[0].mxu0
        %v1549 = vadd.f32 0.0, %v1548
        %v1550 = vpop.f32.mrb[0].mxu0
        %1551 = vmatprep.mubr.bf16.mxu0 0
        %1552 = vmatmul.mubr.bf16.gmra.mrb[0].mxu0 %v1450
        %v1553 = vpop.f32.mrb[0].mxu0
        %v1554 = vadd.f32 0.0, %v1553
        %v1555 = vpop.f32.mrb[0].mxu0
        %v1556 = vpop.f32.mrb[0].mxu0
        %v1557 = vadd.f32 0.0, %v1556
        %v1558 = vpop.f32.mrb[0].mxu0
        %1559 = vdwg.mxu0
        %v1560 = vld [vmem:[#allocation8] sm:$0x1]
        %v1562 = vlaneseq
        %v1563 = vshrl.u32 %v1562, 7
        %v1564 = vsub.s32 0, %v1563
        %v1565 = vrot.slane %v1560, %v1564
        %v1567 = vmul.f32 %v1490, %v1565
        %v1568 = vmul.f32 %v1493, %v1565
        %v1569 = vmul.f32 %v1498, %v1565
        %v1570 = vmul.f32 %v1501, %v1565
        %v1571 = vmul.f32 %v1506, %v1565
        %v1572 = vmul.f32 %v1509, %v1565
        %v1573 = vmul.f32 %v1514, %v1565
        %v1574 = vmul.f32 %v1517, %v1565
        %v1575 = vmul.f32 %v1522, %v1565
        %v1576 = vmul.f32 %v1525, %v1565
        %v1577 = vmul.f32 %v1530, %v1565
        %v1578 = vmul.f32 %v1533, %v1565
        %v1579 = vmul.f32 %v1538, %v1565
        %v1580 = vmul.f32 %v1541, %v1565
        %v1581 = vmul.f32 %v1546, %v1565
        %v1582 = vmul.f32 %v1549, %v1565
        %v1583 = vmul.f32 %v1554, %v1565
        %v1584 = vmul.f32 %v1557, %v1565
        %v1585 = vld [vmem:[#allocation9] sm:$0x1]
        %v1587 = vlaneseq
        %v1588 = vshrl.u32 %v1587, 7
        %v1589 = vsub.s32 0, %v1588
        %v1590 = vrot.slane %v1585, %v1589
        %v1592 = vadd.f32 %v1567, %v1590
        %v1593 = vadd.f32 %v1568, %v1590
        %v1594 = vadd.f32 %v1569, %v1590
        %v1595 = vadd.f32 %v1570, %v1590
        %v1596 = vadd.f32 %v1571, %v1590
        %v1597 = vadd.f32 %v1572, %v1590
        %v1598 = vadd.f32 %v1573, %v1590
        %v1599 = vadd.f32 %v1574, %v1590
        %v1600 = vadd.f32 %v1575, %v1590
        %v1601 = vadd.f32 %v1576, %v1590
        %v1602 = vadd.f32 %v1577, %v1590
        %v1603 = vadd.f32 %v1578, %v1590
        %v1604 = vadd.f32 %v1579, %v1590
        %v1605 = vadd.f32 %v1580, %v1590
        %v1606 = vadd.f32 %v1581, %v1590
        %v1607 = vadd.f32 %v1582, %v1590
        %v1608 = vadd.f32 %v1583, %v1590
        %v1609 = vadd.f32 %v1584, %v1590
        %v1610 = vmax.f32 %v1592, 0.0
        %v1611 = vmax.f32 %v1593, 0.0
        %v1612 = vmax.f32 %v1594, 0.0
        %v1613 = vmax.f32 %v1595, 0.0
        %v1614 = vmax.f32 %v1596, 0.0
        %v1615 = vmax.f32 %v1597, 0.0
        %v1616 = vmax.f32 %v1598, 0.0
        %v1617 = vmax.f32 %v1599, 0.0
        %v1618 = vmax.f32 %v1600, 0.0
        %v1619 = vmax.f32 %v1601, 0.0
        %v1620 = vmax.f32 %v1602, 0.0
        %v1621 = vmax.f32 %v1603, 0.0
        %v1622 = vmax.f32 %v1604, 0.0
        %v1623 = vmax.f32 %v1605, 0.0
        %v1624 = vmax.f32 %v1606, 0.0
        %v1625 = vmax.f32 %v1607, 0.0
        %v1626 = vmax.f32 %v1608, 0.0
        %v1627 = vmax.f32 %v1609, 0.0
        %v1628 = vsel %vm1038, %v1610, 0.0
        %v1629 = vsel %vm1039, %v1611, 0.0
        %v1630 = vsel %vm1038, %v1612, 0.0
        %v1631 = vsel %vm1039, %v1613, 0.0
        %v1632 = vsel %vm1038, %v1614, 0.0
        %v1633 = vsel %vm1039, %v1615, 0.0
        %v1634 = vsel %vm1038, %v1616, 0.0
        %v1635 = vsel %vm1039, %v1617, 0.0
        %v1636 = vsel %vm1038, %v1618, 0.0
        %v1637 = vsel %vm1039, %v1619, 0.0
        %v1638 = vsel %vm1038, %v1620, 0.0
        %v1639 = vsel %vm1039, %v1621, 0.0
        %v1640 = vsel %vm1038, %v1622, 0.0
        %v1641 = vsel %vm1039, %v1623, 0.0
        %v1642 = vsel %vm1038, %v1624, 0.0
        %v1643 = vsel %vm1039, %v1625, 0.0
        %v1644 = vsel %vm1036, %v1626, 0.0
        %v1645 = vsel %vm1037, %v1627, 0.0
        %s1646 = scalar_lea.vmem [#allocation2], 288
        %1647 = vst.msk [vmem:[%s1646] sm:$0xff] %vm1058, %v1628
        %1648 = vst.msk [vmem:[%s1646 + $0x8] sm:$0xff] %vm1058, %v1629
        %1649 = vst.msk [vmem:[%s1646 + $0x10] sm:$0xff] %vm1058, %v1630
        %1650 = vst.msk [vmem:[%s1646 + $0x18] sm:$0xff] %vm1058, %v1631
        %1651 = vst.msk [vmem:[%s1646 + $0x20] sm:$0xff] %vm1058, %v1632
        %1652 = vst.msk [vmem:[%s1646 + $0x28] sm:$0xff] %vm1058, %v1633
        %1653 = vst.msk [vmem:[%s1646 + $0x30] sm:$0xff] %vm1058, %v1634
        %1654 = vst.msk [vmem:[%s1646 + $0x38] sm:$0xff] %vm1058, %v1635
        %1655 = vst.msk [vmem:[%s1646 + $0x40] sm:$0xff] %vm1058, %v1636
        %1656 = vst.msk [vmem:[%s1646 + $0x48] sm:$0xff] %vm1058, %v1637
        %1657 = vst.msk [vmem:[%s1646 + $0x50] sm:$0xff] %vm1058, %v1638
        %1658 = vst.msk [vmem:[%s1646 + $0x58] sm:$0xff] %vm1058, %v1639
        %1659 = vst.msk [vmem:[%s1646 + $0x60] sm:$0xff] %vm1058, %v1640
        %1660 = vst.msk [vmem:[%s1646 + $0x68] sm:$0xff] %vm1058, %v1641
        %1661 = vst.msk [vmem:[%s1646 + $0x70] sm:$0xff] %vm1058, %v1642
        %1662 = vst.msk [vmem:[%s1646 + $0x78] sm:$0xff] %vm1058, %v1643
        %1663 = vst.msk [vmem:[%s1646 + $0x80] sm:$0xff] %vm1058, %v1644
        %1664 = vst.msk [vmem:[%s1646 + $0x88] sm:$0xff] %vm1058, %v1645
        %s1665 = scalar_lea.vmem %s656, 216 [#allocation3]
        %v1666 = vld [vmem:[%s1665] sm:$0xf]
        %v1667 = vld [vmem:[%s1665 + $0x4] sm:$0xf]
        %v1668 = vld [vmem:[%s1665 + $0x8] sm:$0xf]
        %v1669 = vld [vmem:[%s1665 + $0xc] sm:$0xf]
        %v1670 = vld [vmem:[%s1665 + $0x10] sm:$0xf]
        %v1671 = vld [vmem:[%s1665 + $0x14] sm:$0xf]
        %v1672 = vld [vmem:[%s1665 + $0x18] sm:$0xf]
        %v1673 = vld [vmem:[%s1665 + $0x1c] sm:$0xf]
        %v1674 = vld [vmem:[%s1665 + $0x20] sm:$0xf]
        %v1675 = vld [vmem:[%s1665 + $0x24] sm:$0xf]
        %v1676 = vld [vmem:[%s1665 + $0x28] sm:$0xf]
        %v1677 = vld [vmem:[%s1665 + $0x2c] sm:$0xf]
        %v1678 = vld [vmem:[%s1665 + $0x30] sm:$0xf]
        %v1679 = vld [vmem:[%s1665 + $0x34] sm:$0xf]
        %v1680 = vld [vmem:[%s1665 + $0x38] sm:$0xf]
        %v1681 = vld [vmem:[%s1665 + $0x3c] sm:$0xf]
        %v1682 = vld [vmem:[%s1665 + $0x40] sm:$0xf]
        %v1683 = vld [vmem:[%s1665 + $0x44] sm:$0xf]
        %v1684 = vunpack.c.l.bf16 %v1666
        %v1685 = vunpack.c.l.bf16 %v1667
        %v1686 = vunpack.c.l.bf16 %v1668
        %v1687 = vunpack.c.l.bf16 %v1669
        %v1688 = vunpack.c.l.bf16 %v1670
        %v1689 = vunpack.c.l.bf16 %v1671
        %v1690 = vunpack.c.l.bf16 %v1672
        %v1691 = vunpack.c.l.bf16 %v1673
        %v1692 = vunpack.c.l.bf16 %v1674
        %v1693 = vunpack.c.l.bf16 %v1675
        %v1694 = vunpack.c.l.bf16 %v1676
        %v1695 = vunpack.c.l.bf16 %v1677
        %v1696 = vunpack.c.l.bf16 %v1678
        %v1697 = vunpack.c.l.bf16 %v1679
        %v1698 = vunpack.c.l.bf16 %v1680
        %v1699 = vunpack.c.l.bf16 %v1681
        %v1700 = vunpack.c.l.bf16 %v1682
        %v1701 = vunpack.c.l.bf16 %v1683
        %v1702 = vpack.c.bf16 %v1685, %v1684
        %v1703 = vpack.c.bf16 %v1687, %v1686
        %v1704 = vpack.c.bf16 %v1689, %v1688
        %v1705 = vpack.c.bf16 %v1691, %v1690
        %v1706 = vpack.c.bf16 %v1693, %v1692
        %v1707 = vpack.c.bf16 %v1695, %v1694
        %v1708 = vpack.c.bf16 %v1697, %v1696
        %v1709 = vpack.c.bf16 %v1699, %v1698
        %v1710 = vpack.c.bf16 %v1701, %v1700
        %v1711 = vld [vmem:[#allocation6] sm:$0x3]
        %v1713 = vsel %vm818, %v1702, 0
        %v1716 = vsel %vm818, %v1703, 0
        %v1719 = vsel %vm818, %v1704, 0
        %v1722 = vsel %vm818, %v1705, 0
        %v1725 = vsel %vm818, %v1706, 0
        %v1728 = vsel %vm818, %v1707, 0
        %v1731 = vsel %vm818, %v1708, 0
        %v1734 = vsel %vm818, %v1709, 0
        %v1737 = vsel %vm818, %v1710, 0
        %v1740 = vsel %vm846, %v1711, 0
        %1742 = vmatprep.subr.bf16.mxu0 0
        %1743 = vmatpush1.bf16.msra.mxu0 %v1740
        %1744 = vmatprep.subr.bf16.mxu0 0
        %1745 = vmatpush1.bf16.msra.mxu0 0
        %1746 = vmatprep.subr.bf16.mxu0 0
        %1747 = vmatpush1.bf16.msra.mxu0 0
        %1748 = vmatprep.subr.bf16.mxu0 0
        %1749 = vmatpush1.bf16.msra.mxu0 0
        %1750 = vmatprep.subr.bf16.mxu0 0
        %1751 = vmatpush1.bf16.msra.mxu0 0
        %1752 = vmatprep.subr.bf16.mxu0 0
        %1753 = vmatpush1.bf16.msra.mxu0 0
        %1754 = vmatprep.subr.bf16.mxu0 0
        %1755 = vmatpush1.bf16.msra.mxu0 0
        %1756 = vmatprep.subr.bf16.mxu0 0
        %1757 = vmatpush1.bf16.msra.mxu0 0
        %1758 = vmatprep.subr.bf16.mxu0 0
        %1759 = vmatpush1.bf16.msra.mxu0 0
        %1760 = vmatprep.subr.bf16.mxu0 0
        %1761 = vmatpush1.bf16.msra.mxu0 0
        %1762 = vmatprep.subr.bf16.mxu0 0
        %1763 = vmatpush1.bf16.msra.mxu0 0
        %1764 = vmatprep.subr.bf16.mxu0 0
        %1765 = vmatpush1.bf16.msra.mxu0 0
        %1766 = vmatprep.subr.bf16.mxu0 0
        %1767 = vmatpush1.bf16.msra.mxu0 0
        %1768 = vmatprep.subr.bf16.mxu0 0
        %1769 = vmatpush1.bf16.msra.mxu0 0
        %1770 = vmatprep.subr.bf16.mxu0 0
        %1771 = vmatpush1.bf16.msra.mxu0 0
        %1772 = vmatprep.subr.bf16.mxu0 0
        %1773 = vmatpush1.bf16.msra.mxu0 0
        %1774 = vmatprep.mubr.bf16.mxu0 0
        %1775 = vmatmul.mubr.bf16.gmra.mrb[0].mxu0 %v1713
        %v1776 = vpop.f32.mrb[0].mxu0
        %v1777 = vadd.f32 0.0, %v1776
        %v1778 = vpop.f32.mrb[0].mxu0
        %v1779 = vpop.f32.mrb[0].mxu0
        %v1780 = vadd.f32 0.0, %v1779
        %v1781 = vpop.f32.mrb[0].mxu0
        %1782 = vmatprep.mubr.bf16.mxu0 0
        %1783 = vmatmul.mubr.bf16.gmra.mrb[0].mxu0 %v1716
        %v1784 = vpop.f32.mrb[0].mxu0
        %v1785 = vadd.f32 0.0, %v1784
        %v1786 = vpop.f32.mrb[0].mxu0
        %v1787 = vpop.f32.mrb[0].mxu0
        %v1788 = vadd.f32 0.0, %v1787
        %v1789 = vpop.f32.mrb[0].mxu0
        %1790 = vmatprep.mubr.bf16.mxu0 0
        %1791 = vmatmul.mubr.bf16.gmra.mrb[0].mxu0 %v1719
        %v1792 = vpop.f32.mrb[0].mxu0
        %v1793 = vadd.f32 0.0, %v1792
        %v1794 = vpop.f32.mrb[0].mxu0
        %v1795 = vpop.f32.mrb[0].mxu0
        %v1796 = vadd.f32 0.0, %v1795
        %v1797 = vpop.f32.mrb[0].mxu0
        %1798 = vmatprep.mubr.bf16.mxu0 0
        %1799 = vmatmul.mubr.bf16.gmra.mrb[0].mxu0 %v1722
        %v1800 = vpop.f32.mrb[0].mxu0
        %v1801 = vadd.f32 0.0, %v1800
        %v1802 = vpop.f32.mrb[0].mxu0
        %v1803 = vpop.f32.mrb[0].mxu0
        %v1804 = vadd.f32 0.0, %v1803
        %v1805 = vpop.f32.mrb[0].mxu0
        %1806 = vmatprep.mubr.bf16.mxu0 0
        %1807 = vmatmul.mubr.bf16.gmra.mrb[0].mxu0 %v1725
        %v1808 = vpop.f32.mrb[0].mxu0
        %v1809 = vadd.f32 0.0, %v1808
        %v1810 = vpop.f32.mrb[0].mxu0
        %v1811 = vpop.f32.mrb[0].mxu0
        %v1812 = vadd.f32 0.0, %v1811
        %v1813 = vpop.f32.mrb[0].mxu0
        %1814 = vmatprep.mubr.bf16.mxu0 0
        %1815 = vmatmul.mubr.bf16.gmra.mrb[0].mxu0 %v1728
        %v1816 = vpop.f32.mrb[0].mxu0
        %v1817 = vadd.f32 0.0, %v1816
        %v1818 = vpop.f32.mrb[0].mxu0
        %v1819 = vpop.f32.mrb[0].mxu0
        %v1820 = vadd.f32 0.0, %v1819
        %v1821 = vpop.f32.mrb[0].mxu0
        %1822 = vmatprep.mubr.bf16.mxu0 0
        %1823 = vmatmul.mubr.bf16.gmra.mrb[0].mxu0 %v1731
        %v1824 = vpop.f32.mrb[0].mxu0
        %v1825 = vadd.f32 0.0, %v1824
        %v1826 = vpop.f32.mrb[0].mxu0
        %v1827 = vpop.f32.mrb[0].mxu0
        %v1828 = vadd.f32 0.0, %v1827
        %v1829 = vpop.f32.mrb[0].mxu0
        %1830 = vmatprep.mubr.bf16.mxu0 0
        %1831 = vmatmul.mubr.bf16.gmra.mrb[0].mxu0 %v1734
        %v1832 = vpop.f32.mrb[0].mxu0
        %v1833 = vadd.f32 0.0, %v1832
        %v1834 = vpop.f32.mrb[0].mxu0
        %v1835 = vpop.f32.mrb[0].mxu0
        %v1836 = vadd.f32 0.0, %v1835
        %v1837 = vpop.f32.mrb[0].mxu0
        %1838 = vmatprep.mubr.bf16.mxu0 0
        %1839 = vmatmul.mubr.bf16.gmra.mrb[0].mxu0 %v1737
        %v1840 = vpop.f32.mrb[0].mxu0
        %v1841 = vadd.f32 0.0, %v1840
        %v1842 = vpop.f32.mrb[0].mxu0
        %v1843 = vpop.f32.mrb[0].mxu0
        %v1844 = vadd.f32 0.0, %v1843
        %v1845 = vpop.f32.mrb[0].mxu0
        %1846 = vdwg.mxu0
        %v1847 = vld [vmem:[#allocation8] sm:$0x1]
        %v1849 = vlaneseq
        %v1850 = vshrl.u32 %v1849, 7
        %v1851 = vsub.s32 0, %v1850
        %v1852 = vrot.slane %v1847, %v1851
        %v1854 = vmul.f32 %v1777, %v1852
        %v1855 = vmul.f32 %v1780, %v1852
        %v1856 = vmul.f32 %v1785, %v1852
        %v1857 = vmul.f32 %v1788, %v1852
        %v1858 = vmul.f32 %v1793, %v1852
        %v1859 = vmul.f32 %v1796, %v1852
        %v1860 = vmul.f32 %v1801, %v1852
        %v1861 = vmul.f32 %v1804, %v1852
        %v1862 = vmul.f32 %v1809, %v1852
        %v1863 = vmul.f32 %v1812, %v1852
        %v1864 = vmul.f32 %v1817, %v1852
        %v1865 = vmul.f32 %v1820, %v1852
        %v1866 = vmul.f32 %v1825, %v1852
        %v1867 = vmul.f32 %v1828, %v1852
        %v1868 = vmul.f32 %v1833, %v1852
        %v1869 = vmul.f32 %v1836, %v1852
        %v1870 = vmul.f32 %v1841, %v1852
        %v1871 = vmul.f32 %v1844, %v1852
        %v1872 = vld [vmem:[#allocation9] sm:$0x1]
        %v1874 = vlaneseq
        %v1875 = vshrl.u32 %v1874, 7
        %v1876 = vsub.s32 0, %v1875
        %v1877 = vrot.slane %v1872, %v1876
        %v1879 = vadd.f32 %v1854, %v1877
        %v1880 = vadd.f32 %v1855, %v1877
        %v1881 = vadd.f32 %v1856, %v1877
        %v1882 = vadd.f32 %v1857, %v1877
        %v1883 = vadd.f32 %v1858, %v1877
        %v1884 = vadd.f32 %v1859, %v1877
        %v1885 = vadd.f32 %v1860, %v1877
        %v1886 = vadd.f32 %v1861, %v1877
        %v1887 = vadd.f32 %v1862, %v1877
        %v1888 = vadd.f32 %v1863, %v1877
        %v1889 = vadd.f32 %v1864, %v1877
        %v1890 = vadd.f32 %v1865, %v1877
        %v1891 = vadd.f32 %v1866, %v1877
        %v1892 = vadd.f32 %v1867, %v1877
        %v1893 = vadd.f32 %v1868, %v1877
        %v1894 = vadd.f32 %v1869, %v1877
        %v1895 = vadd.f32 %v1870, %v1877
        %v1896 = vadd.f32 %v1871, %v1877
        %v1897 = vmax.f32 %v1879, 0.0
        %v1898 = vmax.f32 %v1880, 0.0
        %v1899 = vmax.f32 %v1881, 0.0
        %v1900 = vmax.f32 %v1882, 0.0
        %v1901 = vmax.f32 %v1883, 0.0
        %v1902 = vmax.f32 %v1884, 0.0
        %v1903 = vmax.f32 %v1885, 0.0
        %v1904 = vmax.f32 %v1886, 0.0
        %v1905 = vmax.f32 %v1887, 0.0
        %v1906 = vmax.f32 %v1888, 0.0
        %v1907 = vmax.f32 %v1889, 0.0
        %v1908 = vmax.f32 %v1890, 0.0
        %v1909 = vmax.f32 %v1891, 0.0
        %v1910 = vmax.f32 %v1892, 0.0
        %v1911 = vmax.f32 %v1893, 0.0
        %v1912 = vmax.f32 %v1894, 0.0
        %v1913 = vmax.f32 %v1895, 0.0
        %v1914 = vmax.f32 %v1896, 0.0
        %v1915 = vsel %vm1339, %v1897, 0.0
        %v1916 = vsel %vm1340, %v1898, 0.0
        %v1917 = vsel %vm1339, %v1899, 0.0
        %v1918 = vsel %vm1340, %v1900, 0.0
        %v1919 = vsel %vm1339, %v1901, 0.0
        %v1920 = vsel %vm1340, %v1902, 0.0
        %v1921 = vsel %vm1339, %v1903, 0.0
        %v1922 = vsel %vm1340, %v1904, 0.0
        %v1923 = vsel %vm1339, %v1905, 0.0
        %v1924 = vsel %vm1340, %v1906, 0.0
        %v1925 = vsel %vm1339, %v1907, 0.0
        %v1926 = vsel %vm1340, %v1908, 0.0
        %v1927 = vsel %vm1339, %v1909, 0.0
        %v1928 = vsel %vm1340, %v1910, 0.0
        %v1929 = vsel %vm1339, %v1911, 0.0
        %v1930 = vsel %vm1340, %v1912, 0.0
        %v1931 = vsel %vm1337, %v1913, 0.0
        %v1932 = vsel %vm1338, %v1914, 0.0
        %s1933 = scalar_lea.vmem [#allocation2], 432
        %1934 = vst.msk [vmem:[%s1933] sm:$0xff] %vm1058, %v1915
        %1935 = vst.msk [vmem:[%s1933 + $0x8] sm:$0xff] %vm1058, %v1916
        %1936 = vst.msk [vmem:[%s1933 + $0x10] sm:$0xff] %vm1058, %v1917
        %1937 = vst.msk [vmem:[%s1933 + $0x18] sm:$0xff] %vm1058, %v1918
        %1938 = vst.msk [vmem:[%s1933 + $0x20] sm:$0xff] %vm1058, %v1919
        %1939 = vst.msk [vmem:[%s1933 + $0x28] sm:$0xff] %vm1058, %v1920
        %1940 = vst.msk [vmem:[%s1933 + $0x30] sm:$0xff] %vm1058, %v1921
        %1941 = vst.msk [vmem:[%s1933 + $0x38] sm:$0xff] %vm1058, %v1922
        %1942 = vst.msk [vmem:[%s1933 + $0x40] sm:$0xff] %vm1058, %v1923
        %1943 = vst.msk [vmem:[%s1933 + $0x48] sm:$0xff] %vm1058, %v1924
        %1944 = vst.msk [vmem:[%s1933 + $0x50] sm:$0xff] %vm1058, %v1925
        %1945 = vst.msk [vmem:[%s1933 + $0x58] sm:$0xff] %vm1058, %v1926
        %1946 = vst.msk [vmem:[%s1933 + $0x60] sm:$0xff] %vm1058, %v1927
        %1947 = vst.msk [vmem:[%s1933 + $0x68] sm:$0xff] %vm1058, %v1928
        %1948 = vst.msk [vmem:[%s1933 + $0x70] sm:$0xff] %vm1058, %v1929
        %1949 = vst.msk [vmem:[%s1933 + $0x78] sm:$0xff] %vm1058, %v1930
        %1950 = vst.msk [vmem:[%s1933 + $0x80] sm:$0xff] %vm1058, %v1931
        %1951 = vst.msk [vmem:[%s1933 + $0x88] sm:$0xff] %vm1058, %v1932
        %v1952 = vld [vmem:[#allocation2] sm:$0xff]
        %v1953 = vld [vmem:[#allocation2 + $0x10] sm:$0xff]
        %v1954 = vld [vmem:[#allocation2 + $0x20] sm:$0xff]
        %v1955 = vld [vmem:[#allocation2 + $0x30] sm:$0xff]
        %v1956 = vld [vmem:[#allocation2 + $0x40] sm:$0xff]
        %v1957 = vld [vmem:[#allocation2 + $0x50] sm:$0xff]
        %v1958 = vld [vmem:[#allocation2 + $0x60] sm:$0xff]
        %v1959 = vld [vmem:[#allocation2 + $0x70] sm:$0xff]
        %v1960 = vld [vmem:[%s1359] sm:$0xff]
        %v1961 = vld [vmem:[%s1359 + $0x10] sm:$0xff]
        %v1962 = vld [vmem:[%s1359 + $0x20] sm:$0xff]
        %v1963 = vld [vmem:[%s1359 + $0x30] sm:$0xff]
        %v1964 = vld [vmem:[%s1359 + $0x40] sm:$0xff]
        %v1965 = vld [vmem:[%s1359 + $0x50] sm:$0xff]
        %v1966 = vld [vmem:[%s1359 + $0x60] sm:$0xff]
        %v1967 = vld [vmem:[%s1359 + $0x70] sm:$0xff]
        %v1968 = vld [vmem:[#allocation2 + $0x1] sm:$0xff]
        %v1969 = vld [vmem:[#allocation2 + $0x11] sm:$0xff]
        %v1970 = vld [vmem:[#allocation2 + $0x21] sm:$0xff]
        %v1971 = vld [vmem:[#allocation2 + $0x31] sm:$0xff]
        %v1972 = vld [vmem:[#allocation2 + $0x41] sm:$0xff]
        %v1973 = vld [vmem:[#allocation2 + $0x51] sm:$0xff]
        %v1974 = vld [vmem:[#allocation2 + $0x61] sm:$0xff]
        %v1975 = vld [vmem:[#allocation2 + $0x71] sm:$0xff]
        %v1976 = vld [vmem:[%s1646] sm:$0xff]
        %v1977 = vld [vmem:[%s1646 + $0x10] sm:$0xff]
        %v1978 = vld [vmem:[%s1646 + $0x20] sm:$0xff]
        %v1979 = vld [vmem:[%s1646 + $0x30] sm:$0xff]
        %v1980 = vld [vmem:[%s1646 + $0x40] sm:$0xff]
        %v1981 = vld [vmem:[%s1646 + $0x50] sm:$0xff]
        %v1982 = vld [vmem:[%s1646 + $0x60] sm:$0xff]
        %v1983 = vld [vmem:[%s1646 + $0x70] sm:$0xff]
        %v1984 = vld [vmem:[%s1933] sm:$0xff]
        %v1985 = vld [vmem:[%s1933 + $0x10] sm:$0xff]
        %v1986 = vld [vmem:[%s1933 + $0x20] sm:$0xff]
        %v1987 = vld [vmem:[%s1933 + $0x30] sm:$0xff]
        %v1988 = vld [vmem:[%s1933 + $0x40] sm:$0xff]
        %v1989 = vld [vmem:[%s1933 + $0x50] sm:$0xff]
        %v1990 = vld [vmem:[%s1933 + $0x60] sm:$0xff]
        %v1991 = vld [vmem:[%s1933 + $0x70] sm:$0xff]
        %v1992 = vld [vmem:[%s1646 + $0x1] sm:$0xff]
        %v1993 = vld [vmem:[%s1646 + $0x11] sm:$0xff]
        %v1994 = vld [vmem:[%s1646 + $0x21] sm:$0xff]
        %v1995 = vld [vmem:[%s1646 + $0x31] sm:$0xff]
        %v1996 = vld [vmem:[%s1646 + $0x41] sm:$0xff]
        %v1997 = vld [vmem:[%s1646 + $0x51] sm:$0xff]
        %v1998 = vld [vmem:[%s1646 + $0x61] sm:$0xff]
        %v1999 = vld [vmem:[%s1646 + $0x71] sm:$0xff]
        %s2000 = scalar_lea.vmem [#allocation2], 16
        %v2001 = vld [vmem:[%s2000] sm:$0xff]
        %v2002 = vld [vmem:[%s2000 + $0x10] sm:$0xff]
        %v2003 = vld [vmem:[%s2000 + $0x20] sm:$0xff]
        %v2004 = vld [vmem:[%s2000 + $0x30] sm:$0xff]
        %v2005 = vld [vmem:[%s2000 + $0x40] sm:$0xff]
        %v2006 = vld [vmem:[%s2000 + $0x50] sm:$0xff]
        %v2007 = vld [vmem:[%s2000 + $0x60] sm:$0xff]
        %v2008 = vld [vmem:[%s2000 + $0x70] sm:$0xff]
        %s2009 = scalar_lea.vmem [#allocation2], 160
        %v2010 = vld [vmem:[%s2009] sm:$0xff]
        %v2011 = vld [vmem:[%s2009 + $0x10] sm:$0xff]
        %v2012 = vld [vmem:[%s2009 + $0x20] sm:$0xff]
        %v2013 = vld [vmem:[%s2009 + $0x30] sm:$0xff]
        %v2014 = vld [vmem:[%s2009 + $0x40] sm:$0xff]
        %v2015 = vld [vmem:[%s2009 + $0x50] sm:$0xff]
        %v2016 = vld [vmem:[%s2009 + $0x60] sm:$0xff]
        %v2017 = vld [vmem:[%s2009 + $0x70] sm:$0xff]
        %v2018 = vld [vmem:[%s2000 + $0x1] sm:$0xff]
        %v2019 = vld [vmem:[%s2000 + $0x11] sm:$0xff]
        %v2020 = vld [vmem:[%s2000 + $0x21] sm:$0xff]
        %v2021 = vld [vmem:[%s2000 + $0x31] sm:$0xff]
        %v2022 = vld [vmem:[%s2000 + $0x41] sm:$0xff]
        %v2023 = vld [vmem:[%s2000 + $0x51] sm:$0xff]
        %v2024 = vld [vmem:[%s2000 + $0x61] sm:$0xff]
        %v2025 = vld [vmem:[%s2000 + $0x71] sm:$0xff]
        %2034 = vrot.lane.b32.xlu0 %v1960, 8
        %v2035 = vpop.permute.xlu0 %2034
        %2036 = vrot.lane.b32.xlu0 %v1961, 8
        %v2037 = vpop.permute.xlu0 %2036
        %2038 = vrot.lane.b32.xlu0 %v1962, 8
        %v2039 = vpop.permute.xlu0 %2038
        %2040 = vrot.lane.b32.xlu0 %v1963, 8
        %v2041 = vpop.permute.xlu0 %2040
        %2042 = vrot.lane.b32.xlu0 %v1964, 8
        %v2043 = vpop.permute.xlu0 %2042
        %2044 = vrot.lane.b32.xlu0 %v1965, 8
        %v2045 = vpop.permute.xlu0 %2044
        %2046 = vrot.lane.b32.xlu0 %v1966, 8
        %v2047 = vpop.permute.xlu0 %2046
        %2048 = vrot.lane.b32.xlu0 %v1967, 8
        %v2049 = vpop.permute.xlu0 %2048
        %2066 = vrot.lane.b32.xlu0 %v1968, 16
        %v2067 = vpop.permute.xlu0 %2066
        %2068 = vrot.lane.b32.xlu0 %v1969, 16
        %v2069 = vpop.permute.xlu0 %2068
        %2070 = vrot.lane.b32.xlu0 %v1970, 16
        %v2071 = vpop.permute.xlu0 %2070
        %2072 = vrot.lane.b32.xlu0 %v1971, 16
        %v2073 = vpop.permute.xlu0 %2072
        %2074 = vrot.lane.b32.xlu0 %v1972, 16
        %v2075 = vpop.permute.xlu0 %2074
        %2076 = vrot.lane.b32.xlu0 %v1973, 16
        %v2077 = vpop.permute.xlu0 %2076
        %2078 = vrot.lane.b32.xlu0 %v1974, 16
        %v2079 = vpop.permute.xlu0 %2078
        %2080 = vrot.lane.b32.xlu0 %v1975, 16
        %v2081 = vpop.permute.xlu0 %2080
        %2098 = vrot.lane.b32.xlu0 %v1976, 24
        %v2099 = vpop.permute.xlu0 %2098
        %2100 = vrot.lane.b32.xlu0 %v1977, 24
        %v2101 = vpop.permute.xlu0 %2100
        %2102 = vrot.lane.b32.xlu0 %v1978, 24
        %v2103 = vpop.permute.xlu0 %2102
        %2104 = vrot.lane.b32.xlu0 %v1979, 24
        %v2105 = vpop.permute.xlu0 %2104
        %2106 = vrot.lane.b32.xlu0 %v1980, 24
        %v2107 = vpop.permute.xlu0 %2106
        %2108 = vrot.lane.b32.xlu0 %v1981, 24
        %v2109 = vpop.permute.xlu0 %2108
        %2110 = vrot.lane.b32.xlu0 %v1982, 24
        %v2111 = vpop.permute.xlu0 %2110
        %2112 = vrot.lane.b32.xlu0 %v1983, 24
        %v2113 = vpop.permute.xlu0 %2112
        %2130 = vrot.lane.b32.xlu0 %v1984, 32
        %v2131 = vpop.permute.xlu0 %2130
        %2132 = vrot.lane.b32.xlu0 %v1985, 32
        %v2133 = vpop.permute.xlu0 %2132
        %2134 = vrot.lane.b32.xlu0 %v1986, 32
        %v2135 = vpop.permute.xlu0 %2134
        %2136 = vrot.lane.b32.xlu0 %v1987, 32
        %v2137 = vpop.permute.xlu0 %2136
        %2138 = vrot.lane.b32.xlu0 %v1988, 32
        %v2139 = vpop.permute.xlu0 %2138
        %2140 = vrot.lane.b32.xlu0 %v1989, 32
        %v2141 = vpop.permute.xlu0 %2140
        %2142 = vrot.lane.b32.xlu0 %v1990, 32
        %v2143 = vpop.permute.xlu0 %2142
        %2144 = vrot.lane.b32.xlu0 %v1991, 32
        %v2145 = vpop.permute.xlu0 %2144
        %2162 = vrot.lane.b32.xlu0 %v1992, 40
        %v2163 = vpop.permute.xlu0 %2162
        %2164 = vrot.lane.b32.xlu0 %v1993, 40
        %v2165 = vpop.permute.xlu0 %2164
        %2166 = vrot.lane.b32.xlu0 %v1994, 40
        %v2167 = vpop.permute.xlu0 %2166
        %2168 = vrot.lane.b32.xlu0 %v1995, 40
        %v2169 = vpop.permute.xlu0 %2168
        %2170 = vrot.lane.b32.xlu0 %v1996, 40
        %v2171 = vpop.permute.xlu0 %2170
        %2172 = vrot.lane.b32.xlu0 %v1997, 40
        %v2173 = vpop.permute.xlu0 %2172
        %2174 = vrot.lane.b32.xlu0 %v1998, 40
        %v2175 = vpop.permute.xlu0 %2174
        %2176 = vrot.lane.b32.xlu0 %v1999, 40
        %v2177 = vpop.permute.xlu0 %2176
        %2194 = vrot.lane.b32.xlu0 %v2001, 48
        %v2195 = vpop.permute.xlu0 %2194
        %2196 = vrot.lane.b32.xlu0 %v2002, 48
        %v2197 = vpop.permute.xlu0 %2196
        %2198 = vrot.lane.b32.xlu0 %v2003, 48
        %v2199 = vpop.permute.xlu0 %2198
        %2200 = vrot.lane.b32.xlu0 %v2004, 48
        %v2201 = vpop.permute.xlu0 %2200
        %2202 = vrot.lane.b32.xlu0 %v2005, 48
        %v2203 = vpop.permute.xlu0 %2202
        %2204 = vrot.lane.b32.xlu0 %v2006, 48
        %v2205 = vpop.permute.xlu0 %2204
        %2206 = vrot.lane.b32.xlu0 %v2007, 48
        %v2207 = vpop.permute.xlu0 %2206
        %2208 = vrot.lane.b32.xlu0 %v2008, 48
        %v2209 = vpop.permute.xlu0 %2208
        %2226 = vrot.lane.b32.xlu0 %v2010, 56
        %v2227 = vpop.permute.xlu0 %2226
        %2228 = vrot.lane.b32.xlu0 %v2011, 56
        %v2229 = vpop.permute.xlu0 %2228
        %2230 = vrot.lane.b32.xlu0 %v2012, 56
        %v2231 = vpop.permute.xlu0 %2230
        %2232 = vrot.lane.b32.xlu0 %v2013, 56
        %v2233 = vpop.permute.xlu0 %2232
        %2234 = vrot.lane.b32.xlu0 %v2014, 56
        %v2235 = vpop.permute.xlu0 %2234
        %2236 = vrot.lane.b32.xlu0 %v2015, 56
        %v2237 = vpop.permute.xlu0 %2236
        %2238 = vrot.lane.b32.xlu0 %v2016, 56
        %v2239 = vpop.permute.xlu0 %2238
        %2240 = vrot.lane.b32.xlu0 %v2017, 56
        %v2241 = vpop.permute.xlu0 %2240
        %2258 = vrot.lane.b32.xlu0 %v2018, 64
        %v2259 = vpop.permute.xlu0 %2258
        %2260 = vrot.lane.b32.xlu0 %v2019, 64
        %v2261 = vpop.permute.xlu0 %2260
        %2262 = vrot.lane.b32.xlu0 %v2020, 64
        %v2263 = vpop.permute.xlu0 %2262
        %2264 = vrot.lane.b32.xlu0 %v2021, 64
        %v2265 = vpop.permute.xlu0 %2264
        %2266 = vrot.lane.b32.xlu0 %v2022, 64
        %v2267 = vpop.permute.xlu0 %2266
        %2268 = vrot.lane.b32.xlu0 %v2023, 64
        %v2269 = vpop.permute.xlu0 %2268
        %2270 = vrot.lane.b32.xlu0 %v2024, 64
        %v2271 = vpop.permute.xlu0 %2270
        %2272 = vrot.lane.b32.xlu0 %v2025, 64
        %v2273 = vpop.permute.xlu0 %2272
        %v2282 = vsel %vm1058, %v1952, %v2035
        %v2283 = vsel %vm1058, %v1953, %v2037
        %v2284 = vsel %vm1058, %v1954, %v2039
        %v2285 = vsel %vm1058, %v1955, %v2041
        %v2286 = vsel %vm1058, %v1956, %v2043
        %v2287 = vsel %vm1058, %v1957, %v2045
        %v2288 = vsel %vm1058, %v1958, %v2047
        %v2289 = vsel %vm1058, %v1959, %v2049
        %vm2290 = vcmask 130048
        %v2291 = vsel %vm2290, %v2282, %v2067
        %v2292 = vsel %vm2290, %v2283, %v2069
        %v2293 = vsel %vm2290, %v2284, %v2071
        %v2294 = vsel %vm2290, %v2285, %v2073
        %v2295 = vsel %vm2290, %v2286, %v2075
        %v2296 = vsel %vm2290, %v2287, %v2077
        %v2297 = vsel %vm2290, %v2288, %v2079
        %v2298 = vsel %vm2290, %v2289, %v2081
        %vm2299 = vcmask 195584
        %v2300 = vsel %vm2299, %v2291, %v2099
        %v2301 = vsel %vm2299, %v2292, %v2101
        %v2302 = vsel %vm2299, %v2293, %v2103
        %v2303 = vsel %vm2299, %v2294, %v2105
        %v2304 = vsel %vm2299, %v2295, %v2107
        %v2305 = vsel %vm2299, %v2296, %v2109
        %v2306 = vsel %vm2299, %v2297, %v2111
        %v2307 = vsel %vm2299, %v2298, %v2113
        %vm2308 = vcmask 261120
        %v2309 = vsel %vm2308, %v2300, %v2131
        %v2310 = vsel %vm2308, %v2301, %v2133
        %v2311 = vsel %vm2308, %v2302, %v2135
        %v2312 = vsel %vm2308, %v2303, %v2137
        %v2313 = vsel %vm2308, %v2304, %v2139
        %v2314 = vsel %vm2308, %v2305, %v2141
        %v2315 = vsel %vm2308, %v2306, %v2143
        %v2316 = vsel %vm2308, %v2307, %v2145
        %vm2317 = vcmask 326656
        %v2318 = vsel %vm2317, %v2309, %v2163
        %v2319 = vsel %vm2317, %v2310, %v2165
        %v2320 = vsel %vm2317, %v2311, %v2167
        %v2321 = vsel %vm2317, %v2312, %v2169
        %v2322 = vsel %vm2317, %v2313, %v2171
        %v2323 = vsel %vm2317, %v2314, %v2173
        %v2324 = vsel %vm2317, %v2315, %v2175
        %v2325 = vsel %vm2317, %v2316, %v2177
        %vm2326 = vcmask 392192
        %v2327 = vsel %vm2326, %v2318, %v2195
        %v2328 = vsel %vm2326, %v2319, %v2197
        %v2329 = vsel %vm2326, %v2320, %v2199
        %v2330 = vsel %vm2326, %v2321, %v2201
        %v2331 = vsel %vm2326, %v2322, %v2203
        %v2332 = vsel %vm2326, %v2323, %v2205
        %v2333 = vsel %vm2326, %v2324, %v2207
        %v2334 = vsel %vm2326, %v2325, %v2209
        %vm2335 = vcmask 457728
        %v2336 = vsel %vm2335, %v2327, %v2227
        %v2337 = vsel %vm2335, %v2328, %v2229
        %v2338 = vsel %vm2335, %v2329, %v2231
        %v2339 = vsel %vm2335, %v2330, %v2233
        %v2340 = vsel %vm2335, %v2331, %v2235
        %v2341 = vsel %vm2335, %v2332, %v2237
        %v2342 = vsel %vm2335, %v2333, %v2239
        %v2343 = vsel %vm2335, %v2334, %v2241
        %vm2344 = vcmask 523264
        %v2345 = vsel %vm2344, %v2336, %v2259
        %v2346 = vsel %vm2344, %v2337, %v2261
        %v2347 = vsel %vm2344, %v2338, %v2263
        %v2348 = vsel %vm2344, %v2339, %v2265
        %v2349 = vsel %vm2344, %v2340, %v2267
        %v2350 = vsel %vm2344, %v2341, %v2269
        %v2351 = vsel %vm2344, %v2342, %v2271
        %v2352 = vsel %vm2344, %v2343, %v2273
        %v2353 = vpack.c.bf16 %v2346, %v2345
        %v2354 = vpack.c.bf16 %v2348, %v2347
        %v2355 = vpack.c.bf16 %v2350, %v2349
        %v2356 = vpack.c.bf16 %v2352, %v2351
        %v2357 = vld [vmem:[#allocation11] sm:$0xf]
        %v2358 = vld [vmem:[#allocation11 + $0x4] sm:$0xf]
        %v2359 = vld [vmem:[#allocation11 + $0x8] sm:$0xf]
        %v2360 = vld [vmem:[#allocation11 + $0xc] sm:$0xf]
        %v2361 = vld [vmem:[#allocation11 + $0x10] sm:$0xf]
        %v2362 = vld [vmem:[#allocation11 + $0x14] sm:$0xf]
        %v2363 = vld [vmem:[#allocation11 + $0x18] sm:$0xf]
        %v2364 = vld [vmem:[#allocation11 + $0x1c] sm:$0xf]
        %v2365 = vld [vmem:[#allocation11 + $0x20] sm:$0xf]
        %v2375 = vunpack.c.l.b16 %v2357
        %v2376 = vunpack.c.l.b16 %v2358
        %v2377 = vunpack.c.l.b16 %v2359
        %v2378 = vunpack.c.l.b16 %v2360
        %v2379 = vunpack.c.l.b16 %v2361
        %v2380 = vunpack.c.l.b16 %v2362
        %v2381 = vunpack.c.l.b16 %v2363
        %v2382 = vunpack.c.l.b16 %v2364
        %v2383 = vunpack.c.l.b16 %v2365
        %v2384 = vpack.c.b16 %v2376, %v2375
        %v2385 = vpack.c.b16 %v2378, %v2377
        %v2386 = vpack.c.b16 %v2380, %v2379
        %v2387 = vpack.c.b16 %v2382, %v2381
        %v2388 = vpack.c.b16 %v2383, %v2383
        %vm2393 = vcmask 588800
        %v2395 = vsel %vm2393, %v2353, 0
        %v2398 = vsel %vm2393, %v2354, 0
        %v2401 = vsel %vm2393, %v2355, 0
        %v2404 = vsel %vm2393, %v2356, 0
        %vm2406 = vcmask 1043456
        %v2408 = vsel %vm2406, %v2388, 0
        %2410 = vmatprep.subr.bf16.mxu0 0
        %2411 = vmatpush1.bf16.msra.mxu0 %v2384
        %2412 = vmatprep.subr.bf16.mxu0 0
        %2413 = vmatpush1.bf16.msra.mxu0 %v2385
        %2414 = vmatprep.subr.bf16.mxu0 0
        %2415 = vmatpush1.bf16.msra.mxu0 %v2386
        %2416 = vmatprep.subr.bf16.mxu0 0
        %2417 = vmatpush1.bf16.msra.mxu0 %v2387
        %2418 = vmatprep.subr.bf16.mxu0 0
        %2419 = vmatpush1.bf16.msra.mxu0 %v2408
        %2420 = vmatprep.subr.bf16.mxu0 0
        %2421 = vmatpush1.bf16.msra.mxu0 0
        %2422 = vmatprep.subr.bf16.mxu0 0
        %2423 = vmatpush1.bf16.msra.mxu0 0
        %2424 = vmatprep.subr.bf16.mxu0 0
        %2425 = vmatpush1.bf16.msra.mxu0 0
        %2426 = vmatprep.subr.bf16.mxu0 0
        %2427 = vmatpush1.bf16.msra.mxu0 0
        %2428 = vmatprep.subr.bf16.mxu0 0
        %2429 = vmatpush1.bf16.msra.mxu0 0
        %2430 = vmatprep.subr.bf16.mxu0 0
        %2431 = vmatpush1.bf16.msra.mxu0 0
        %2432 = vmatprep.subr.bf16.mxu0 0
        %2433 = vmatpush1.bf16.msra.mxu0 0
        %2434 = vmatprep.subr.bf16.mxu0 0
        %2435 = vmatpush1.bf16.msra.mxu0 0
        %2436 = vmatprep.subr.bf16.mxu0 0
        %2437 = vmatpush1.bf16.msra.mxu0 0
        %2438 = vmatprep.subr.bf16.mxu0 0
        %2439 = vmatpush1.bf16.msra.mxu0 0
        %2440 = vmatprep.subr.bf16.mxu0 0
        %2441 = vmatpush1.bf16.msra.mxu0 0
        %2442 = vmatprep.mubr.bf16.mxu0 0
        %2443 = vmatmul.mubr.bf16.gmra.mrb[0].mxu0 %v2395
        %v2444 = vpop.f32.mrb[0].mxu0
        %v2445 = vadd.f32 0.0, %v2444
        %v2446 = vpop.f32.mrb[0].mxu0
        %v2447 = vpop.f32.mrb[0].mxu0
        %v2448 = vadd.f32 0.0, %v2447
        %v2449 = vpop.f32.mrb[0].mxu0
        %2450 = vmatprep.mubr.bf16.mxu0 0
        %2451 = vmatmul.mubr.bf16.gmra.mrb[0].mxu0 %v2398
        %v2452 = vpop.f32.mrb[0].mxu0
        %v2453 = vadd.f32 0.0, %v2452
        %v2454 = vpop.f32.mrb[0].mxu0
        %v2455 = vpop.f32.mrb[0].mxu0
        %v2456 = vadd.f32 0.0, %v2455
        %v2457 = vpop.f32.mrb[0].mxu0
        %2458 = vmatprep.mubr.bf16.mxu0 0
        %2459 = vmatmul.mubr.bf16.gmra.mrb[0].mxu0 %v2401
        %v2460 = vpop.f32.mrb[0].mxu0
        %v2461 = vadd.f32 0.0, %v2460
        %v2462 = vpop.f32.mrb[0].mxu0
        %v2463 = vpop.f32.mrb[0].mxu0
        %v2464 = vadd.f32 0.0, %v2463
        %v2465 = vpop.f32.mrb[0].mxu0
        %2466 = vmatprep.mubr.bf16.mxu0 0
        %2467 = vmatmul.mubr.bf16.gmra.mrb[0].mxu0 %v2404
        %v2468 = vpop.f32.mrb[0].mxu0
        %v2469 = vadd.f32 0.0, %v2468
        %v2470 = vpop.f32.mrb[0].mxu0
        %v2471 = vpop.f32.mrb[0].mxu0
        %v2472 = vadd.f32 0.0, %v2471
        %v2473 = vpop.f32.mrb[0].mxu0
        %2474 = vdwg.mxu0
        %v2475 = vld [vmem:[#allocation12] sm:$0x1]
        %v2477 = vlaneseq
        %v2478 = vshrl.u32 %v2477, 7
        %v2479 = vsub.s32 0, %v2478
        %v2480 = vrot.slane %v2475, %v2479
        %v2482 = vmul.f32 %v2445, %v2480
        %v2483 = vmul.f32 %v2448, %v2480
        %v2484 = vmul.f32 %v2453, %v2480
        %v2485 = vmul.f32 %v2456, %v2480
        %v2486 = vmul.f32 %v2461, %v2480
        %v2487 = vmul.f32 %v2464, %v2480
        %v2488 = vmul.f32 %v2469, %v2480
        %v2489 = vmul.f32 %v2472, %v2480
        %v2490 = vld [vmem:[#allocation14] sm:$0x1]
        %v2492 = vlaneseq
        %v2493 = vshrl.u32 %v2492, 7
        %v2494 = vsub.s32 0, %v2493
        %v2495 = vrot.slane %v2490, %v2494
        %v2497 = vadd.f32 %v2482, %v2495
        %v2498 = vadd.f32 %v2483, %v2495
        %v2499 = vadd.f32 %v2484, %v2495
        %v2500 = vadd.f32 %v2485, %v2495
        %v2501 = vadd.f32 %v2486, %v2495
        %v2502 = vadd.f32 %v2487, %v2495
        %v2503 = vadd.f32 %v2488, %v2495
        %v2504 = vadd.f32 %v2489, %v2495
        %v2505 = vmax.f32 %v2497, 0.0
        %v2506 = vmax.f32 %v2498, 0.0
        %v2507 = vmax.f32 %v2499, 0.0
        %v2508 = vmax.f32 %v2500, 0.0
        %v2509 = vmax.f32 %v2501, 0.0
        %v2510 = vmax.f32 %v2502, 0.0
        %v2511 = vmax.f32 %v2503, 0.0
        %v2512 = vmax.f32 %v2504, 0.0
        %v2513 = vpack.c.bf16 %v2506, %v2505
        %v2514 = vpack.c.bf16 %v2508, %v2507
        %v2515 = vpack.c.bf16 %v2510, %v2509
        %v2516 = vpack.c.bf16 %v2512, %v2511
        %v2517 = vld [vmem:[#allocation15] sm:$0xf]
        %v2519 = vsel %vm1058, %v2513, 0
        %v2522 = vsel %vm1058, %v2514, 0
        %v2525 = vsel %vm1058, %v2515, 0
        %v2528 = vsel %vm1058, %v2516, 0
        %v2531 = vsel %vm2406, %v2517, 0
        %2533 = vmatprep.subr.bf16.mxu0 0
        %2534 = vmatpush1.bf16.msra.mxu0 %v2531
        %2535 = vmatprep.subr.bf16.mxu0 0
        %2536 = vmatpush1.bf16.msra.mxu0 0
        %2537 = vmatprep.subr.bf16.mxu0 0
        %2538 = vmatpush1.bf16.msra.mxu0 0
        %2539 = vmatprep.subr.bf16.mxu0 0
        %2540 = vmatpush1.bf16.msra.mxu0 0
        %2541 = vmatprep.subr.bf16.mxu0 0
        %2542 = vmatpush1.bf16.msra.mxu0 0
        %2543 = vmatprep.subr.bf16.mxu0 0
        %2544 = vmatpush1.bf16.msra.mxu0 0
        %2545 = vmatprep.subr.bf16.mxu0 0
        %2546 = vmatpush1.bf16.msra.mxu0 0
        %2547 = vmatprep.subr.bf16.mxu0 0
        %2548 = vmatpush1.bf16.msra.mxu0 0
        %2549 = vmatprep.subr.bf16.mxu0 0
        %2550 = vmatpush1.bf16.msra.mxu0 0
        %2551 = vmatprep.subr.bf16.mxu0 0
        %2552 = vmatpush1.bf16.msra.mxu0 0
        %2553 = vmatprep.subr.bf16.mxu0 0
        %2554 = vmatpush1.bf16.msra.mxu0 0
        %2555 = vmatprep.subr.bf16.mxu0 0
        %2556 = vmatpush1.bf16.msra.mxu0 0
        %2557 = vmatprep.subr.bf16.mxu0 0
        %2558 = vmatpush1.bf16.msra.mxu0 0
        %2559 = vmatprep.subr.bf16.mxu0 0
        %2560 = vmatpush1.bf16.msra.mxu0 0
        %2561 = vmatprep.subr.bf16.mxu0 0
        %2562 = vmatpush1.bf16.msra.mxu0 0
        %2563 = vmatprep.subr.bf16.mxu0 0
        %2564 = vmatpush1.bf16.msra.mxu0 0
        %2565 = vmatprep.mubr.bf16.mxu0 0
        %2566 = vmatmul.mubr.bf16.gmra.mrb[0].mxu0 %v2519
        %v2567 = vpop.f32.mrb[0].mxu0
        %v2568 = vadd.f32 0.0, %v2567
        %v2569 = vpop.f32.mrb[0].mxu0
        %v2570 = vpop.f32.mrb[0].mxu0
        %v2571 = vadd.f32 0.0, %v2570
        %v2572 = vpop.f32.mrb[0].mxu0
        %2573 = vmatprep.mubr.bf16.mxu0 0
        %2574 = vmatmul.mubr.bf16.gmra.mrb[0].mxu0 %v2522
        %v2575 = vpop.f32.mrb[0].mxu0
        %v2576 = vadd.f32 0.0, %v2575
        %v2577 = vpop.f32.mrb[0].mxu0
        %v2578 = vpop.f32.mrb[0].mxu0
        %v2579 = vadd.f32 0.0, %v2578
        %v2580 = vpop.f32.mrb[0].mxu0
        %2581 = vmatprep.mubr.bf16.mxu0 0
        %2582 = vmatmul.mubr.bf16.gmra.mrb[0].mxu0 %v2525
        %v2583 = vpop.f32.mrb[0].mxu0
        %v2584 = vadd.f32 0.0, %v2583
        %v2585 = vpop.f32.mrb[0].mxu0
        %v2586 = vpop.f32.mrb[0].mxu0
        %v2587 = vadd.f32 0.0, %v2586
        %v2588 = vpop.f32.mrb[0].mxu0
        %2589 = vmatprep.mubr.bf16.mxu0 0
        %2590 = vmatmul.mubr.bf16.gmra.mrb[0].mxu0 %v2528
        %v2591 = vpop.f32.mrb[0].mxu0
        %v2592 = vadd.f32 0.0, %v2591
        %v2593 = vpop.f32.mrb[0].mxu0
        %v2594 = vpop.f32.mrb[0].mxu0
        %v2595 = vadd.f32 0.0, %v2594
        %v2596 = vpop.f32.mrb[0].mxu0
        %2597 = vdwg.mxu0
        %v2598 = vld [vmem:[#allocation17] sm:$0x1]
        %v2600 = vlaneseq
        %v2601 = vshrl.u32 %v2600, 7
        %v2602 = vsub.s32 0, %v2601
        %v2603 = vrot.slane %v2598, %v2602
        %v2605 = vmul.f32 %v2568, %v2603
        %v2606 = vmul.f32 %v2571, %v2603
        %v2607 = vmul.f32 %v2576, %v2603
        %v2608 = vmul.f32 %v2579, %v2603
        %v2609 = vmul.f32 %v2584, %v2603
        %v2610 = vmul.f32 %v2587, %v2603
        %v2611 = vmul.f32 %v2592, %v2603
        %v2612 = vmul.f32 %v2595, %v2603
        %v2613 = vld [vmem:[#allocation18] sm:$0x1]
        %v2615 = vlaneseq
        %v2616 = vshrl.u32 %v2615, 7
        %v2617 = vsub.s32 0, %v2616
        %v2618 = vrot.slane %v2613, %v2617
        %v2620 = vadd.f32 %v2605, %v2618
        %v2621 = vadd.f32 %v2606, %v2618
        %v2622 = vadd.f32 %v2607, %v2618
        %v2623 = vadd.f32 %v2608, %v2618
        %v2624 = vadd.f32 %v2609, %v2618
        %v2625 = vadd.f32 %v2610, %v2618
        %v2626 = vadd.f32 %v2611, %v2618
        %v2627 = vadd.f32 %v2612, %v2618
        %v2628 = vmax.f32 %v2620, 0.0
        %v2629 = vmax.f32 %v2621, 0.0
        %v2630 = vmax.f32 %v2622, 0.0
        %v2631 = vmax.f32 %v2623, 0.0
        %v2632 = vmax.f32 %v2624, 0.0
        %v2633 = vmax.f32 %v2625, 0.0
        %v2634 = vmax.f32 %v2626, 0.0
        %v2635 = vmax.f32 %v2627, 0.0
        %v2636 = vld [vmem:[%s1665] sm:$0xf]
        %v2637 = vld [vmem:[%s1665 + $0x8] sm:$0xf]
        %v2638 = vld [vmem:[%s1665 + $0x10] sm:$0xf]
        %v2639 = vld [vmem:[%s1665 + $0x18] sm:$0xf]
        %v2640 = vld [vmem:[%s1665 + $0x20] sm:$0xf]
        %v2641 = vld [vmem:[%s1665 + $0x28] sm:$0xf]
        %v2642 = vld [vmem:[%s1665 + $0x30] sm:$0xf]
        %v2643 = vld [vmem:[%s1665 + $0x38] sm:$0xf]
        %v2644 = vunpack.c.l.bf16 %v2636
        %v2645 = vunpack.c.l.bf16 %v2637
        %v2646 = vunpack.c.l.bf16 %v2638
        %v2647 = vunpack.c.l.bf16 %v2639
        %v2648 = vunpack.c.l.bf16 %v2640
        %v2649 = vunpack.c.l.bf16 %v2641
        %v2650 = vunpack.c.l.bf16 %v2642
        %v2651 = vunpack.c.l.bf16 %v2643
        %v2652 = vld [vmem:[#allocation20] sm:$0xf]
        %v2654 = vsel %vm818, %v2644, 0
        %v2657 = vsel %vm818, %v2645, 0
        %v2660 = vsel %vm818, %v2646, 0
        %v2663 = vsel %vm818, %v2647, 0
        %v2666 = vsel %vm818, %v2648, 0
        %v2669 = vsel %vm818, %v2649, 0
        %v2672 = vsel %vm818, %v2650, 0
        %v2675 = vsel %vm818, %v2651, 0
        %v2678 = vsel %vm2406, %v2652, 0
        %2680 = vmatprep.subr.mxu0 0.0
        %2681 = vmatpush1.msra.mxu0 %v2678
        %2682 = vmatprep.subr.mxu0 0.0
        %2683 = vmatpush1.msra.mxu0 0.0
        %2684 = vmatprep.subr.mxu0 0.0
        %2685 = vmatpush1.msra.mxu0 0.0
        %2686 = vmatprep.subr.mxu0 0.0
        %2687 = vmatpush1.msra.mxu0 0.0
        %2688 = vmatprep.subr.mxu0 0.0
        %2689 = vmatpush1.msra.mxu0 0.0
        %2690 = vmatprep.subr.mxu0 0.0
        %2691 = vmatpush1.msra.mxu0 0.0
        %2692 = vmatprep.subr.mxu0 0.0
        %2693 = vmatpush1.msra.mxu0 0.0
        %2694 = vmatprep.subr.mxu0 0.0
        %2695 = vmatpush1.msra.mxu0 0.0
        %2696 = vmatprep.subr.mxu0 0.0
        %2697 = vmatpush1.msra.mxu0 0.0
        %2698 = vmatprep.subr.mxu0 0.0
        %2699 = vmatpush1.msra.mxu0 0.0
        %2700 = vmatprep.subr.mxu0 0.0
        %2701 = vmatpush1.msra.mxu0 0.0
        %2702 = vmatprep.subr.mxu0 0.0
        %2703 = vmatpush1.msra.mxu0 0.0
        %2704 = vmatprep.subr.mxu0 0.0
        %2705 = vmatpush1.msra.mxu0 0.0
        %2706 = vmatprep.subr.mxu0 0.0
        %2707 = vmatpush1.msra.mxu0 0.0
        %2708 = vmatprep.subr.mxu0 0.0
        %2709 = vmatpush1.msra.mxu0 0.0
        %2710 = vmatprep.subr.mxu0 0.0
        %2711 = vmatpush1.msra.mxu0 0.0
        %2712 = vmatprep.subr.mxu0 0.0
        %2713 = vmatpush1.msra.mxu0 0.0
        %2714 = vmatprep.subr.mxu0 0.0
        %2715 = vmatpush1.msra.mxu0 0.0
        %2716 = vmatprep.subr.mxu0 0.0
        %2717 = vmatpush1.msra.mxu0 0.0
        %2718 = vmatprep.subr.mxu0 0.0
        %2719 = vmatpush1.msra.mxu0 0.0
        %2720 = vmatprep.subr.mxu0 0.0
        %2721 = vmatpush1.msra.mxu0 0.0
        %2722 = vmatprep.subr.mxu0 0.0
        %2723 = vmatpush1.msra.mxu0 0.0
        %2724 = vmatprep.subr.mxu0 0.0
        %2725 = vmatpush1.msra.mxu0 0.0
        %2726 = vmatprep.subr.mxu0 0.0
        %2727 = vmatpush1.msra.mxu0 0.0
        %2728 = vmatprep.subr.mxu0 0.0
        %2729 = vmatpush1.msra.mxu0 0.0
        %2730 = vmatprep.subr.mxu0 0.0
        %2731 = vmatpush1.msra.mxu0 0.0
        %2732 = vmatprep.subr.mxu0 0.0
        %2733 = vmatpush1.msra.mxu0 0.0
        %2734 = vmatprep.subr.mxu0 0.0
        %2735 = vmatpush1.msra.mxu0 0.0
        %2736 = vmatprep.subr.mxu0 0.0
        %2737 = vmatpush1.msra.mxu0 0.0
        %2738 = vmatprep.subr.mxu0 0.0
        %2739 = vmatpush1.msra.mxu0 0.0
        %2740 = vmatprep.subr.mxu0 0.0
        %2741 = vmatpush1.msra.mxu0 0.0
        %2742 = vmatprep.subr.mxu0 0.0
        %2743 = vmatpush1.msra.mxu0 0.0
        %2744 = vmatprep.mubr.f32.mxu0 0.0
        %2745 = vmatmul.mubr.f32.gmra.mrb[0].mxu0 %v2654
        %v2746 = vpop.f32.mrb[0].mxu0
        %v2747 = vadd.f32 0.0, %v2746
        %v2748 = vpop.f32.mrb[0].mxu0
        %2749 = vmatprep.mubr.f32.mxu0 0.0
        %2750 = vmatmul.mubr.f32.gmra.mrb[0].mxu0 %v2657
        %v2751 = vpop.f32.mrb[0].mxu0
        %v2752 = vadd.f32 0.0, %v2751
        %v2753 = vpop.f32.mrb[0].mxu0
        %2754 = vmatprep.mubr.f32.mxu0 0.0
        %2755 = vmatmul.mubr.f32.gmra.mrb[0].mxu0 %v2660
        %v2756 = vpop.f32.mrb[0].mxu0
        %v2757 = vadd.f32 0.0, %v2756
        %v2758 = vpop.f32.mrb[0].mxu0
        %2759 = vmatprep.mubr.f32.mxu0 0.0
        %2760 = vmatmul.mubr.f32.gmra.mrb[0].mxu0 %v2663
        %v2761 = vpop.f32.mrb[0].mxu0
        %v2762 = vadd.f32 0.0, %v2761
        %v2763 = vpop.f32.mrb[0].mxu0
        %2764 = vmatprep.mubr.f32.mxu0 0.0
        %2765 = vmatmul.mubr.f32.gmra.mrb[0].mxu0 %v2666
        %v2766 = vpop.f32.mrb[0].mxu0
        %v2767 = vadd.f32 0.0, %v2766
        %v2768 = vpop.f32.mrb[0].mxu0
        %2769 = vmatprep.mubr.f32.mxu0 0.0
        %2770 = vmatmul.mubr.f32.gmra.mrb[0].mxu0 %v2669
        %v2771 = vpop.f32.mrb[0].mxu0
        %v2772 = vadd.f32 0.0, %v2771
        %v2773 = vpop.f32.mrb[0].mxu0
        %2774 = vmatprep.mubr.f32.mxu0 0.0
        %2775 = vmatmul.mubr.f32.gmra.mrb[0].mxu0 %v2672
        %v2776 = vpop.f32.mrb[0].mxu0
        %v2777 = vadd.f32 0.0, %v2776
        %v2778 = vpop.f32.mrb[0].mxu0
        %2779 = vmatprep.mubr.f32.mxu0 0.0
        %2780 = vmatmul.mubr.f32.gmra.mrb[0].mxu0 %v2675
        %v2781 = vpop.f32.mrb[0].mxu0
        %v2782 = vadd.f32 0.0, %v2781
        %v2783 = vpop.f32.mrb[0].mxu0
        %2784 = vdwg.mxu0
        %v2785 = vld [vmem:[#allocation21] sm:$0x1]
        %v2787 = vlaneseq
        %v2788 = vshrl.u32 %v2787, 7
        %v2789 = vsub.s32 0, %v2788
        %v2790 = vrot.slane %v2785, %v2789
        %v2792 = vmul.f32 %v2747, %v2790
        %v2793 = vmul.f32 %v2752, %v2790
        %v2794 = vmul.f32 %v2757, %v2790
        %v2795 = vmul.f32 %v2762, %v2790
        %v2796 = vmul.f32 %v2767, %v2790
        %v2797 = vmul.f32 %v2772, %v2790
        %v2798 = vmul.f32 %v2777, %v2790
        %v2799 = vmul.f32 %v2782, %v2790
        %v2800 = vld [vmem:[#allocation23] sm:$0x1]
        %v2802 = vlaneseq
        %v2803 = vshrl.u32 %v2802, 7
        %v2804 = vsub.s32 0, %v2803
        %v2805 = vrot.slane %v2800, %v2804
        %v2807 = vadd.f32 %v2792, %v2805
        %v2808 = vadd.f32 %v2793, %v2805
        %v2809 = vadd.f32 %v2794, %v2805
        %v2810 = vadd.f32 %v2795, %v2805
        %v2811 = vadd.f32 %v2796, %v2805
        %v2812 = vadd.f32 %v2797, %v2805
        %v2813 = vadd.f32 %v2798, %v2805
        %v2814 = vadd.f32 %v2799, %v2805
        %v2815 = vsel %vm2308, %v2628, 0.0
        %v2816 = vsel %vm2308, %v2629, 0.0
        %v2817 = vadd.f32 %v2815, %v2816
        %v2818 = vsel %vm2308, %v2630, 0.0
        %v2819 = vadd.f32 %v2817, %v2818
        %v2820 = vsel %vm2308, %v2631, 0.0
        %v2821 = vadd.f32 %v2819, %v2820
        %v2822 = vsel %vm2308, %v2632, 0.0
        %v2823 = vadd.f32 %v2821, %v2822
        %v2824 = vsel %vm2308, %v2633, 0.0
        %v2825 = vadd.f32 %v2823, %v2824
        %v2826 = vsel %vm2308, %v2634, 0.0
        %v2827 = vadd.f32 %v2825, %v2826
        %v2828 = vsel %vm2308, %v2635, 0.0
        %v2829 = vadd.f32 %v2827, %v2828
        %v2830 = vrot.slane %v2829, 4
        %v2831 = vadd.f32 %v2829, %v2830
        %v2832 = vrot.slane %v2831, 2
        %v2833 = vadd.f32 %v2831, %v2832
        %v2834 = vrot.slane %v2833, 1
        %v2835 = vadd.f32 %v2833, %v2834
        %v2836 = vrcp.pop 64.0
        %v2837 = vmul.f32 %v2835, %v2836
        %v2838 = vld [vmem:[#allocation24] sm:$0xff]
        %v2839 = vld [vmem:[#allocation24 + $0x8] sm:$0xff]
        %v2840 = vld [vmem:[#allocation24 + $0x10] sm:$0xff]
        %v2841 = vld [vmem:[#allocation24 + $0x18] sm:$0xff]
        %v2842 = vld [vmem:[#allocation26] sm:$0x1]
        %v2844 = vsel %vm2308, %v2837, 0
        %2846 = vmatprep.subr.mxu0 0.0
        %2847 = vmatpush1.msra.mxu0 %v2838
        %2848 = vmatprep.subr.mxu0 0.0
        %2849 = vmatpush1.msra.mxu0 %v2839
        %2850 = vmatprep.subr.mxu0 0.0
        %2851 = vmatpush1.msra.mxu0 %v2840
        %2852 = vmatprep.subr.mxu0 0.0
        %2853 = vmatpush1.msra.mxu0 %v2841
        %2854 = vmatprep.subr.mxu0 0.0
        %2855 = vmatpush1.msra.mxu0 0.0
        %2856 = vmatprep.subr.mxu0 0.0
        %2857 = vmatpush1.msra.mxu0 0.0
        %2858 = vmatprep.subr.mxu0 0.0
        %2859 = vmatpush1.msra.mxu0 0.0
        %2860 = vmatprep.subr.mxu0 0.0
        %2861 = vmatpush1.msra.mxu0 0.0
        %2862 = vmatprep.subr.mxu0 0.0
        %2863 = vmatpush1.msra.mxu0 0.0
        %2864 = vmatprep.subr.mxu0 0.0
        %2865 = vmatpush1.msra.mxu0 0.0
        %2866 = vmatprep.subr.mxu0 0.0
        %2867 = vmatpush1.msra.mxu0 0.0
        %2868 = vmatprep.subr.mxu0 0.0
        %2869 = vmatpush1.msra.mxu0 0.0
        %2870 = vmatprep.subr.mxu0 0.0
        %2871 = vmatpush1.msra.mxu0 0.0
        %2872 = vmatprep.subr.mxu0 0.0
        %2873 = vmatpush1.msra.mxu0 0.0
        %2874 = vmatprep.subr.mxu0 0.0
        %2875 = vmatpush1.msra.mxu0 0.0
        %2876 = vmatprep.subr.mxu0 0.0
        %2877 = vmatpush1.msra.mxu0 0.0
        %2878 = vmatprep.subr.mxu0 0.0
        %2879 = vmatpush1.msra.mxu0 0.0
        %2880 = vmatprep.subr.mxu0 0.0
        %2881 = vmatpush1.msra.mxu0 0.0
        %2882 = vmatprep.subr.mxu0 0.0
        %2883 = vmatpush1.msra.mxu0 0.0
        %2884 = vmatprep.subr.mxu0 0.0
        %2885 = vmatpush1.msra.mxu0 0.0
        %2886 = vmatprep.subr.mxu0 0.0
        %2887 = vmatpush1.msra.mxu0 0.0
        %2888 = vmatprep.subr.mxu0 0.0
        %2889 = vmatpush1.msra.mxu0 0.0
        %2890 = vmatprep.subr.mxu0 0.0
        %2891 = vmatpush1.msra.mxu0 0.0
        %2892 = vmatprep.subr.mxu0 0.0
        %2893 = vmatpush1.msra.mxu0 0.0
        %2894 = vmatprep.subr.mxu0 0.0
        %2895 = vmatpush1.msra.mxu0 0.0
        %2896 = vmatprep.subr.mxu0 0.0
        %2897 = vmatpush1.msra.mxu0 0.0
        %2898 = vmatprep.subr.mxu0 0.0
        %2899 = vmatpush1.msra.mxu0 0.0
        %2900 = vmatprep.subr.mxu0 0.0
        %2901 = vmatpush1.msra.mxu0 0.0
        %2902 = vmatprep.subr.mxu0 0.0
        %2903 = vmatpush1.msra.mxu0 0.0
        %2904 = vmatprep.subr.mxu0 0.0
        %2905 = vmatpush1.msra.mxu0 0.0
        %2906 = vmatprep.subr.mxu0 0.0
        %2907 = vmatpush1.msra.mxu0 0.0
        %2908 = vmatprep.subr.mxu0 0.0
        %2909 = vmatpush1.msra.mxu0 0.0
        %2910 = vmatprep.mubr.f32.mxu0 0.0
        %2911 = vmatmul.mubr.f32.gmra.mrb[0].mxu0 %v2844
        %v2912 = vpop.f32.mrb[0].mxu0
        %v2913 = vadd.f32 %v2842, %v2912
        %v2914 = vpop.f32.mrb[0].mxu0
        %2915 = vdwg.mxu0
        %v2916 = vmax.f32 %v2913, 0.0
        %v2917 = vld [vmem:[#allocation27] sm:$0x3]
        %v2918 = vld [vmem:[#allocation29] sm:$0x1]
        %vm2919 = vcmask 15360
        %v2921 = vsel %vm2919, %v2916, 0
        %v2924 = vsel %vm846, %v2917, 0
        %2926 = vmatprep.subr.mxu0 0.0
        %2927 = vmatpush1.msra.mxu0 %v2924
        %2928 = vmatprep.subr.mxu0 0.0
        %2929 = vmatpush1.msra.mxu0 0.0
        %2930 = vmatprep.subr.mxu0 0.0
        %2931 = vmatpush1.msra.mxu0 0.0
        %2932 = vmatprep.subr.mxu0 0.0
        %2933 = vmatpush1.msra.mxu0 0.0
        %2934 = vmatprep.subr.mxu0 0.0
        %2935 = vmatpush1.msra.mxu0 0.0
        %2936 = vmatprep.subr.mxu0 0.0
        %2937 = vmatpush1.msra.mxu0 0.0
        %2938 = vmatprep.subr.mxu0 0.0
        %2939 = vmatpush1.msra.mxu0 0.0
        %2940 = vmatprep.subr.mxu0 0.0
        %2941 = vmatpush1.msra.mxu0 0.0
        %2942 = vmatprep.subr.mxu0 0.0
        %2943 = vmatpush1.msra.mxu0 0.0
        %2944 = vmatprep.subr.mxu0 0.0
        %2945 = vmatpush1.msra.mxu0 0.0
        %2946 = vmatprep.subr.mxu0 0.0
        %2947 = vmatpush1.msra.mxu0 0.0
        %2948 = vmatprep.subr.mxu0 0.0
        %2949 = vmatpush1.msra.mxu0 0.0
        %2950 = vmatprep.subr.mxu0 0.0
        %2951 = vmatpush1.msra.mxu0 0.0
        %2952 = vmatprep.subr.mxu0 0.0
        %2953 = vmatpush1.msra.mxu0 0.0
        %2954 = vmatprep.subr.mxu0 0.0
        %2955 = vmatpush1.msra.mxu0 0.0
        %2956 = vmatprep.subr.mxu0 0.0
        %2957 = vmatpush1.msra.mxu0 0.0
        %2958 = vmatprep.subr.mxu0 0.0
        %2959 = vmatpush1.msra.mxu0 0.0
        %2960 = vmatprep.subr.mxu0 0.0
        %2961 = vmatpush1.msra.mxu0 0.0
        %2962 = vmatprep.subr.mxu0 0.0
        %2963 = vmatpush1.msra.mxu0 0.0
        %2964 = vmatprep.subr.mxu0 0.0
        %2965 = vmatpush1.msra.mxu0 0.0
        %2966 = vmatprep.subr.mxu0 0.0
        %2967 = vmatpush1.msra.mxu0 0.0
        %2968 = vmatprep.subr.mxu0 0.0
        %2969 = vmatpush1.msra.mxu0 0.0
        %2970 = vmatprep.subr.mxu0 0.0
        %2971 = vmatpush1.msra.mxu0 0.0
        %2972 = vmatprep.subr.mxu0 0.0
        %2973 = vmatpush1.msra.mxu0 0.0
        %2974 = vmatprep.subr.mxu0 0.0
        %2975 = vmatpush1.msra.mxu0 0.0
        %2976 = vmatprep.subr.mxu0 0.0
        %2977 = vmatpush1.msra.mxu0 0.0
        %2978 = vmatprep.subr.mxu0 0.0
        %2979 = vmatpush1.msra.mxu0 0.0
        %2980 = vmatprep.subr.mxu0 0.0
        %2981 = vmatpush1.msra.mxu0 0.0
        %2982 = vmatprep.subr.mxu0 0.0
        %2983 = vmatpush1.msra.mxu0 0.0
        %2984 = vmatprep.subr.mxu0 0.0
        %2985 = vmatpush1.msra.mxu0 0.0
        %2986 = vmatprep.subr.mxu0 0.0
        %2987 = vmatpush1.msra.mxu0 0.0
        %2988 = vmatprep.subr.mxu0 0.0
        %2989 = vmatpush1.msra.mxu0 0.0
        %2990 = vmatprep.mubr.f32.mxu0 0.0
        %2991 = vmatmul.mubr.f32.gmra.mrb[0].mxu0 %v2921
        %v2992 = vpop.f32.mrb[0].mxu0
        %v2993 = vadd.f32 %v2918, %v2992
        %v2994 = vpop.f32.mrb[0].mxu0
        %2995 = vdwg.mxu0
        %v2996 = vxor.u32 %v2993, 2147483648
        %v2997 = vmul.f32 %v2996, 1.442695
        %v2998 = vpow.pop %v2997
        %v2999 = vadd.f32 %v2998, 1.0
        %v3000 = vrcp.pop %v2999
        %v3001 = vmul.f32 1.0, %v3000
        %v3002 = vlaneseq
        %v3003 = vshrl.u32 %v3002, 7
        %v3004 = vsub.s32 0, %v3003
        %v3005 = vrot.slane %v3001, %v3004
        %v3006 = vmul.f32 %v2628, %v3005
        %v3007 = vmul.f32 %v2629, %v3005
        %v3008 = vmul.f32 %v2630, %v3005
        %v3009 = vmul.f32 %v2631, %v3005
        %v3010 = vmul.f32 %v2632, %v3005
        %v3011 = vmul.f32 %v2633, %v3005
        %v3012 = vmul.f32 %v2634, %v3005
        %v3013 = vmul.f32 %v2635, %v3005
        %v3014 = vadd.f32 %v3006, %v2807
        %v3015 = vadd.f32 %v3007, %v2808
        %v3016 = vadd.f32 %v3008, %v2809
        %v3017 = vadd.f32 %v3009, %v2810
        %v3018 = vadd.f32 %v3010, %v2811
        %v3019 = vadd.f32 %v3011, %v2812
        %v3020 = vadd.f32 %v3012, %v2813
        %v3021 = vadd.f32 %v3013, %v2814
        %v3022 = vmax.f32 %v3014, 0.0
        %v3023 = vmax.f32 %v3015, 0.0
        %v3024 = vmax.f32 %v3016, 0.0
        %v3025 = vmax.f32 %v3017, 0.0
        %v3026 = vmax.f32 %v3018, 0.0
        %v3027 = vmax.f32 %v3019, 0.0
        %v3028 = vmax.f32 %v3020, 0.0
        %v3029 = vmax.f32 %v3021, 0.0
        %v3030 = vpack.c.bf16 %v3023, %v3022
        %v3031 = vpack.c.bf16 %v3025, %v3024
        %v3032 = vpack.c.bf16 %v3027, %v3026
        %v3033 = vpack.c.bf16 %v3029, %v3028
        %v3038 = vunpack.c.l.b16 %v3030
        %v3039 = vunpack.c.h.b16 %v3030
        %v3040 = vunpack.c.l.b16 %v3031
        %v3041 = vunpack.c.h.b16 %v3031
        %v3042 = vunpack.c.l.b16 %v3032
        %v3043 = vunpack.c.h.b16 %v3032
        %v3044 = vunpack.c.l.b16 %v3033
        %v3045 = vunpack.c.h.b16 %v3033
        %v3046 = vpack.c.b16 %v3038, %v3038
        %v3047 = vpack.c.b16 %v3039, %v3039
        %v3048 = vpack.c.b16 %v3040, %v3040
        %v3049 = vpack.c.b16 %v3041, %v3041
        %v3050 = vpack.c.b16 %v3042, %v3042
        %v3051 = vpack.c.b16 %v3043, %v3043
        %v3052 = vpack.c.b16 %v3044, %v3044
        %v3053 = vpack.c.b16 %v3045, %v3045
        %vm3062 = vcmask 257024
        %3063 = vst.msk [vmem:[%s770] sm:$0xf] %vm3062, %v3046
        %3064 = vst.msk [vmem:[%s770 + $0x4] sm:$0xf] %vm3062, %v3047
        %3065 = vst.msk [vmem:[%s770 + $0x8] sm:$0xf] %vm3062, %v3048
        %3066 = vst.msk [vmem:[%s770 + $0xc] sm:$0xf] %vm3062, %v3049
        %3067 = vst.msk [vmem:[%s770 + $0x10] sm:$0xf] %vm3062, %v3050
        %3068 = vst.msk [vmem:[%s770 + $0x14] sm:$0xf] %vm3062, %v3051
        %3069 = vst.msk [vmem:[%s770 + $0x18] sm:$0xf] %vm3062, %v3052
        %3070 = vst.msk [vmem:[%s770 + $0x1c] sm:$0xf] %vm3062, %v3053
        %s3071 = sand.u32 %s412, 1
        %s3072 = scalar_lea.sflag [#allocation5], %s3071
        %s3073 = sand.u32 %s412, 1
        %s3074 = smul.addr %s3073, 32
        %s3075 = scalar_lea.vmem [#allocation30], %s3074
        // Predicated region
        $region157: #{bottleneck_se_forward.1} parent=87 // pred_check
          %p3076 = pneg %p422
        $region158: #{bottleneck_se_forward.1} parent=87 // pred_check_branch
          %3078 = sbr.rel (%p3076) target = $region160
        $region159: #{bottleneck_se_forward.1} parent=87 // pred_region
          %s3080 = ssub.s32 512, 512
          %3081 = vsyncadd %s3072, %s3080
          %s3082 = smul.addr %s42, 8
          %s3083 = smul.addr %s3082, 64
          %s3084 = scalar_lea.hbm %s17, %s3083
          %s3085 = sshll.u32 %s3075, 4
          %s3086 = int_to_ptr.vmem [resolvable:$true] %s3085
          %3091 = dma.vmem_to_hbm [thread:$0]  %s3086, 512, %s3084, %s3072, 64, 64, 4
        $region160: #{bottleneck_se_forward.1} parent=87 // pred_fallthru
          _
      $region88: #{bottleneck_se_forward.1} parent=5 // pred_fallthru
        _
      %p3092 = scmp.le.s32.totalorder 2, %s37
      // Predicated region
      $region161: #{bottleneck_se_forward.1} parent=5 // pred_check
        %p3093 = pneg %p3092
      $region162: #{bottleneck_se_forward.1} parent=5 // pred_check_branch
        %3095 = sbr.rel (%p3093) target = $region164
      $region163: #{bottleneck_se_forward.1} parent=5 // pred_region
        %s3096 = ssub.s32 %s37, 2
        // Predicated region
        $region165: #{bottleneck_se_forward.1} parent=163 // pred_check
          %p3097 = pneg %p428
        $region166: #{bottleneck_se_forward.1} parent=163 // pred_check_branch
          %3099 = sbr.rel (%p3097) target = $region168
        $region167: #{bottleneck_se_forward.1} parent=163 // pred_region
          %s3100 = sand.u32 %s413, 1
          %s3101 = scalar_lea.sflag [#allocation5], %s3100
          %s3102 = sand.u32 %s413, 1
          %s3103 = smul.addr %s3102, 32
          %s3104 = scalar_lea.vmem [#allocation30], %s3103
          %3105 = dma.done %s3101, 512
        $region168: #{bottleneck_se_forward.1} parent=163 // pred_fallthru
          _
      $region164: #{bottleneck_se_forward.1} parent=5 // pred_fallthru
        _
    $region6: #{bottleneck_se_forward.1} parent=1 // loop_footer
      %s41 = sadd.s32 1, %s37
    $region7: #{bottleneck_se_forward.1} parent=1 // loop_footer_branch
      %36 = sbr.rel target = $region3
    $region8: #{bottleneck_se_forward.1} parent=1 // loop_exit
      _
    %3106 = vsyncpa [#allocation4], 1
    %s3107 = scalar_lea.sflag [#allocation4], 1
    %3108 = vsyncpa %s3107, 1
    %3109 = vsyncpa [#allocation7], 1
    %3110 = vsyncpa [#allocation10], 1
    %3111 = vsyncpa [#allocation13], 1
    %3112 = vsyncpa [#allocation16], 1
    %3113 = vsyncpa [#allocation19], 1
    %3114 = vsyncpa [#allocation22], 1
    %3115 = vsyncpa [#allocation25], 1
    %3116 = vsyncpa [#allocation28], 1
    %3117 = vsyncpa [#allocation5], 1
    %s3118 = scalar_lea.sflag [#allocation5], 1
    %3119 = vsyncpa %s3118, 1

</llo_original>
